<compile_context>
chip_gen: v7x
topology: tpu7x:2x2x1
jax: 0.10.0
libtpu: 0.0.40
codegen_flags: <defaults>
</compile_context>

<pallas_src>
import functools
import math

import jax
import jax.numpy as jnp
from jax.experimental import pallas as pl
from jax.experimental.pallas import tpu as pltpu


def _first_block_kernel(x_ref, w_ref, o_ref, *, bn, H, W, C_in, C_out, neg_slope):
    """One batch-block per grid step.

    x_ref: (bn, C_in, H, W)      unpadded NCHW input block (VMEM)
    w_ref: (C_out, 9*C_in)       conv weights, scale pre-folded (VMEM)
    o_ref: (bn, C_out, H*W)      lane-dense output block (VMEM)
    """
    w = w_ref[...]  # (C_out, 9*C_in)
    for b in range(bn):  # bn is small and static; unrolled at trace time
        xb = x_ref[b]  # (C_in, H, W)

        # ReflectionPad2d(1), built entirely in VMEM (reflection is separable):
        # padded row 0 = row 1, padded row H+1 = row H-2; same for columns.
        rows = jnp.concatenate(
            [xb[:, 1:2, :], xb, xb[:, H - 2:H - 1, :]], axis=1)          # (C_in, H+2, W)
        xp = jnp.concatenate(
            [rows[:, :, 1:2], rows, rows[:, :, W - 2:W - 1]], axis=2)    # (C_in, H+2, W+2)

        # im2col: contraction index ordered (ky, kx, ci) to match w_ref layout.
        patches = jnp.concatenate(
            [xp[:, ky:ky + H, kx:kx + W] for ky in range(3) for kx in range(3)],
            axis=0,
        ).reshape(9 * C_in, H * W)                                       # (9*C_in, H*W)

        # One MXU matmul with f32 accumulation: (C_out, 9*C_in) @ (9*C_in, H*W).
        y = jnp.dot(w, patches, preferred_element_type=jnp.float32)      # (C_out, H*W)

        # LeakyReLU(0.2).  (bn is Identity; `scale` already folded into weights.)
        y = jnp.where(y >= 0.0, y, neg_slope * y)
        o_ref[b] = y.astype(o_ref.dtype)


def first_block_forward(x_nchw, weight_oihw, *, use_wscale=False,
                        wscale_gain=math.sqrt(2.0), neg_slope=0.2,
                        max_block_n=8):
    """FirstBlock.forward. x_nchw: (N, C_in, H, W); weight_oihw: (C_out, C_in, 3, 3)."""
    N, C_in, H, W = x_nchw.shape
    C_out = weight_oihw.shape[0]
    scale = float(wscale_gain) / math.sqrt(C_in * 3 * 3) if use_wscale else 1.0

    # Weights: OIHW -> (C_out, ky, kx, ci) -> (C_out, 9*C_in); fold `scale` in.
    w_mat = jnp.transpose(weight_oihw, (0, 2, 3, 1)).reshape(C_out, 9 * C_in)
    if scale != 1.0:
        w_mat = w_mat * jnp.asarray(scale, w_mat.dtype)

    # Batch block: largest divisor of N that is <= max_block_n (whole batch at
    # small N -> grid=(1,)).  Spatial dims stay full-extent per block; for very
    # large H/W on v7x (32 MiB scoped VMEM) add H-tiling with a 1-row halo.
    block_n = 1
    for d in range(min(N, max_block_n), 0, -1):
        if N % d == 0:
            block_n = d
            break

    kernel = functools.partial(_first_block_kernel, bn=block_n, H=H, W=W,
                               C_in=C_in, C_out=C_out, neg_slope=neg_slope)

    out = pl.pallas_call(
        kernel,
        out_shape=jax.ShapeDtypeStruct((N, C_out, H * W), x_nchw.dtype),
        grid_spec=pltpu.PrefetchScalarGridSpec(
            num_scalar_prefetch=0,
            grid=(N // block_n,),
            in_specs=[
                pl.BlockSpec((block_n, C_in, H, W), lambda i: (i, 0, 0, 0)),
                pl.BlockSpec((C_out, 9 * C_in), lambda i: (0, 0)),
            ],
            out_specs=pl.BlockSpec((block_n, C_out, H * W), lambda i: (i, 0, 0)),
        ),
        compiler_params=pltpu.CompilerParams(
            dimension_semantics=("parallel",)),
    )(x_nchw, w_mat)

    # Free, contiguous reshape back to PyTorch NCHW convention.
    return out.reshape(N, C_out, H, W)


def _reference_forward(x_nchw, weight_oihw, *, scale=1.0, neg_slope=0.2):
    """Plain-JAX reference (same semantics as the PyTorch module)."""
    x_pad = jnp.pad(x_nchw, ((0, 0), (0, 0), (1, 1), (1, 1)), mode="reflect")
    y = jax.lax.conv_general_dilated(
        x_pad, weight_oihw, window_strides=(1, 1), padding="VALID",
        dimension_numbers=("NCHW", "OIHW", "NCHW"))
    y = y * scale
    return jnp.where(y >= 0.0, y, neg_slope * y)


if __name__ == "__main__":
    # Small shapes consistent with the module: N=2, C_in=4, H=W=16, C_out=8.
    N, C_in, H, W, C_out = 2, 4, 16, 16, 8

    key = jax.random.PRNGKey(0)
    kx, kw = jax.random.split(key)
    x = jax.random.normal(kx, (N, C_in, H, W), dtype=jnp.float32)
    # Deterministic synthetic conv weights (Conv2d(in=4, out=8, k=3, bias=False)).
    weight = 0.1 * jax.random.normal(kw, (C_out, C_in, 3, 3), dtype=jnp.float32)

    out = first_block_forward(x, weight)
    out = jax.block_until_ready(out)

    ref = _reference_forward(x, weight)
    assert out.shape == (N, C_out, H, W)
    assert jnp.allclose(out, ref, atol=1e-5, rtol=1e-5), "mismatch vs reference"

    print("KERNEL_OK")
</pallas_src>

<mosaic_0001>
module attributes {stable_mosaic.version = 11 : i64} {
  func.func @_first_block_kernel(%arg0: i32, %arg1: memref<2x4x16x16xf32, #tpu.memory_space<vmem>>, %arg2: memref<8x36xf32, #tpu.memory_space<vmem>>, %arg3: memref<2x8x256xf32, #tpu.memory_space<vmem>>) attributes {dimension_semantics = [#tpu.dimension_semantics<parallel>], iteration_bounds = array<i64: 1>, scalar_prefetch = 0 : i64, scratch_operands = 0 : i64, tpu.core_type = #tpu.core_type<tc>, window_params = [{transform_indices = @transform_0, window_bounds = array<i64: 2, 4, 16, 16>}, {pipeline_mode = #tpu.pipeline_mode<synchronous>, transform_indices = @transform_1, window_bounds = array<i64: 8, 36>}, {transform_indices = @transform_2, window_bounds = array<i64: 2, 8, 256>}]} {
    %c0 = arith.constant 0 : index
    %c0_0 = arith.constant 0 : index
    %0 = vector.load %arg2[%c0, %c0_0] : memref<8x36xf32, #tpu.memory_space<vmem>>, vector<8x36xf32>
    %c0_1 = arith.constant 0 : index
    %c0_2 = arith.constant 0 : index
    %c0_3 = arith.constant 0 : index
    %c0_4 = arith.constant 0 : index
    %1 = vector.load %arg1[%c0_1, %c0_2, %c0_3, %c0_4] : memref<2x4x16x16xf32, #tpu.memory_space<vmem>>, vector<1x4x16x16xf32>
    %2 = vector.shape_cast %1 : vector<1x4x16x16xf32> to vector<4x16x16xf32>
    %3 = vector.extract_strided_slice %2 {offsets = [0, 1, 0], sizes = [4, 1, 16], strides = [1, 1, 1]} : vector<4x16x16xf32> to vector<4x1x16xf32>
    %4 = vector.extract_strided_slice %2 {offsets = [0, 14, 0], sizes = [4, 1, 16], strides = [1, 1, 1]} : vector<4x16x16xf32> to vector<4x1x16xf32>
    %5 = tpu.concatenate %3, %2, %4 in 1 : vector<4x1x16xf32>, vector<4x16x16xf32>, vector<4x1x16xf32> -> vector<4x18x16xf32>
    %6 = vector.extract_strided_slice %5 {offsets = [0, 0, 1], sizes = [4, 18, 1], strides = [1, 1, 1]} : vector<4x18x16xf32> to vector<4x18x1xf32>
    %7 = vector.extract_strided_slice %5 {offsets = [0, 0, 14], sizes = [4, 18, 1], strides = [1, 1, 1]} : vector<4x18x16xf32> to vector<4x18x1xf32>
    %8 = tpu.concatenate %6, %5, %7 in 2 : vector<4x18x1xf32>, vector<4x18x16xf32>, vector<4x18x1xf32> -> vector<4x18x18xf32>
    %9 = vector.extract_strided_slice %8 {offsets = [0, 0, 0], sizes = [4, 16, 16], strides = [1, 1, 1]} : vector<4x18x18xf32> to vector<4x16x16xf32>
    %10 = vector.extract_strided_slice %8 {offsets = [0, 0, 1], sizes = [4, 16, 16], strides = [1, 1, 1]} : vector<4x18x18xf32> to vector<4x16x16xf32>
    %11 = vector.extract_strided_slice %8 {offsets = [0, 0, 2], sizes = [4, 16, 16], strides = [1, 1, 1]} : vector<4x18x18xf32> to vector<4x16x16xf32>
    %12 = vector.extract_strided_slice %8 {offsets = [0, 1, 0], sizes = [4, 16, 16], strides = [1, 1, 1]} : vector<4x18x18xf32> to vector<4x16x16xf32>
    %13 = vector.extract_strided_slice %8 {offsets = [0, 1, 1], sizes = [4, 16, 16], strides = [1, 1, 1]} : vector<4x18x18xf32> to vector<4x16x16xf32>
    %14 = vector.extract_strided_slice %8 {offsets = [0, 1, 2], sizes = [4, 16, 16], strides = [1, 1, 1]} : vector<4x18x18xf32> to vector<4x16x16xf32>
    %15 = vector.extract_strided_slice %8 {offsets = [0, 2, 0], sizes = [4, 16, 16], strides = [1, 1, 1]} : vector<4x18x18xf32> to vector<4x16x16xf32>
    %16 = vector.extract_strided_slice %8 {offsets = [0, 2, 1], sizes = [4, 16, 16], strides = [1, 1, 1]} : vector<4x18x18xf32> to vector<4x16x16xf32>
    %17 = vector.extract_strided_slice %8 {offsets = [0, 2, 2], sizes = [4, 16, 16], strides = [1, 1, 1]} : vector<4x18x18xf32> to vector<4x16x16xf32>
    %18 = tpu.concatenate %9, %10, %11, %12, %13, %14, %15, %16, %17 in 0 : vector<4x16x16xf32>, vector<4x16x16xf32>, vector<4x16x16xf32>, vector<4x16x16xf32>, vector<4x16x16xf32>, vector<4x16x16xf32>, vector<4x16x16xf32>, vector<4x16x16xf32>, vector<4x16x16xf32> -> vector<36x16x16xf32>
    %19 = vector.shape_cast %18 : vector<36x16x16xf32> to vector<36x256xf32>
    %cst = arith.constant dense<0.000000e+00> : vector<8x256xf32>
    %20 = tpu.matmul %0, %19, %cst {dimension_numbers = #tpu.dot_dimension_numbers<[1], [0], [0], [1], [0, 0, 1, 1], [], []>} : vector<8x36xf32>, vector<36x256xf32>, vector<8x256xf32> -> vector<8x256xf32>
    %cst_5 = arith.constant 0.000000e+00 : f32
    %21 = vector.broadcast %cst_5 : f32 to vector<8x256xf32>
    %22 = arith.cmpf oge, %20, %21 : vector<8x256xf32>
    %cst_6 = arith.constant 2.000000e-01 : f32
    %23 = vector.broadcast %cst_6 : f32 to vector<8x256xf32>
    %24 = arith.mulf %23, %20 : vector<8x256xf32>
    %25 = arith.select %22, %20, %24 : vector<8x256xi1>, vector<8x256xf32>
    %c0_7 = arith.constant 0 : index
    %c0_8 = arith.constant 0 : index
    %c0_9 = arith.constant 0 : index
    %26 = vector.load %arg3[%c0_7, %c0_8, %c0_9] : memref<2x8x256xf32, #tpu.memory_space<vmem>>, vector<1x8x256xf32>
    %27 = vector.shape_cast %26 : vector<1x8x256xf32> to vector<8x256xf32>
    %28 = vector.shape_cast %25 : vector<8x256xf32> to vector<1x8x256xf32>
    tpu.vector_store %arg3[%c0_7, %c0_8, %c0_9], %28 {strides = array<i32>} : memref<2x8x256xf32, #tpu.memory_space<vmem>>, vector<1x8x256xf32>,
    %c1 = arith.constant 1 : index
    %c0_10 = arith.constant 0 : index
    %c0_11 = arith.constant 0 : index
    %c0_12 = arith.constant 0 : index
    %29 = vector.load %arg1[%c1, %c0_10, %c0_11, %c0_12] : memref<2x4x16x16xf32, #tpu.memory_space<vmem>>, vector<1x4x16x16xf32>
    %30 = vector.shape_cast %29 : vector<1x4x16x16xf32> to vector<4x16x16xf32>
    %31 = vector.extract_strided_slice %30 {offsets = [0, 1, 0], sizes = [4, 1, 16], strides = [1, 1, 1]} : vector<4x16x16xf32> to vector<4x1x16xf32>
    %32 = vector.extract_strided_slice %30 {offsets = [0, 14, 0], sizes = [4, 1, 16], strides = [1, 1, 1]} : vector<4x16x16xf32> to vector<4x1x16xf32>
    %33 = tpu.concatenate %31, %30, %32 in 1 : vector<4x1x16xf32>, vector<4x16x16xf32>, vector<4x1x16xf32> -> vector<4x18x16xf32>
    %34 = vector.extract_strided_slice %33 {offsets = [0, 0, 1], sizes = [4, 18, 1], strides = [1, 1, 1]} : vector<4x18x16xf32> to vector<4x18x1xf32>
    %35 = vector.extract_strided_slice %33 {offsets = [0, 0, 14], sizes = [4, 18, 1], strides = [1, 1, 1]} : vector<4x18x16xf32> to vector<4x18x1xf32>
    %36 = tpu.concatenate %34, %33, %35 in 2 : vector<4x18x1xf32>, vector<4x18x16xf32>, vector<4x18x1xf32> -> vector<4x18x18xf32>
    %37 = vector.extract_strided_slice %36 {offsets = [0, 0, 0], sizes = [4, 16, 16], strides = [1, 1, 1]} : vector<4x18x18xf32> to vector<4x16x16xf32>
    %38 = vector.extract_strided_slice %36 {offsets = [0, 0, 1], sizes = [4, 16, 16], strides = [1, 1, 1]} : vector<4x18x18xf32> to vector<4x16x16xf32>
    %39 = vector.extract_strided_slice %36 {offsets = [0, 0, 2], sizes = [4, 16, 16], strides = [1, 1, 1]} : vector<4x18x18xf32> to vector<4x16x16xf32>
    %40 = vector.extract_strided_slice %36 {offsets = [0, 1, 0], sizes = [4, 16, 16], strides = [1, 1, 1]} : vector<4x18x18xf32> to vector<4x16x16xf32>
    %41 = vector.extract_strided_slice %36 {offsets = [0, 1, 1], sizes = [4, 16, 16], strides = [1, 1, 1]} : vector<4x18x18xf32> to vector<4x16x16xf32>
    %42 = vector.extract_strided_slice %36 {offsets = [0, 1, 2], sizes = [4, 16, 16], strides = [1, 1, 1]} : vector<4x18x18xf32> to vector<4x16x16xf32>
    %43 = vector.extract_strided_slice %36 {offsets = [0, 2, 0], sizes = [4, 16, 16], strides = [1, 1, 1]} : vector<4x18x18xf32> to vector<4x16x16xf32>
    %44 = vector.extract_strided_slice %36 {offsets = [0, 2, 1], sizes = [4, 16, 16], strides = [1, 1, 1]} : vector<4x18x18xf32> to vector<4x16x16xf32>
    %45 = vector.extract_strided_slice %36 {offsets = [0, 2, 2], sizes = [4, 16, 16], strides = [1, 1, 1]} : vector<4x18x18xf32> to vector<4x16x16xf32>
    %46 = tpu.concatenate %37, %38, %39, %40, %41, %42, %43, %44, %45 in 0 : vector<4x16x16xf32>, vector<4x16x16xf32>, vector<4x16x16xf32>, vector<4x16x16xf32>, vector<4x16x16xf32>, vector<4x16x16xf32>, vector<4x16x16xf32>, vector<4x16x16xf32>, vector<4x16x16xf32> -> vector<36x16x16xf32>
    %47 = vector.shape_cast %46 : vector<36x16x16xf32> to vector<36x256xf32>
    %cst_13 = arith.constant dense<0.000000e+00> : vector<8x256xf32>
    %48 = tpu.matmul %0, %47, %cst_13 {dimension_numbers = #tpu.dot_dimension_numbers<[1], [0], [0], [1], [0, 0, 1, 1], [], []>} : vector<8x36xf32>, vector<36x256xf32>, vector<8x256xf32> -> vector<8x256xf32>
    %cst_14 = arith.constant 0.000000e+00 : f32
    %49 = vector.broadcast %cst_14 : f32 to vector<8x256xf32>
    %50 = arith.cmpf oge, %48, %49 : vector<8x256xf32>
    %cst_15 = arith.constant 2.000000e-01 : f32
    %51 = vector.broadcast %cst_15 : f32 to vector<8x256xf32>
    %52 = arith.mulf %51, %48 : vector<8x256xf32>
    %53 = arith.select %50, %48, %52 : vector<8x256xi1>, vector<8x256xf32>
    %c1_16 = arith.constant 1 : index
    %c0_17 = arith.constant 0 : index
    %c0_18 = arith.constant 0 : index
    %54 = vector.load %arg3[%c1_16, %c0_17, %c0_18] : memref<2x8x256xf32, #tpu.memory_space<vmem>>, vector<1x8x256xf32>
    %55 = vector.shape_cast %54 : vector<1x8x256xf32> to vector<8x256xf32>
    %56 = vector.shape_cast %53 : vector<8x256xf32> to vector<1x8x256xf32>
    tpu.vector_store %arg3[%c1_16, %c0_17, %c0_18], %56 {strides = array<i32>} : memref<2x8x256xf32, #tpu.memory_space<vmem>>, vector<1x8x256xf32>,
    return
  }
  func.func @transform_0(%arg0: i32) -> (i32, i32, i32, i32) {
    %c0_i32 = arith.constant 0 : i32
    %c0_i32_0 = arith.constant 0 : i32
    %c0_i32_1 = arith.constant 0 : i32
    %c0_i32_2 = arith.constant 0 : i32
    return %arg0, %c0_i32, %c0_i32_0, %c0_i32_1 : i32, i32, i32, i32
  }
  func.func @transform_1(%arg0: i32) -> (i32, i32) {
    %c0_i32 = arith.constant 0 : i32
    %c0_i32_0 = arith.constant 0 : i32
    %c0_i32_1 = arith.constant 0 : i32
    return %c0_i32, %c0_i32_0 : i32, i32
  }
  func.func @transform_2(%arg0: i32) -> (i32, i32, i32) {
    %c0_i32 = arith.constant 0 : i32
    %c0_i32_0 = arith.constant 0 : i32
    %c0_i32_1 = arith.constant 0 : i32
    return %arg0, %c0_i32, %c0_i32_0 : i32, i32, i32
  }
}

</mosaic_0001>

<llo_original>
// kernel: tpu_custom_call.1
$region0: #{tpu_custom_call.1}
  #allocation0 [shape = 'u32[]', space=smem, size = 0x4, offset = 0x4, fixed_abs, tag = 'smem constant byte address 0x4 - core index']
  #allocation1 [shape = 'u32[144,128]{1,0:T(1,128)}', space=vmem, size = 0x12000, scoped, tag = 'internal scratch']
  %s0 = inlined_call_operand.hbm [shape: f32[2,4,16,16], index: 0, kind: input, shape index: {}]
  %s1 = inlined_call_operand.hbm [shape: f32[8,36], index: 1, kind: input, shape index: {}]
  %s2 = inlined_call_operand.hbm [shape: f32[2,8,256], index: 2, kind: output, shape index: {}]
  %s3 = sld [smem:[#allocation0]]
  $region26: #{tpu_custom_call.1} parent=0
    _
  %s5 = ssub.s32 1, %s3
  %s6 = scalar_select 0, %s5, %s3
  $region1: #{tpu_custom_call.1} parent=0
    #allocation2 [shape = 'u8[65536]{0}', space=vmem, size = 0x10000, scoped, tag = 'input window, operand 0, single buffered']
    #allocation3 [shape = 's32[1]{0}', space=sflag, size = 0x4, scoped, tag = 'scoped memory for tpu_custom_call.1']
    #allocation4 [shape = 's32[1]{0}', space=sflag, size = 0x4, scoped, tag = 'scoped memory for tpu_custom_call.1']
    #allocation5 [shape = 'u8[4096]{0}', space=vmem, size = 0x1000, scoped, tag = 'input window, operand 1, single buffered']
    #allocation6 [shape = 's32[1]{0}', space=sflag, size = 0x4, scoped, tag = 'scoped memory for tpu_custom_call.1']
    #allocation7 [shape = 'u8[16384]{0}', space=vmem, size = 0x4000, scoped, tag = 'output window, operand 0, single buffered']
    %7 = vsyncpa [#allocation3], 0
    %8 = vsyncpa [#allocation6], 0
    %9 = vsyncpa [#allocation4], 0
    // Predicated region
    $region2: #{tpu_custom_call.1} parent=1 // pred_check
      _
    $region3: #{tpu_custom_call.1} parent=1 // pred_check_branch
      %11 = sbr.rel (0) target = $region5
    $region4: #{tpu_custom_call.1} parent=1 // pred_region
      %s13 = ssub.s32 2048, 2048
      %14 = vsyncadd [#allocation3], %s13
      %s15 = sshll.u32 [#allocation2], 4
      %s16 = int_to_ptr.vmem [resolvable:$true] %s15
      %21 = dma.hbm_to_vmem [thread:$0]  %s0, 2048, %s16, [#allocation3], 128, 128, 8
    $region5: #{tpu_custom_call.1} parent=1 // pred_fallthru
      _
    // Predicated region
    $region6: #{tpu_custom_call.1} parent=1 // pred_check
      _
    $region7: #{tpu_custom_call.1} parent=1 // pred_check_branch
      %23 = sbr.rel (0) target = $region9
    $region8: #{tpu_custom_call.1} parent=1 // pred_region
      %s25 = ssub.s32 128, 128
      %26 = vsyncadd [#allocation6], %s25
      %s28 = sshll.u32 [#allocation5], 4
      %s29 = int_to_ptr.vmem [resolvable:$true] %s28
      %31 = dma.hbm_to_vmem [thread:$0]  %s1, 128, %s29, [#allocation6]
    $region9: #{tpu_custom_call.1} parent=1 // pred_fallthru
      _
    // Predicated region
    $region10: #{tpu_custom_call.1} parent=1 // pred_check
      _
    $region11: #{tpu_custom_call.1} parent=1 // pred_check_branch
      %33 = sbr.rel (0) target = $region13
    $region12: #{tpu_custom_call.1} parent=1 // pred_region
      %34 = dma.done [#allocation3], 2048
    $region13: #{tpu_custom_call.1} parent=1 // pred_fallthru
      _
    // Predicated region
    $region14: #{tpu_custom_call.1} parent=1 // pred_check
      _
    $region15: #{tpu_custom_call.1} parent=1 // pred_check_branch
      %36 = sbr.rel (0) target = $region17
    $region16: #{tpu_custom_call.1} parent=1 // pred_region
      %37 = dma.done [#allocation6], 128
    $region17: #{tpu_custom_call.1} parent=1 // pred_fallthru
      _
    %v38 = vld [vmem:[#allocation5] sm:$0xff]
    %v39 = vld [vmem:[#allocation2] sm:$0xff]
    %v40 = vld [vmem:[#allocation2 + $0x8] sm:$0xff]
    %v41 = vld [vmem:[#allocation2 + $0x10] sm:$0xff]
    %v42 = vld [vmem:[#allocation2 + $0x18] sm:$0xff]
    %v43 = vld [vmem:[#allocation2 + $0x20] sm:$0xff]
    %v44 = vld [vmem:[#allocation2 + $0x28] sm:$0xff]
    %v45 = vld [vmem:[#allocation2 + $0x30] sm:$0xff]
    %v46 = vld [vmem:[#allocation2 + $0x38] sm:$0xff]
    %v51 = vrot.slane %v39, 1
    %v52 = vrot.slane %v41, 1
    %v53 = vrot.slane %v43, 1
    %v54 = vrot.slane %v45, 1
    %vm63 = vcmask 1040384
    %v64 = vrot.slane %v39, 7
    %v65 = vrot.slane %v40, 7
    %v66 = vsel %vm63, %v64, %v65
    %v67 = vrot.slane %v41, 7
    %v68 = vrot.slane %v42, 7
    %v69 = vsel %vm63, %v67, %v68
    %v70 = vrot.slane %v43, 7
    %v71 = vrot.slane %v44, 7
    %v72 = vsel %vm63, %v70, %v71
    %v73 = vrot.slane %v45, 7
    %v74 = vrot.slane %v46, 7
    %v75 = vsel %vm63, %v73, %v74
    %v84 = vrot.slane %v40, 5
    %v85 = vrot.slane %v42, 5
    %v86 = vrot.slane %v44, 5
    %v87 = vrot.slane %v46, 5
    %v92 = vsel %vm63, %v51, %v64
    %v93 = vsel %vm63, %v52, %v67
    %v94 = vsel %vm63, %v53, %v70
    %v95 = vsel %vm63, %v54, %v73
    %v96 = vsel %vm63, %v65, %v84
    %v97 = vsel %vm63, %v68, %v85
    %v98 = vsel %vm63, %v71, %v86
    %v99 = vsel %vm63, %v74, %v87
    %108 = vrot.lane.b32.xlu0 %v92, 127
    %v109 = vpop.permute.xlu0 %108
    %110 = vrot.lane.b32.xlu0 %v66, 127
    %v111 = vpop.permute.xlu0 %110
    %112 = vrot.lane.b32.xlu0 %v96, 127
    %v113 = vpop.permute.xlu0 %112
    %114 = vrot.lane.b32.xlu0 %v93, 127
    %v115 = vpop.permute.xlu0 %114
    %116 = vrot.lane.b32.xlu0 %v69, 127
    %v117 = vpop.permute.xlu0 %116
    %118 = vrot.lane.b32.xlu0 %v97, 127
    %v119 = vpop.permute.xlu0 %118
    %120 = vrot.lane.b32.xlu0 %v94, 127
    %v121 = vpop.permute.xlu0 %120
    %122 = vrot.lane.b32.xlu0 %v72, 127
    %v123 = vpop.permute.xlu0 %122
    %124 = vrot.lane.b32.xlu0 %v98, 127
    %v125 = vpop.permute.xlu0 %124
    %126 = vrot.lane.b32.xlu0 %v95, 127
    %v127 = vpop.permute.xlu0 %126
    %128 = vrot.lane.b32.xlu0 %v75, 127
    %v129 = vpop.permute.xlu0 %128
    %130 = vrot.lane.b32.xlu0 %v99, 127
    %v131 = vpop.permute.xlu0 %130
    %144 = vrot.lane.b32.xlu0 %v92, 1
    %v145 = vpop.permute.xlu0 %144
    %146 = vrot.lane.b32.xlu0 %v66, 1
    %v147 = vpop.permute.xlu0 %146
    %148 = vrot.lane.b32.xlu0 %v96, 1
    %v149 = vpop.permute.xlu0 %148
    %150 = vrot.lane.b32.xlu0 %v93, 1
    %v151 = vpop.permute.xlu0 %150
    %152 = vrot.lane.b32.xlu0 %v69, 1
    %v153 = vpop.permute.xlu0 %152
    %154 = vrot.lane.b32.xlu0 %v97, 1
    %v155 = vpop.permute.xlu0 %154
    %156 = vrot.lane.b32.xlu0 %v94, 1
    %v157 = vpop.permute.xlu0 %156
    %158 = vrot.lane.b32.xlu0 %v72, 1
    %v159 = vpop.permute.xlu0 %158
    %160 = vrot.lane.b32.xlu0 %v98, 1
    %v161 = vpop.permute.xlu0 %160
    %162 = vrot.lane.b32.xlu0 %v95, 1
    %v163 = vpop.permute.xlu0 %162
    %164 = vrot.lane.b32.xlu0 %v75, 1
    %v165 = vpop.permute.xlu0 %164
    %166 = vrot.lane.b32.xlu0 %v99, 1
    %v167 = vpop.permute.xlu0 %166
    %180 = vrot.lane.b32.xlu0 %v92, 3
    %v181 = vpop.permute.xlu0 %180
    %182 = vrot.lane.b32.xlu0 %v66, 3
    %v183 = vpop.permute.xlu0 %182
    %184 = vrot.lane.b32.xlu0 %v96, 3
    %v185 = vpop.permute.xlu0 %184
    %186 = vrot.lane.b32.xlu0 %v93, 3
    %v187 = vpop.permute.xlu0 %186
    %188 = vrot.lane.b32.xlu0 %v69, 3
    %v189 = vpop.permute.xlu0 %188
    %190 = vrot.lane.b32.xlu0 %v97, 3
    %v191 = vpop.permute.xlu0 %190
    %192 = vrot.lane.b32.xlu0 %v94, 3
    %v193 = vpop.permute.xlu0 %192
    %194 = vrot.lane.b32.xlu0 %v72, 3
    %v195 = vpop.permute.xlu0 %194
    %196 = vrot.lane.b32.xlu0 %v98, 3
    %v197 = vpop.permute.xlu0 %196
    %198 = vrot.lane.b32.xlu0 %v95, 3
    %v199 = vpop.permute.xlu0 %198
    %200 = vrot.lane.b32.xlu0 %v75, 3
    %v201 = vpop.permute.xlu0 %200
    %202 = vrot.lane.b32.xlu0 %v99, 3
    %v203 = vpop.permute.xlu0 %202
    %vm216 = vcmask 7168
    %v217 = vsel %vm216, %v109, %v145
    %v218 = vsel %vm216, %v111, %v147
    %v219 = vsel %vm216, %v113, %v149
    %v220 = vsel %vm216, %v115, %v151
    %v221 = vsel %vm216, %v117, %v153
    %v222 = vsel %vm216, %v119, %v155
    %v223 = vsel %vm216, %v121, %v157
    %v224 = vsel %vm216, %v123, %v159
    %v225 = vsel %vm216, %v125, %v161
    %v226 = vsel %vm216, %v127, %v163
    %v227 = vsel %vm216, %v129, %v165
    %v228 = vsel %vm216, %v131, %v167
    %vm229 = vcmask 138240
    %v230 = vsel %vm229, %v217, %v181
    %v231 = vsel %vm229, %v218, %v183
    %v232 = vsel %vm229, %v219, %v185
    %v233 = vsel %vm229, %v220, %v187
    %v234 = vsel %vm229, %v221, %v189
    %v235 = vsel %vm229, %v222, %v191
    %v236 = vsel %vm229, %v223, %v193
    %v237 = vsel %vm229, %v224, %v195
    %v238 = vsel %vm229, %v225, %v197
    %v239 = vsel %vm229, %v226, %v199
    %v240 = vsel %vm229, %v227, %v201
    %v241 = vsel %vm229, %v228, %v203
    %250 = vrot.lane.b32.xlu0 %v230, 127
    %v251 = vpop.permute.xlu0 %250
    %252 = vrot.lane.b32.xlu0 %v231, 127
    %v253 = vpop.permute.xlu0 %252
    %254 = vrot.lane.b32.xlu0 %v233, 127
    %v255 = vpop.permute.xlu0 %254
    %256 = vrot.lane.b32.xlu0 %v234, 127
    %v257 = vpop.permute.xlu0 %256
    %258 = vrot.lane.b32.xlu0 %v236, 127
    %v259 = vpop.permute.xlu0 %258
    %260 = vrot.lane.b32.xlu0 %v237, 127
    %v261 = vpop.permute.xlu0 %260
    %262 = vrot.lane.b32.xlu0 %v239, 127
    %v263 = vpop.permute.xlu0 %262
    %264 = vrot.lane.b32.xlu0 %v240, 127
    %v265 = vpop.permute.xlu0 %264
    %274 = vrot.lane.b32.xlu0 %v230, 126
    %v275 = vpop.permute.xlu0 %274
    %276 = vrot.lane.b32.xlu0 %v231, 126
    %v277 = vpop.permute.xlu0 %276
    %278 = vrot.lane.b32.xlu0 %v233, 126
    %v279 = vpop.permute.xlu0 %278
    %280 = vrot.lane.b32.xlu0 %v234, 126
    %v281 = vpop.permute.xlu0 %280
    %282 = vrot.lane.b32.xlu0 %v236, 126
    %v283 = vpop.permute.xlu0 %282
    %284 = vrot.lane.b32.xlu0 %v237, 126
    %v285 = vpop.permute.xlu0 %284
    %286 = vrot.lane.b32.xlu0 %v239, 126
    %v287 = vpop.permute.xlu0 %286
    %288 = vrot.lane.b32.xlu0 %v240, 126
    %v289 = vpop.permute.xlu0 %288
    %vm302 = vcmask 1046528
    %v303 = vrot.slane %v230, 1
    %v304 = vrot.slane %v231, 1
    %v305 = vsel %vm302, %v303, %v304
    %v306 = vrot.slane %v232, 1
    %v307 = vsel %vm302, %v304, %v306
    %v308 = vrot.slane %v233, 1
    %v309 = vrot.slane %v234, 1
    %v310 = vsel %vm302, %v308, %v309
    %v311 = vrot.slane %v235, 1
    %v312 = vsel %vm302, %v309, %v311
    %v313 = vrot.slane %v236, 1
    %v314 = vrot.slane %v237, 1
    %v315 = vsel %vm302, %v313, %v314
    %v316 = vrot.slane %v238, 1
    %v317 = vsel %vm302, %v314, %v316
    %v318 = vrot.slane %v239, 1
    %v319 = vrot.slane %v240, 1
    %v320 = vsel %vm302, %v318, %v319
    %v321 = vrot.slane %v241, 1
    %v322 = vsel %vm302, %v319, %v321
    %331 = vrot.lane.b32.xlu0 %v305, 127
    %v332 = vpop.permute.xlu0 %331
    %333 = vrot.lane.b32.xlu0 %v307, 127
    %v334 = vpop.permute.xlu0 %333
    %335 = vrot.lane.b32.xlu0 %v310, 127
    %v336 = vpop.permute.xlu0 %335
    %337 = vrot.lane.b32.xlu0 %v312, 127
    %v338 = vpop.permute.xlu0 %337
    %339 = vrot.lane.b32.xlu0 %v315, 127
    %v340 = vpop.permute.xlu0 %339
    %341 = vrot.lane.b32.xlu0 %v317, 127
    %v342 = vpop.permute.xlu0 %341
    %343 = vrot.lane.b32.xlu0 %v320, 127
    %v344 = vpop.permute.xlu0 %343
    %345 = vrot.lane.b32.xlu0 %v322, 127
    %v346 = vpop.permute.xlu0 %345
    %355 = vrot.lane.b32.xlu0 %v305, 126
    %v356 = vpop.permute.xlu0 %355
    %357 = vrot.lane.b32.xlu0 %v307, 126
    %v358 = vpop.permute.xlu0 %357
    %359 = vrot.lane.b32.xlu0 %v310, 126
    %v360 = vpop.permute.xlu0 %359
    %361 = vrot.lane.b32.xlu0 %v312, 126
    %v362 = vpop.permute.xlu0 %361
    %363 = vrot.lane.b32.xlu0 %v315, 126
    %v364 = vpop.permute.xlu0 %363
    %365 = vrot.lane.b32.xlu0 %v317, 126
    %v366 = vpop.permute.xlu0 %365
    %367 = vrot.lane.b32.xlu0 %v320, 126
    %v368 = vpop.permute.xlu0 %367
    %369 = vrot.lane.b32.xlu0 %v322, 126
    %v370 = vpop.permute.xlu0 %369
    %vm379 = vcmask 1045504
    %v380 = vrot.slane %v230, 2
    %v381 = vrot.slane %v231, 2
    %v382 = vsel %vm379, %v380, %v381
    %v383 = vrot.slane %v232, 2
    %v384 = vsel %vm379, %v381, %v383
    %v385 = vrot.slane %v233, 2
    %v386 = vrot.slane %v234, 2
    %v387 = vsel %vm379, %v385, %v386
    %v388 = vrot.slane %v235, 2
    %v389 = vsel %vm379, %v386, %v388
    %v390 = vrot.slane %v236, 2
    %v391 = vrot.slane %v237, 2
    %v392 = vsel %vm379, %v390, %v391
    %v393 = vrot.slane %v238, 2
    %v394 = vsel %vm379, %v391, %v393
    %v395 = vrot.slane %v239, 2
    %v396 = vrot.slane %v240, 2
    %v397 = vsel %vm379, %v395, %v396
    %v398 = vrot.slane %v241, 2
    %v399 = vsel %vm379, %v396, %v398
    %408 = vrot.lane.b32.xlu0 %v382, 127
    %v409 = vpop.permute.xlu0 %408
    %410 = vrot.lane.b32.xlu0 %v384, 127
    %v411 = vpop.permute.xlu0 %410
    %412 = vrot.lane.b32.xlu0 %v387, 127
    %v413 = vpop.permute.xlu0 %412
    %414 = vrot.lane.b32.xlu0 %v389, 127
    %v415 = vpop.permute.xlu0 %414
    %416 = vrot.lane.b32.xlu0 %v392, 127
    %v417 = vpop.permute.xlu0 %416
    %418 = vrot.lane.b32.xlu0 %v394, 127
    %v419 = vpop.permute.xlu0 %418
    %420 = vrot.lane.b32.xlu0 %v397, 127
    %v421 = vpop.permute.xlu0 %420
    %422 = vrot.lane.b32.xlu0 %v399, 127
    %v423 = vpop.permute.xlu0 %422
    %432 = vrot.lane.b32.xlu0 %v382, 126
    %v433 = vpop.permute.xlu0 %432
    %434 = vrot.lane.b32.xlu0 %v384, 126
    %v435 = vpop.permute.xlu0 %434
    %436 = vrot.lane.b32.xlu0 %v387, 126
    %v437 = vpop.permute.xlu0 %436
    %438 = vrot.lane.b32.xlu0 %v389, 126
    %v439 = vpop.permute.xlu0 %438
    %440 = vrot.lane.b32.xlu0 %v392, 126
    %v441 = vpop.permute.xlu0 %440
    %442 = vrot.lane.b32.xlu0 %v394, 126
    %v443 = vpop.permute.xlu0 %442
    %444 = vrot.lane.b32.xlu0 %v397, 126
    %v445 = vpop.permute.xlu0 %444
    %446 = vrot.lane.b32.xlu0 %v399, 126
    %v447 = vpop.permute.xlu0 %446
    %v456 = vcombine.low %v230, %v236
    %v457 = vcombine.high %v230, %v236
    %v459 = vunpack.c.l.s4 1983009808
    %v460 = vunpack.c.0.s8 %v459
    %v461 = vlaneseq
    %v462 = vshrl.u32 %v461, 7
    %v463 = vsub.s32 %v460, %v462
    %v464 = vrot.slane %v456, %v463
    %v466 = vunpack.c.l.s4 1983009808
    %v467 = vunpack.c.0.s8 %v466
    %v468 = vlaneseq
    %v469 = vshrl.u32 %v468, 7
    %v470 = vsub.s32 %v467, %v469
    %v471 = vrot.slane %v457, %v470
    %v472 = vcombine.low %v233, %v239
    %v473 = vcombine.high %v233, %v239
    %v475 = vunpack.c.l.s4 1983009808
    %v476 = vunpack.c.0.s8 %v475
    %v477 = vlaneseq
    %v478 = vshrl.u32 %v477, 7
    %v479 = vsub.s32 %v476, %v478
    %v480 = vrot.slane %v472, %v479
    %v482 = vunpack.c.l.s4 1983009808
    %v483 = vunpack.c.0.s8 %v482
    %v484 = vlaneseq
    %v485 = vshrl.u32 %v484, 7
    %v486 = vsub.s32 %v483, %v485
    %v487 = vrot.slane %v473, %v486
    %v488 = vcombine.low %v251, %v259
    %v489 = vcombine.high %v251, %v259
    %v491 = vunpack.c.l.s4 1983009808
    %v492 = vunpack.c.0.s8 %v491
    %v493 = vlaneseq
    %v494 = vshrl.u32 %v493, 7
    %v495 = vsub.s32 %v492, %v494
    %v496 = vrot.slane %v488, %v495
    %v498 = vunpack.c.l.s4 1983009808
    %v499 = vunpack.c.0.s8 %v498
    %v500 = vlaneseq
    %v501 = vshrl.u32 %v500, 7
    %v502 = vsub.s32 %v499, %v501
    %v503 = vrot.slane %v489, %v502
    %v504 = vcombine.low %v255, %v263
    %v505 = vcombine.high %v255, %v263
    %v507 = vunpack.c.l.s4 1983009808
    %v508 = vunpack.c.0.s8 %v507
    %v509 = vlaneseq
    %v510 = vshrl.u32 %v509, 7
    %v511 = vsub.s32 %v508, %v510
    %v512 = vrot.slane %v504, %v511
    %v514 = vunpack.c.l.s4 1983009808
    %v515 = vunpack.c.0.s8 %v514
    %v516 = vlaneseq
    %v517 = vshrl.u32 %v516, 7
    %v518 = vsub.s32 %v515, %v517
    %v519 = vrot.slane %v505, %v518
    %v520 = vcombine.low %v464, %v480
    %v521 = vcombine.high %v464, %v480
    %v523 = vunpack.c.l.s4 1934713408
    %v524 = vunpack.c.0.s8 %v523
    %v525 = vlaneseq
    %v526 = vshrl.u32 %v525, 7
    %v527 = vsub.s32 %v524, %v526
    %v528 = vrot.slane %v520, %v527
    %v530 = vunpack.c.l.s4 1934713408
    %v531 = vunpack.c.0.s8 %v530
    %v532 = vlaneseq
    %v533 = vshrl.u32 %v532, 7
    %v534 = vsub.s32 %v531, %v533
    %v535 = vrot.slane %v521, %v534
    %v536 = vcombine.low %v471, %v487
    %v537 = vcombine.high %v471, %v487
    %v539 = vunpack.c.l.s4 1934713408
    %v540 = vunpack.c.0.s8 %v539
    %v541 = vlaneseq
    %v542 = vshrl.u32 %v541, 7
    %v543 = vsub.s32 %v540, %v542
    %v544 = vrot.slane %v536, %v543
    %v546 = vunpack.c.l.s4 1934713408
    %v547 = vunpack.c.0.s8 %v546
    %v548 = vlaneseq
    %v549 = vshrl.u32 %v548, 7
    %v550 = vsub.s32 %v547, %v549
    %v551 = vrot.slane %v537, %v550
    %v552 = vcombine.low %v496, %v512
    %v553 = vcombine.high %v496, %v512
    %v555 = vunpack.c.l.s4 1934713408
    %v556 = vunpack.c.0.s8 %v555
    %v557 = vlaneseq
    %v558 = vshrl.u32 %v557, 7
    %v559 = vsub.s32 %v556, %v558
    %v560 = vrot.slane %v552, %v559
    %v562 = vunpack.c.l.s4 1934713408
    %v563 = vunpack.c.0.s8 %v562
    %v564 = vlaneseq
    %v565 = vshrl.u32 %v564, 7
    %v566 = vsub.s32 %v563, %v565
    %v567 = vrot.slane %v553, %v566
    %v568 = vcombine.low %v503, %v519
    %v569 = vcombine.high %v503, %v519
    %v571 = vunpack.c.l.s4 1934713408
    %v572 = vunpack.c.0.s8 %v571
    %v573 = vlaneseq
    %v574 = vshrl.u32 %v573, 7
    %v575 = vsub.s32 %v572, %v574
    %v576 = vrot.slane %v568, %v575
    %v578 = vunpack.c.l.s4 1934713408
    %v579 = vunpack.c.0.s8 %v578
    %v580 = vlaneseq
    %v581 = vshrl.u32 %v580, 7
    %v582 = vsub.s32 %v579, %v581
    %v583 = vrot.slane %v569, %v582
    %v584 = vcombine.low %v528, %v560
    %v585 = vcombine.high %v528, %v560
    %v586 = vcombine.low %v535, %v567
    %v587 = vcombine.high %v535, %v567
    %v588 = vcombine.low %v544, %v576
    %v589 = vcombine.high %v544, %v576
    %v590 = vcombine.low %v551, %v583
    %v591 = vcombine.high %v551, %v583
    %v592 = vcombine.low %v275, %v283
    %v593 = vcombine.high %v275, %v283
    %v595 = vunpack.c.l.s4 1983009808
    %v596 = vunpack.c.0.s8 %v595
    %v597 = vlaneseq
    %v598 = vshrl.u32 %v597, 7
    %v599 = vsub.s32 %v596, %v598
    %v600 = vrot.slane %v592, %v599
    %v602 = vunpack.c.l.s4 1983009808
    %v603 = vunpack.c.0.s8 %v602
    %v604 = vlaneseq
    %v605 = vshrl.u32 %v604, 7
    %v606 = vsub.s32 %v603, %v605
    %v607 = vrot.slane %v593, %v606
    %v608 = vcombine.low %v279, %v287
    %v609 = vcombine.high %v279, %v287
    %v611 = vunpack.c.l.s4 1983009808
    %v612 = vunpack.c.0.s8 %v611
    %v613 = vlaneseq
    %v614 = vshrl.u32 %v613, 7
    %v615 = vsub.s32 %v612, %v614
    %v616 = vrot.slane %v608, %v615
    %v618 = vunpack.c.l.s4 1983009808
    %v619 = vunpack.c.0.s8 %v618
    %v620 = vlaneseq
    %v621 = vshrl.u32 %v620, 7
    %v622 = vsub.s32 %v619, %v621
    %v623 = vrot.slane %v609, %v622
    %v624 = vcombine.low %v305, %v315
    %v625 = vcombine.high %v305, %v315
    %v627 = vunpack.c.l.s4 1983009808
    %v628 = vunpack.c.0.s8 %v627
    %v629 = vlaneseq
    %v630 = vshrl.u32 %v629, 7
    %v631 = vsub.s32 %v628, %v630
    %v632 = vrot.slane %v624, %v631
    %v634 = vunpack.c.l.s4 1983009808
    %v635 = vunpack.c.0.s8 %v634
    %v636 = vlaneseq
    %v637 = vshrl.u32 %v636, 7
    %v638 = vsub.s32 %v635, %v637
    %v639 = vrot.slane %v625, %v638
    %v640 = vcombine.low %v310, %v320
    %v641 = vcombine.high %v310, %v320
    %v643 = vunpack.c.l.s4 1983009808
    %v644 = vunpack.c.0.s8 %v643
    %v645 = vlaneseq
    %v646 = vshrl.u32 %v645, 7
    %v647 = vsub.s32 %v644, %v646
    %v648 = vrot.slane %v640, %v647
    %v650 = vunpack.c.l.s4 1983009808
    %v651 = vunpack.c.0.s8 %v650
    %v652 = vlaneseq
    %v653 = vshrl.u32 %v652, 7
    %v654 = vsub.s32 %v651, %v653
    %v655 = vrot.slane %v641, %v654
    %v656 = vcombine.low %v600, %v616
    %v657 = vcombine.high %v600, %v616
    %v659 = vunpack.c.l.s4 1934713408
    %v660 = vunpack.c.0.s8 %v659
    %v661 = vlaneseq
    %v662 = vshrl.u32 %v661, 7
    %v663 = vsub.s32 %v660, %v662
    %v664 = vrot.slane %v656, %v663
    %v666 = vunpack.c.l.s4 1934713408
    %v667 = vunpack.c.0.s8 %v666
    %v668 = vlaneseq
    %v669 = vshrl.u32 %v668, 7
    %v670 = vsub.s32 %v667, %v669
    %v671 = vrot.slane %v657, %v670
    %v672 = vcombine.low %v607, %v623
    %v673 = vcombine.high %v607, %v623
    %v675 = vunpack.c.l.s4 1934713408
    %v676 = vunpack.c.0.s8 %v675
    %v677 = vlaneseq
    %v678 = vshrl.u32 %v677, 7
    %v679 = vsub.s32 %v676, %v678
    %v680 = vrot.slane %v672, %v679
    %v682 = vunpack.c.l.s4 1934713408
    %v683 = vunpack.c.0.s8 %v682
    %v684 = vlaneseq
    %v685 = vshrl.u32 %v684, 7
    %v686 = vsub.s32 %v683, %v685
    %v687 = vrot.slane %v673, %v686
    %v688 = vcombine.low %v632, %v648
    %v689 = vcombine.high %v632, %v648
    %v691 = vunpack.c.l.s4 1934713408
    %v692 = vunpack.c.0.s8 %v691
    %v693 = vlaneseq
    %v694 = vshrl.u32 %v693, 7
    %v695 = vsub.s32 %v692, %v694
    %v696 = vrot.slane %v688, %v695
    %v698 = vunpack.c.l.s4 1934713408
    %v699 = vunpack.c.0.s8 %v698
    %v700 = vlaneseq
    %v701 = vshrl.u32 %v700, 7
    %v702 = vsub.s32 %v699, %v701
    %v703 = vrot.slane %v689, %v702
    %v704 = vcombine.low %v639, %v655
    %v705 = vcombine.high %v639, %v655
    %v707 = vunpack.c.l.s4 1934713408
    %v708 = vunpack.c.0.s8 %v707
    %v709 = vlaneseq
    %v710 = vshrl.u32 %v709, 7
    %v711 = vsub.s32 %v708, %v710
    %v712 = vrot.slane %v704, %v711
    %v714 = vunpack.c.l.s4 1934713408
    %v715 = vunpack.c.0.s8 %v714
    %v716 = vlaneseq
    %v717 = vshrl.u32 %v716, 7
    %v718 = vsub.s32 %v715, %v717
    %v719 = vrot.slane %v705, %v718
    %v720 = vcombine.low %v664, %v696
    %v721 = vcombine.high %v664, %v696
    %v722 = vcombine.low %v671, %v703
    %v723 = vcombine.high %v671, %v703
    %v724 = vcombine.low %v680, %v712
    %v725 = vcombine.high %v680, %v712
    %v726 = vcombine.low %v687, %v719
    %v727 = vcombine.high %v687, %v719
    %v728 = vcombine.low %v332, %v340
    %v729 = vcombine.high %v332, %v340
    %v731 = vunpack.c.l.s4 1983009808
    %v732 = vunpack.c.0.s8 %v731
    %v733 = vlaneseq
    %v734 = vshrl.u32 %v733, 7
    %v735 = vsub.s32 %v732, %v734
    %v736 = vrot.slane %v728, %v735
    %v738 = vunpack.c.l.s4 1983009808
    %v739 = vunpack.c.0.s8 %v738
    %v740 = vlaneseq
    %v741 = vshrl.u32 %v740, 7
    %v742 = vsub.s32 %v739, %v741
    %v743 = vrot.slane %v729, %v742
    %v744 = vcombine.low %v336, %v344
    %v745 = vcombine.high %v336, %v344
    %v747 = vunpack.c.l.s4 1983009808
    %v748 = vunpack.c.0.s8 %v747
    %v749 = vlaneseq
    %v750 = vshrl.u32 %v749, 7
    %v751 = vsub.s32 %v748, %v750
    %v752 = vrot.slane %v744, %v751
    %v754 = vunpack.c.l.s4 1983009808
    %v755 = vunpack.c.0.s8 %v754
    %v756 = vlaneseq
    %v757 = vshrl.u32 %v756, 7
    %v758 = vsub.s32 %v755, %v757
    %v759 = vrot.slane %v745, %v758
    %v760 = vcombine.low %v356, %v364
    %v761 = vcombine.high %v356, %v364
    %v763 = vunpack.c.l.s4 1983009808
    %v764 = vunpack.c.0.s8 %v763
    %v765 = vlaneseq
    %v766 = vshrl.u32 %v765, 7
    %v767 = vsub.s32 %v764, %v766
    %v768 = vrot.slane %v760, %v767
    %v770 = vunpack.c.l.s4 1983009808
    %v771 = vunpack.c.0.s8 %v770
    %v772 = vlaneseq
    %v773 = vshrl.u32 %v772, 7
    %v774 = vsub.s32 %v771, %v773
    %v775 = vrot.slane %v761, %v774
    %v776 = vcombine.low %v360, %v368
    %v777 = vcombine.high %v360, %v368
    %v779 = vunpack.c.l.s4 1983009808
    %v780 = vunpack.c.0.s8 %v779
    %v781 = vlaneseq
    %v782 = vshrl.u32 %v781, 7
    %v783 = vsub.s32 %v780, %v782
    %v784 = vrot.slane %v776, %v783
    %v786 = vunpack.c.l.s4 1983009808
    %v787 = vunpack.c.0.s8 %v786
    %v788 = vlaneseq
    %v789 = vshrl.u32 %v788, 7
    %v790 = vsub.s32 %v787, %v789
    %v791 = vrot.slane %v777, %v790
    %v792 = vcombine.low %v736, %v752
    %v793 = vcombine.high %v736, %v752
    %v795 = vunpack.c.l.s4 1934713408
    %v796 = vunpack.c.0.s8 %v795
    %v797 = vlaneseq
    %v798 = vshrl.u32 %v797, 7
    %v799 = vsub.s32 %v796, %v798
    %v800 = vrot.slane %v792, %v799
    %v802 = vunpack.c.l.s4 1934713408
    %v803 = vunpack.c.0.s8 %v802
    %v804 = vlaneseq
    %v805 = vshrl.u32 %v804, 7
    %v806 = vsub.s32 %v803, %v805
    %v807 = vrot.slane %v793, %v806
    %v808 = vcombine.low %v743, %v759
    %v809 = vcombine.high %v743, %v759
    %v811 = vunpack.c.l.s4 1934713408
    %v812 = vunpack.c.0.s8 %v811
    %v813 = vlaneseq
    %v814 = vshrl.u32 %v813, 7
    %v815 = vsub.s32 %v812, %v814
    %v816 = vrot.slane %v808, %v815
    %v818 = vunpack.c.l.s4 1934713408
    %v819 = vunpack.c.0.s8 %v818
    %v820 = vlaneseq
    %v821 = vshrl.u32 %v820, 7
    %v822 = vsub.s32 %v819, %v821
    %v823 = vrot.slane %v809, %v822
    %v824 = vcombine.low %v768, %v784
    %v825 = vcombine.high %v768, %v784
    %v827 = vunpack.c.l.s4 1934713408
    %v828 = vunpack.c.0.s8 %v827
    %v829 = vlaneseq
    %v830 = vshrl.u32 %v829, 7
    %v831 = vsub.s32 %v828, %v830
    %v832 = vrot.slane %v824, %v831
    %v834 = vunpack.c.l.s4 1934713408
    %v835 = vunpack.c.0.s8 %v834
    %v836 = vlaneseq
    %v837 = vshrl.u32 %v836, 7
    %v838 = vsub.s32 %v835, %v837
    %v839 = vrot.slane %v825, %v838
    %v840 = vcombine.low %v775, %v791
    %v841 = vcombine.high %v775, %v791
    %v843 = vunpack.c.l.s4 1934713408
    %v844 = vunpack.c.0.s8 %v843
    %v845 = vlaneseq
    %v846 = vshrl.u32 %v845, 7
    %v847 = vsub.s32 %v844, %v846
    %v848 = vrot.slane %v840, %v847
    %v850 = vunpack.c.l.s4 1934713408
    %v851 = vunpack.c.0.s8 %v850
    %v852 = vlaneseq
    %v853 = vshrl.u32 %v852, 7
    %v854 = vsub.s32 %v851, %v853
    %v855 = vrot.slane %v841, %v854
    %v856 = vcombine.low %v800, %v832
    %v857 = vcombine.high %v800, %v832
    %v858 = vcombine.low %v807, %v839
    %v859 = vcombine.high %v807, %v839
    %v860 = vcombine.low %v816, %v848
    %v861 = vcombine.high %v816, %v848
    %v862 = vcombine.low %v823, %v855
    %v863 = vcombine.high %v823, %v855
    %v864 = vcombine.low %v382, %v392
    %v865 = vcombine.high %v382, %v392
    %v867 = vunpack.c.l.s4 1983009808
    %v868 = vunpack.c.0.s8 %v867
    %v869 = vlaneseq
    %v870 = vshrl.u32 %v869, 7
    %v871 = vsub.s32 %v868, %v870
    %v872 = vrot.slane %v864, %v871
    %v874 = vunpack.c.l.s4 1983009808
    %v875 = vunpack.c.0.s8 %v874
    %v876 = vlaneseq
    %v877 = vshrl.u32 %v876, 7
    %v878 = vsub.s32 %v875, %v877
    %v879 = vrot.slane %v865, %v878
    %v880 = vcombine.low %v387, %v397
    %v881 = vcombine.high %v387, %v397
    %v883 = vunpack.c.l.s4 1983009808
    %v884 = vunpack.c.0.s8 %v883
    %v885 = vlaneseq
    %v886 = vshrl.u32 %v885, 7
    %v887 = vsub.s32 %v884, %v886
    %v888 = vrot.slane %v880, %v887
    %v890 = vunpack.c.l.s4 1983009808
    %v891 = vunpack.c.0.s8 %v890
    %v892 = vlaneseq
    %v893 = vshrl.u32 %v892, 7
    %v894 = vsub.s32 %v891, %v893
    %v895 = vrot.slane %v881, %v894
    %v896 = vcombine.low %v409, %v417
    %v897 = vcombine.high %v409, %v417
    %v899 = vunpack.c.l.s4 1983009808
    %v900 = vunpack.c.0.s8 %v899
    %v901 = vlaneseq
    %v902 = vshrl.u32 %v901, 7
    %v903 = vsub.s32 %v900, %v902
    %v904 = vrot.slane %v896, %v903
    %v906 = vunpack.c.l.s4 1983009808
    %v907 = vunpack.c.0.s8 %v906
    %v908 = vlaneseq
    %v909 = vshrl.u32 %v908, 7
    %v910 = vsub.s32 %v907, %v909
    %v911 = vrot.slane %v897, %v910
    %v912 = vcombine.low %v413, %v421
    %v913 = vcombine.high %v413, %v421
    %v915 = vunpack.c.l.s4 1983009808
    %v916 = vunpack.c.0.s8 %v915
    %v917 = vlaneseq
    %v918 = vshrl.u32 %v917, 7
    %v919 = vsub.s32 %v916, %v918
    %v920 = vrot.slane %v912, %v919
    %v922 = vunpack.c.l.s4 1983009808
    %v923 = vunpack.c.0.s8 %v922
    %v924 = vlaneseq
    %v925 = vshrl.u32 %v924, 7
    %v926 = vsub.s32 %v923, %v925
    %v927 = vrot.slane %v913, %v926
    %v928 = vcombine.low %v872, %v888
    %v929 = vcombine.high %v872, %v888
    %v931 = vunpack.c.l.s4 1934713408
    %v932 = vunpack.c.0.s8 %v931
    %v933 = vlaneseq
    %v934 = vshrl.u32 %v933, 7
    %v935 = vsub.s32 %v932, %v934
    %v936 = vrot.slane %v928, %v935
    %v938 = vunpack.c.l.s4 1934713408
    %v939 = vunpack.c.0.s8 %v938
    %v940 = vlaneseq
    %v941 = vshrl.u32 %v940, 7
    %v942 = vsub.s32 %v939, %v941
    %v943 = vrot.slane %v929, %v942
    %v944 = vcombine.low %v879, %v895
    %v945 = vcombine.high %v879, %v895
    %v947 = vunpack.c.l.s4 1934713408
    %v948 = vunpack.c.0.s8 %v947
    %v949 = vlaneseq
    %v950 = vshrl.u32 %v949, 7
    %v951 = vsub.s32 %v948, %v950
    %v952 = vrot.slane %v944, %v951
    %v954 = vunpack.c.l.s4 1934713408
    %v955 = vunpack.c.0.s8 %v954
    %v956 = vlaneseq
    %v957 = vshrl.u32 %v956, 7
    %v958 = vsub.s32 %v955, %v957
    %v959 = vrot.slane %v945, %v958
    %v960 = vcombine.low %v904, %v920
    %v961 = vcombine.high %v904, %v920
    %v963 = vunpack.c.l.s4 1934713408
    %v964 = vunpack.c.0.s8 %v963
    %v965 = vlaneseq
    %v966 = vshrl.u32 %v965, 7
    %v967 = vsub.s32 %v964, %v966
    %v968 = vrot.slane %v960, %v967
    %v970 = vunpack.c.l.s4 1934713408
    %v971 = vunpack.c.0.s8 %v970
    %v972 = vlaneseq
    %v973 = vshrl.u32 %v972, 7
    %v974 = vsub.s32 %v971, %v973
    %v975 = vrot.slane %v961, %v974
    %v976 = vcombine.low %v911, %v927
    %v977 = vcombine.high %v911, %v927
    %v979 = vunpack.c.l.s4 1934713408
    %v980 = vunpack.c.0.s8 %v979
    %v981 = vlaneseq
    %v982 = vshrl.u32 %v981, 7
    %v983 = vsub.s32 %v980, %v982
    %v984 = vrot.slane %v976, %v983
    %v986 = vunpack.c.l.s4 1934713408
    %v987 = vunpack.c.0.s8 %v986
    %v988 = vlaneseq
    %v989 = vshrl.u32 %v988, 7
    %v990 = vsub.s32 %v987, %v989
    %v991 = vrot.slane %v977, %v990
    %v992 = vcombine.low %v936, %v968
    %v993 = vcombine.high %v936, %v968
    %v994 = vcombine.low %v943, %v975
    %v995 = vcombine.high %v943, %v975
    %v996 = vcombine.low %v952, %v984
    %v997 = vcombine.high %v952, %v984
    %v998 = vcombine.low %v959, %v991
    %v999 = vcombine.high %v959, %v991
    %v1000 = vcombine.low %v433, %v441
    %v1001 = vcombine.high %v433, %v441
    %v1003 = vunpack.c.l.s4 1983009808
    %v1004 = vunpack.c.0.s8 %v1003
    %v1005 = vlaneseq
    %v1006 = vshrl.u32 %v1005, 7
    %v1007 = vsub.s32 %v1004, %v1006
    %v1008 = vrot.slane %v1000, %v1007
    %v1010 = vunpack.c.l.s4 1983009808
    %v1011 = vunpack.c.0.s8 %v1010
    %v1012 = vlaneseq
    %v1013 = vshrl.u32 %v1012, 7
    %v1014 = vsub.s32 %v1011, %v1013
    %v1015 = vrot.slane %v1001, %v1014
    %v1016 = vcombine.low %v437, %v445
    %v1017 = vcombine.high %v437, %v445
    %v1019 = vunpack.c.l.s4 1983009808
    %v1020 = vunpack.c.0.s8 %v1019
    %v1021 = vlaneseq
    %v1022 = vshrl.u32 %v1021, 7
    %v1023 = vsub.s32 %v1020, %v1022
    %v1024 = vrot.slane %v1016, %v1023
    %v1026 = vunpack.c.l.s4 1983009808
    %v1027 = vunpack.c.0.s8 %v1026
    %v1028 = vlaneseq
    %v1029 = vshrl.u32 %v1028, 7
    %v1030 = vsub.s32 %v1027, %v1029
    %v1031 = vrot.slane %v1017, %v1030
    %v1032 = vcombine.low %v1008, %v1024
    %v1033 = vcombine.high %v1008, %v1024
    %v1035 = vunpack.c.l.s4 1934713408
    %v1036 = vunpack.c.0.s8 %v1035
    %v1037 = vlaneseq
    %v1038 = vshrl.u32 %v1037, 7
    %v1039 = vsub.s32 %v1036, %v1038
    %v1040 = vrot.slane %v1032, %v1039
    %v1042 = vunpack.c.l.s4 1934713408
    %v1043 = vunpack.c.0.s8 %v1042
    %v1044 = vlaneseq
    %v1045 = vshrl.u32 %v1044, 7
    %v1046 = vsub.s32 %v1043, %v1045
    %v1047 = vrot.slane %v1033, %v1046
    %v1048 = vcombine.low %v1015, %v1031
    %v1049 = vcombine.high %v1015, %v1031
    %v1051 = vunpack.c.l.s4 1934713408
    %v1052 = vunpack.c.0.s8 %v1051
    %v1053 = vlaneseq
    %v1054 = vshrl.u32 %v1053, 7
    %v1055 = vsub.s32 %v1052, %v1054
    %v1056 = vrot.slane %v1048, %v1055
    %v1058 = vunpack.c.l.s4 1934713408
    %v1059 = vunpack.c.0.s8 %v1058
    %v1060 = vlaneseq
    %v1061 = vshrl.u32 %v1060, 7
    %v1062 = vsub.s32 %v1059, %v1061
    %v1063 = vrot.slane %v1049, %v1062
    %v1064 = vcombine.high %v1040, 0.0
    %v1065 = vcombine.high %v1047, 0.0
    %v1066 = vcombine.high %v1056, 0.0
    %v1067 = vcombine.high %v1063, 0.0
    %v1068 = vcombine.low %v231, %v237
    %v1069 = vcombine.high %v231, %v237
    %v1071 = vunpack.c.l.s4 1983009808
    %v1072 = vunpack.c.0.s8 %v1071
    %v1073 = vlaneseq
    %v1074 = vshrl.u32 %v1073, 7
    %v1075 = vsub.s32 %v1072, %v1074
    %v1076 = vrot.slane %v1068, %v1075
    %v1078 = vunpack.c.l.s4 1983009808
    %v1079 = vunpack.c.0.s8 %v1078
    %v1080 = vlaneseq
    %v1081 = vshrl.u32 %v1080, 7
    %v1082 = vsub.s32 %v1079, %v1081
    %v1083 = vrot.slane %v1069, %v1082
    %v1084 = vcombine.low %v234, %v240
    %v1085 = vcombine.high %v234, %v240
    %v1087 = vunpack.c.l.s4 1983009808
    %v1088 = vunpack.c.0.s8 %v1087
    %v1089 = vlaneseq
    %v1090 = vshrl.u32 %v1089, 7
    %v1091 = vsub.s32 %v1088, %v1090
    %v1092 = vrot.slane %v1084, %v1091
    %v1094 = vunpack.c.l.s4 1983009808
    %v1095 = vunpack.c.0.s8 %v1094
    %v1096 = vlaneseq
    %v1097 = vshrl.u32 %v1096, 7
    %v1098 = vsub.s32 %v1095, %v1097
    %v1099 = vrot.slane %v1085, %v1098
    %v1100 = vcombine.low %v253, %v261
    %v1101 = vcombine.high %v253, %v261
    %v1103 = vunpack.c.l.s4 1983009808
    %v1104 = vunpack.c.0.s8 %v1103
    %v1105 = vlaneseq
    %v1106 = vshrl.u32 %v1105, 7
    %v1107 = vsub.s32 %v1104, %v1106
    %v1108 = vrot.slane %v1100, %v1107
    %v1110 = vunpack.c.l.s4 1983009808
    %v1111 = vunpack.c.0.s8 %v1110
    %v1112 = vlaneseq
    %v1113 = vshrl.u32 %v1112, 7
    %v1114 = vsub.s32 %v1111, %v1113
    %v1115 = vrot.slane %v1101, %v1114
    %v1116 = vcombine.low %v257, %v265
    %v1117 = vcombine.high %v257, %v265
    %v1119 = vunpack.c.l.s4 1983009808
    %v1120 = vunpack.c.0.s8 %v1119
    %v1121 = vlaneseq
    %v1122 = vshrl.u32 %v1121, 7
    %v1123 = vsub.s32 %v1120, %v1122
    %v1124 = vrot.slane %v1116, %v1123
    %v1126 = vunpack.c.l.s4 1983009808
    %v1127 = vunpack.c.0.s8 %v1126
    %v1128 = vlaneseq
    %v1129 = vshrl.u32 %v1128, 7
    %v1130 = vsub.s32 %v1127, %v1129
    %v1131 = vrot.slane %v1117, %v1130
    %v1132 = vcombine.low %v1076, %v1092
    %v1133 = vcombine.high %v1076, %v1092
    %v1135 = vunpack.c.l.s4 1934713408
    %v1136 = vunpack.c.0.s8 %v1135
    %v1137 = vlaneseq
    %v1138 = vshrl.u32 %v1137, 7
    %v1139 = vsub.s32 %v1136, %v1138
    %v1140 = vrot.slane %v1132, %v1139
    %v1142 = vunpack.c.l.s4 1934713408
    %v1143 = vunpack.c.0.s8 %v1142
    %v1144 = vlaneseq
    %v1145 = vshrl.u32 %v1144, 7
    %v1146 = vsub.s32 %v1143, %v1145
    %v1147 = vrot.slane %v1133, %v1146
    %v1148 = vcombine.low %v1083, %v1099
    %v1149 = vcombine.high %v1083, %v1099
    %v1151 = vunpack.c.l.s4 1934713408
    %v1152 = vunpack.c.0.s8 %v1151
    %v1153 = vlaneseq
    %v1154 = vshrl.u32 %v1153, 7
    %v1155 = vsub.s32 %v1152, %v1154
    %v1156 = vrot.slane %v1148, %v1155
    %v1158 = vunpack.c.l.s4 1934713408
    %v1159 = vunpack.c.0.s8 %v1158
    %v1160 = vlaneseq
    %v1161 = vshrl.u32 %v1160, 7
    %v1162 = vsub.s32 %v1159, %v1161
    %v1163 = vrot.slane %v1149, %v1162
    %v1164 = vcombine.low %v1108, %v1124
    %v1165 = vcombine.high %v1108, %v1124
    %v1167 = vunpack.c.l.s4 1934713408
    %v1168 = vunpack.c.0.s8 %v1167
    %v1169 = vlaneseq
    %v1170 = vshrl.u32 %v1169, 7
    %v1171 = vsub.s32 %v1168, %v1170
    %v1172 = vrot.slane %v1164, %v1171
    %v1174 = vunpack.c.l.s4 1934713408
    %v1175 = vunpack.c.0.s8 %v1174
    %v1176 = vlaneseq
    %v1177 = vshrl.u32 %v1176, 7
    %v1178 = vsub.s32 %v1175, %v1177
    %v1179 = vrot.slane %v1165, %v1178
    %v1180 = vcombine.low %v1115, %v1131
    %v1181 = vcombine.high %v1115, %v1131
    %v1183 = vunpack.c.l.s4 1934713408
    %v1184 = vunpack.c.0.s8 %v1183
    %v1185 = vlaneseq
    %v1186 = vshrl.u32 %v1185, 7
    %v1187 = vsub.s32 %v1184, %v1186
    %v1188 = vrot.slane %v1180, %v1187
    %v1190 = vunpack.c.l.s4 1934713408
    %v1191 = vunpack.c.0.s8 %v1190
    %v1192 = vlaneseq
    %v1193 = vshrl.u32 %v1192, 7
    %v1194 = vsub.s32 %v1191, %v1193
    %v1195 = vrot.slane %v1181, %v1194
    %v1196 = vcombine.low %v1140, %v1172
    %v1197 = vcombine.high %v1140, %v1172
    %v1198 = vcombine.low %v1147, %v1179
    %v1199 = vcombine.high %v1147, %v1179
    %v1200 = vcombine.low %v1156, %v1188
    %v1201 = vcombine.high %v1156, %v1188
    %v1202 = vcombine.low %v1163, %v1195
    %v1203 = vcombine.high %v1163, %v1195
    %v1204 = vcombine.low %v277, %v285
    %v1205 = vcombine.high %v277, %v285
    %v1207 = vunpack.c.l.s4 1983009808
    %v1208 = vunpack.c.0.s8 %v1207
    %v1209 = vlaneseq
    %v1210 = vshrl.u32 %v1209, 7
    %v1211 = vsub.s32 %v1208, %v1210
    %v1212 = vrot.slane %v1204, %v1211
    %v1214 = vunpack.c.l.s4 1983009808
    %v1215 = vunpack.c.0.s8 %v1214
    %v1216 = vlaneseq
    %v1217 = vshrl.u32 %v1216, 7
    %v1218 = vsub.s32 %v1215, %v1217
    %v1219 = vrot.slane %v1205, %v1218
    %v1220 = vcombine.low %v281, %v289
    %v1221 = vcombine.high %v281, %v289
    %v1223 = vunpack.c.l.s4 1983009808
    %v1224 = vunpack.c.0.s8 %v1223
    %v1225 = vlaneseq
    %v1226 = vshrl.u32 %v1225, 7
    %v1227 = vsub.s32 %v1224, %v1226
    %v1228 = vrot.slane %v1220, %v1227
    %v1230 = vunpack.c.l.s4 1983009808
    %v1231 = vunpack.c.0.s8 %v1230
    %v1232 = vlaneseq
    %v1233 = vshrl.u32 %v1232, 7
    %v1234 = vsub.s32 %v1231, %v1233
    %v1235 = vrot.slane %v1221, %v1234
    %v1236 = vcombine.low %v307, %v317
    %v1237 = vcombine.high %v307, %v317
    %v1239 = vunpack.c.l.s4 1983009808
    %v1240 = vunpack.c.0.s8 %v1239
    %v1241 = vlaneseq
    %v1242 = vshrl.u32 %v1241, 7
    %v1243 = vsub.s32 %v1240, %v1242
    %v1244 = vrot.slane %v1236, %v1243
    %v1246 = vunpack.c.l.s4 1983009808
    %v1247 = vunpack.c.0.s8 %v1246
    %v1248 = vlaneseq
    %v1249 = vshrl.u32 %v1248, 7
    %v1250 = vsub.s32 %v1247, %v1249
    %v1251 = vrot.slane %v1237, %v1250
    %v1252 = vcombine.low %v312, %v322
    %v1253 = vcombine.high %v312, %v322
    %v1255 = vunpack.c.l.s4 1983009808
    %v1256 = vunpack.c.0.s8 %v1255
    %v1257 = vlaneseq
    %v1258 = vshrl.u32 %v1257, 7
    %v1259 = vsub.s32 %v1256, %v1258
    %v1260 = vrot.slane %v1252, %v1259
    %v1262 = vunpack.c.l.s4 1983009808
    %v1263 = vunpack.c.0.s8 %v1262
    %v1264 = vlaneseq
    %v1265 = vshrl.u32 %v1264, 7
    %v1266 = vsub.s32 %v1263, %v1265
    %v1267 = vrot.slane %v1253, %v1266
    %v1268 = vcombine.low %v1212, %v1228
    %v1269 = vcombine.high %v1212, %v1228
    %v1271 = vunpack.c.l.s4 1934713408
    %v1272 = vunpack.c.0.s8 %v1271
    %v1273 = vlaneseq
    %v1274 = vshrl.u32 %v1273, 7
    %v1275 = vsub.s32 %v1272, %v1274
    %v1276 = vrot.slane %v1268, %v1275
    %v1278 = vunpack.c.l.s4 1934713408
    %v1279 = vunpack.c.0.s8 %v1278
    %v1280 = vlaneseq
    %v1281 = vshrl.u32 %v1280, 7
    %v1282 = vsub.s32 %v1279, %v1281
    %v1283 = vrot.slane %v1269, %v1282
    %v1284 = vcombine.low %v1219, %v1235
    %v1285 = vcombine.high %v1219, %v1235
    %v1287 = vunpack.c.l.s4 1934713408
    %v1288 = vunpack.c.0.s8 %v1287
    %v1289 = vlaneseq
    %v1290 = vshrl.u32 %v1289, 7
    %v1291 = vsub.s32 %v1288, %v1290
    %v1292 = vrot.slane %v1284, %v1291
    %v1294 = vunpack.c.l.s4 1934713408
    %v1295 = vunpack.c.0.s8 %v1294
    %v1296 = vlaneseq
    %v1297 = vshrl.u32 %v1296, 7
    %v1298 = vsub.s32 %v1295, %v1297
    %v1299 = vrot.slane %v1285, %v1298
    %v1300 = vcombine.low %v1244, %v1260
    %v1301 = vcombine.high %v1244, %v1260
    %v1303 = vunpack.c.l.s4 1934713408
    %v1304 = vunpack.c.0.s8 %v1303
    %v1305 = vlaneseq
    %v1306 = vshrl.u32 %v1305, 7
    %v1307 = vsub.s32 %v1304, %v1306
    %v1308 = vrot.slane %v1300, %v1307
    %v1310 = vunpack.c.l.s4 1934713408
    %v1311 = vunpack.c.0.s8 %v1310
    %v1312 = vlaneseq
    %v1313 = vshrl.u32 %v1312, 7
    %v1314 = vsub.s32 %v1311, %v1313
    %v1315 = vrot.slane %v1301, %v1314
    %v1316 = vcombine.low %v1251, %v1267
    %v1317 = vcombine.high %v1251, %v1267
    %v1319 = vunpack.c.l.s4 1934713408
    %v1320 = vunpack.c.0.s8 %v1319
    %v1321 = vlaneseq
    %v1322 = vshrl.u32 %v1321, 7
    %v1323 = vsub.s32 %v1320, %v1322
    %v1324 = vrot.slane %v1316, %v1323
    %v1326 = vunpack.c.l.s4 1934713408
    %v1327 = vunpack.c.0.s8 %v1326
    %v1328 = vlaneseq
    %v1329 = vshrl.u32 %v1328, 7
    %v1330 = vsub.s32 %v1327, %v1329
    %v1331 = vrot.slane %v1317, %v1330
    %v1332 = vcombine.low %v1276, %v1308
    %v1333 = vcombine.high %v1276, %v1308
    %v1334 = vcombine.low %v1283, %v1315
    %v1335 = vcombine.high %v1283, %v1315
    %v1336 = vcombine.low %v1292, %v1324
    %v1337 = vcombine.high %v1292, %v1324
    %v1338 = vcombine.low %v1299, %v1331
    %v1339 = vcombine.high %v1299, %v1331
    %v1340 = vcombine.low %v334, %v342
    %v1341 = vcombine.high %v334, %v342
    %v1343 = vunpack.c.l.s4 1983009808
    %v1344 = vunpack.c.0.s8 %v1343
    %v1345 = vlaneseq
    %v1346 = vshrl.u32 %v1345, 7
    %v1347 = vsub.s32 %v1344, %v1346
    %v1348 = vrot.slane %v1340, %v1347
    %v1350 = vunpack.c.l.s4 1983009808
    %v1351 = vunpack.c.0.s8 %v1350
    %v1352 = vlaneseq
    %v1353 = vshrl.u32 %v1352, 7
    %v1354 = vsub.s32 %v1351, %v1353
    %v1355 = vrot.slane %v1341, %v1354
    %v1356 = vcombine.low %v338, %v346
    %v1357 = vcombine.high %v338, %v346
    %v1359 = vunpack.c.l.s4 1983009808
    %v1360 = vunpack.c.0.s8 %v1359
    %v1361 = vlaneseq
    %v1362 = vshrl.u32 %v1361, 7
    %v1363 = vsub.s32 %v1360, %v1362
    %v1364 = vrot.slane %v1356, %v1363
    %v1366 = vunpack.c.l.s4 1983009808
    %v1367 = vunpack.c.0.s8 %v1366
    %v1368 = vlaneseq
    %v1369 = vshrl.u32 %v1368, 7
    %v1370 = vsub.s32 %v1367, %v1369
    %v1371 = vrot.slane %v1357, %v1370
    %v1372 = vcombine.low %v358, %v366
    %v1373 = vcombine.high %v358, %v366
    %v1375 = vunpack.c.l.s4 1983009808
    %v1376 = vunpack.c.0.s8 %v1375
    %v1377 = vlaneseq
    %v1378 = vshrl.u32 %v1377, 7
    %v1379 = vsub.s32 %v1376, %v1378
    %v1380 = vrot.slane %v1372, %v1379
    %v1382 = vunpack.c.l.s4 1983009808
    %v1383 = vunpack.c.0.s8 %v1382
    %v1384 = vlaneseq
    %v1385 = vshrl.u32 %v1384, 7
    %v1386 = vsub.s32 %v1383, %v1385
    %v1387 = vrot.slane %v1373, %v1386
    %v1388 = vcombine.low %v362, %v370
    %v1389 = vcombine.high %v362, %v370
    %v1391 = vunpack.c.l.s4 1983009808
    %v1392 = vunpack.c.0.s8 %v1391
    %v1393 = vlaneseq
    %v1394 = vshrl.u32 %v1393, 7
    %v1395 = vsub.s32 %v1392, %v1394
    %v1396 = vrot.slane %v1388, %v1395
    %v1398 = vunpack.c.l.s4 1983009808
    %v1399 = vunpack.c.0.s8 %v1398
    %v1400 = vlaneseq
    %v1401 = vshrl.u32 %v1400, 7
    %v1402 = vsub.s32 %v1399, %v1401
    %v1403 = vrot.slane %v1389, %v1402
    %v1404 = vcombine.low %v1348, %v1364
    %v1405 = vcombine.high %v1348, %v1364
    %v1407 = vunpack.c.l.s4 1934713408
    %v1408 = vunpack.c.0.s8 %v1407
    %v1409 = vlaneseq
    %v1410 = vshrl.u32 %v1409, 7
    %v1411 = vsub.s32 %v1408, %v1410
    %v1412 = vrot.slane %v1404, %v1411
    %v1414 = vunpack.c.l.s4 1934713408
    %v1415 = vunpack.c.0.s8 %v1414
    %v1416 = vlaneseq
    %v1417 = vshrl.u32 %v1416, 7
    %v1418 = vsub.s32 %v1415, %v1417
    %v1419 = vrot.slane %v1405, %v1418
    %v1420 = vcombine.low %v1355, %v1371
    %v1421 = vcombine.high %v1355, %v1371
    %v1423 = vunpack.c.l.s4 1934713408
    %v1424 = vunpack.c.0.s8 %v1423
    %v1425 = vlaneseq
    %v1426 = vshrl.u32 %v1425, 7
    %v1427 = vsub.s32 %v1424, %v1426
    %v1428 = vrot.slane %v1420, %v1427
    %v1430 = vunpack.c.l.s4 1934713408
    %v1431 = vunpack.c.0.s8 %v1430
    %v1432 = vlaneseq
    %v1433 = vshrl.u32 %v1432, 7
    %v1434 = vsub.s32 %v1431, %v1433
    %v1435 = vrot.slane %v1421, %v1434
    %v1436 = vcombine.low %v1380, %v1396
    %v1437 = vcombine.high %v1380, %v1396
    %v1439 = vunpack.c.l.s4 1934713408
    %v1440 = vunpack.c.0.s8 %v1439
    %v1441 = vlaneseq
    %v1442 = vshrl.u32 %v1441, 7
    %v1443 = vsub.s32 %v1440, %v1442
    %v1444 = vrot.slane %v1436, %v1443
    %v1446 = vunpack.c.l.s4 1934713408
    %v1447 = vunpack.c.0.s8 %v1446
    %v1448 = vlaneseq
    %v1449 = vshrl.u32 %v1448, 7
    %v1450 = vsub.s32 %v1447, %v1449
    %v1451 = vrot.slane %v1437, %v1450
    %v1452 = vcombine.low %v1387, %v1403
    %v1453 = vcombine.high %v1387, %v1403
    %v1455 = vunpack.c.l.s4 1934713408
    %v1456 = vunpack.c.0.s8 %v1455
    %v1457 = vlaneseq
    %v1458 = vshrl.u32 %v1457, 7
    %v1459 = vsub.s32 %v1456, %v1458
    %v1460 = vrot.slane %v1452, %v1459
    %v1462 = vunpack.c.l.s4 1934713408
    %v1463 = vunpack.c.0.s8 %v1462
    %v1464 = vlaneseq
    %v1465 = vshrl.u32 %v1464, 7
    %v1466 = vsub.s32 %v1463, %v1465
    %v1467 = vrot.slane %v1453, %v1466
    %v1468 = vcombine.low %v1412, %v1444
    %v1469 = vcombine.high %v1412, %v1444
    %v1470 = vcombine.low %v1419, %v1451
    %v1471 = vcombine.high %v1419, %v1451
    %v1472 = vcombine.low %v1428, %v1460
    %v1473 = vcombine.high %v1428, %v1460
    %v1474 = vcombine.low %v1435, %v1467
    %v1475 = vcombine.high %v1435, %v1467
    %v1476 = vcombine.low %v384, %v394
    %v1477 = vcombine.high %v384, %v394
    %v1479 = vunpack.c.l.s4 1983009808
    %v1480 = vunpack.c.0.s8 %v1479
    %v1481 = vlaneseq
    %v1482 = vshrl.u32 %v1481, 7
    %v1483 = vsub.s32 %v1480, %v1482
    %v1484 = vrot.slane %v1476, %v1483
    %v1486 = vunpack.c.l.s4 1983009808
    %v1487 = vunpack.c.0.s8 %v1486
    %v1488 = vlaneseq
    %v1489 = vshrl.u32 %v1488, 7
    %v1490 = vsub.s32 %v1487, %v1489
    %v1491 = vrot.slane %v1477, %v1490
    %v1492 = vcombine.low %v389, %v399
    %v1493 = vcombine.high %v389, %v399
    %v1495 = vunpack.c.l.s4 1983009808
    %v1496 = vunpack.c.0.s8 %v1495
    %v1497 = vlaneseq
    %v1498 = vshrl.u32 %v1497, 7
    %v1499 = vsub.s32 %v1496, %v1498
    %v1500 = vrot.slane %v1492, %v1499
    %v1502 = vunpack.c.l.s4 1983009808
    %v1503 = vunpack.c.0.s8 %v1502
    %v1504 = vlaneseq
    %v1505 = vshrl.u32 %v1504, 7
    %v1506 = vsub.s32 %v1503, %v1505
    %v1507 = vrot.slane %v1493, %v1506
    %v1508 = vcombine.low %v411, %v419
    %v1509 = vcombine.high %v411, %v419
    %v1511 = vunpack.c.l.s4 1983009808
    %v1512 = vunpack.c.0.s8 %v1511
    %v1513 = vlaneseq
    %v1514 = vshrl.u32 %v1513, 7
    %v1515 = vsub.s32 %v1512, %v1514
    %v1516 = vrot.slane %v1508, %v1515
    %v1518 = vunpack.c.l.s4 1983009808
    %v1519 = vunpack.c.0.s8 %v1518
    %v1520 = vlaneseq
    %v1521 = vshrl.u32 %v1520, 7
    %v1522 = vsub.s32 %v1519, %v1521
    %v1523 = vrot.slane %v1509, %v1522
    %v1524 = vcombine.low %v415, %v423
    %v1525 = vcombine.high %v415, %v423
    %v1527 = vunpack.c.l.s4 1983009808
    %v1528 = vunpack.c.0.s8 %v1527
    %v1529 = vlaneseq
    %v1530 = vshrl.u32 %v1529, 7
    %v1531 = vsub.s32 %v1528, %v1530
    %v1532 = vrot.slane %v1524, %v1531
    %v1534 = vunpack.c.l.s4 1983009808
    %v1535 = vunpack.c.0.s8 %v1534
    %v1536 = vlaneseq
    %v1537 = vshrl.u32 %v1536, 7
    %v1538 = vsub.s32 %v1535, %v1537
    %v1539 = vrot.slane %v1525, %v1538
    %v1540 = vcombine.low %v1484, %v1500
    %v1541 = vcombine.high %v1484, %v1500
    %v1543 = vunpack.c.l.s4 1934713408
    %v1544 = vunpack.c.0.s8 %v1543
    %v1545 = vlaneseq
    %v1546 = vshrl.u32 %v1545, 7
    %v1547 = vsub.s32 %v1544, %v1546
    %v1548 = vrot.slane %v1540, %v1547
    %v1550 = vunpack.c.l.s4 1934713408
    %v1551 = vunpack.c.0.s8 %v1550
    %v1552 = vlaneseq
    %v1553 = vshrl.u32 %v1552, 7
    %v1554 = vsub.s32 %v1551, %v1553
    %v1555 = vrot.slane %v1541, %v1554
    %v1556 = vcombine.low %v1491, %v1507
    %v1557 = vcombine.high %v1491, %v1507
    %v1559 = vunpack.c.l.s4 1934713408
    %v1560 = vunpack.c.0.s8 %v1559
    %v1561 = vlaneseq
    %v1562 = vshrl.u32 %v1561, 7
    %v1563 = vsub.s32 %v1560, %v1562
    %v1564 = vrot.slane %v1556, %v1563
    %v1566 = vunpack.c.l.s4 1934713408
    %v1567 = vunpack.c.0.s8 %v1566
    %v1568 = vlaneseq
    %v1569 = vshrl.u32 %v1568, 7
    %v1570 = vsub.s32 %v1567, %v1569
    %v1571 = vrot.slane %v1557, %v1570
    %v1572 = vcombine.low %v1516, %v1532
    %v1573 = vcombine.high %v1516, %v1532
    %v1575 = vunpack.c.l.s4 1934713408
    %v1576 = vunpack.c.0.s8 %v1575
    %v1577 = vlaneseq
    %v1578 = vshrl.u32 %v1577, 7
    %v1579 = vsub.s32 %v1576, %v1578
    %v1580 = vrot.slane %v1572, %v1579
    %v1582 = vunpack.c.l.s4 1934713408
    %v1583 = vunpack.c.0.s8 %v1582
    %v1584 = vlaneseq
    %v1585 = vshrl.u32 %v1584, 7
    %v1586 = vsub.s32 %v1583, %v1585
    %v1587 = vrot.slane %v1573, %v1586
    %v1588 = vcombine.low %v1523, %v1539
    %v1589 = vcombine.high %v1523, %v1539
    %v1591 = vunpack.c.l.s4 1934713408
    %v1592 = vunpack.c.0.s8 %v1591
    %v1593 = vlaneseq
    %v1594 = vshrl.u32 %v1593, 7
    %v1595 = vsub.s32 %v1592, %v1594
    %v1596 = vrot.slane %v1588, %v1595
    %v1598 = vunpack.c.l.s4 1934713408
    %v1599 = vunpack.c.0.s8 %v1598
    %v1600 = vlaneseq
    %v1601 = vshrl.u32 %v1600, 7
    %v1602 = vsub.s32 %v1599, %v1601
    %v1603 = vrot.slane %v1589, %v1602
    %v1604 = vcombine.low %v1548, %v1580
    %v1605 = vcombine.high %v1548, %v1580
    %v1606 = vcombine.low %v1555, %v1587
    %v1607 = vcombine.high %v1555, %v1587
    %v1608 = vcombine.low %v1564, %v1596
    %v1609 = vcombine.high %v1564, %v1596
    %v1610 = vcombine.low %v1571, %v1603
    %v1611 = vcombine.high %v1571, %v1603
    %v1612 = vcombine.low %v435, %v443
    %v1613 = vcombine.high %v435, %v443
    %v1615 = vunpack.c.l.s4 1983009808
    %v1616 = vunpack.c.0.s8 %v1615
    %v1617 = vlaneseq
    %v1618 = vshrl.u32 %v1617, 7
    %v1619 = vsub.s32 %v1616, %v1618
    %v1620 = vrot.slane %v1612, %v1619
    %v1622 = vunpack.c.l.s4 1983009808
    %v1623 = vunpack.c.0.s8 %v1622
    %v1624 = vlaneseq
    %v1625 = vshrl.u32 %v1624, 7
    %v1626 = vsub.s32 %v1623, %v1625
    %v1627 = vrot.slane %v1613, %v1626
    %v1628 = vcombine.low %v439, %v447
    %v1629 = vcombine.high %v439, %v447
    %v1631 = vunpack.c.l.s4 1983009808
    %v1632 = vunpack.c.0.s8 %v1631
    %v1633 = vlaneseq
    %v1634 = vshrl.u32 %v1633, 7
    %v1635 = vsub.s32 %v1632, %v1634
    %v1636 = vrot.slane %v1628, %v1635
    %v1638 = vunpack.c.l.s4 1983009808
    %v1639 = vunpack.c.0.s8 %v1638
    %v1640 = vlaneseq
    %v1641 = vshrl.u32 %v1640, 7
    %v1642 = vsub.s32 %v1639, %v1641
    %v1643 = vrot.slane %v1629, %v1642
    %v1644 = vcombine.low %v1620, %v1636
    %v1645 = vcombine.high %v1620, %v1636
    %v1647 = vunpack.c.l.s4 1934713408
    %v1648 = vunpack.c.0.s8 %v1647
    %v1649 = vlaneseq
    %v1650 = vshrl.u32 %v1649, 7
    %v1651 = vsub.s32 %v1648, %v1650
    %v1652 = vrot.slane %v1644, %v1651
    %v1654 = vunpack.c.l.s4 1934713408
    %v1655 = vunpack.c.0.s8 %v1654
    %v1656 = vlaneseq
    %v1657 = vshrl.u32 %v1656, 7
    %v1658 = vsub.s32 %v1655, %v1657
    %v1659 = vrot.slane %v1645, %v1658
    %v1660 = vcombine.low %v1627, %v1643
    %v1661 = vcombine.high %v1627, %v1643
    %v1663 = vunpack.c.l.s4 1934713408
    %v1664 = vunpack.c.0.s8 %v1663
    %v1665 = vlaneseq
    %v1666 = vshrl.u32 %v1665, 7
    %v1667 = vsub.s32 %v1664, %v1666
    %v1668 = vrot.slane %v1660, %v1667
    %v1670 = vunpack.c.l.s4 1934713408
    %v1671 = vunpack.c.0.s8 %v1670
    %v1672 = vlaneseq
    %v1673 = vshrl.u32 %v1672, 7
    %v1674 = vsub.s32 %v1671, %v1673
    %v1675 = vrot.slane %v1661, %v1674
    %v1676 = vcombine.high %v1652, 0.0
    %v1677 = vcombine.high %v1659, 0.0
    %v1678 = vcombine.high %v1668, 0.0
    %v1679 = vcombine.high %v1675, 0.0
    %1685 = vrot.lane.b32.xlu0 %v585, 16
    %v1686 = vpop.permute.xlu0 %1685
    %1687 = vrot.lane.b32.xlu0 %v721, 16
    %v1688 = vpop.permute.xlu0 %1687
    %1689 = vrot.lane.b32.xlu0 %v857, 16
    %v1690 = vpop.permute.xlu0 %1689
    %1691 = vrot.lane.b32.xlu0 %v993, 16
    %v1692 = vpop.permute.xlu0 %1691
    %1693 = vrot.lane.b32.xlu0 %v1064, 16
    %v1694 = vpop.permute.xlu0 %1693
    %1705 = vrot.lane.b32.xlu0 %v586, 32
    %v1706 = vpop.permute.xlu0 %1705
    %1707 = vrot.lane.b32.xlu0 %v722, 32
    %v1708 = vpop.permute.xlu0 %1707
    %1709 = vrot.lane.b32.xlu0 %v858, 32
    %v1710 = vpop.permute.xlu0 %1709
    %1711 = vrot.lane.b32.xlu0 %v994, 32
    %v1712 = vpop.permute.xlu0 %1711
    %1713 = vrot.lane.b32.xlu0 %v1047, 32
    %v1714 = vpop.permute.xlu0 %1713
    %1725 = vrot.lane.b32.xlu0 %v587, 48
    %v1726 = vpop.permute.xlu0 %1725
    %1727 = vrot.lane.b32.xlu0 %v723, 48
    %v1728 = vpop.permute.xlu0 %1727
    %1729 = vrot.lane.b32.xlu0 %v859, 48
    %v1730 = vpop.permute.xlu0 %1729
    %1731 = vrot.lane.b32.xlu0 %v995, 48
    %v1732 = vpop.permute.xlu0 %1731
    %1733 = vrot.lane.b32.xlu0 %v1065, 48
    %v1734 = vpop.permute.xlu0 %1733
    %1745 = vrot.lane.b32.xlu0 %v588, 64
    %v1746 = vpop.permute.xlu0 %1745
    %1747 = vrot.lane.b32.xlu0 %v724, 64
    %v1748 = vpop.permute.xlu0 %1747
    %1749 = vrot.lane.b32.xlu0 %v860, 64
    %v1750 = vpop.permute.xlu0 %1749
    %1751 = vrot.lane.b32.xlu0 %v996, 64
    %v1752 = vpop.permute.xlu0 %1751
    %1753 = vrot.lane.b32.xlu0 %v1056, 64
    %v1754 = vpop.permute.xlu0 %1753
    %1765 = vrot.lane.b32.xlu0 %v589, 80
    %v1766 = vpop.permute.xlu0 %1765
    %1767 = vrot.lane.b32.xlu0 %v725, 80
    %v1768 = vpop.permute.xlu0 %1767
    %1769 = vrot.lane.b32.xlu0 %v861, 80
    %v1770 = vpop.permute.xlu0 %1769
    %1771 = vrot.lane.b32.xlu0 %v997, 80
    %v1772 = vpop.permute.xlu0 %1771
    %1773 = vrot.lane.b32.xlu0 %v1066, 80
    %v1774 = vpop.permute.xlu0 %1773
    %1785 = vrot.lane.b32.xlu0 %v590, 96
    %v1786 = vpop.permute.xlu0 %1785
    %1787 = vrot.lane.b32.xlu0 %v726, 96
    %v1788 = vpop.permute.xlu0 %1787
    %1789 = vrot.lane.b32.xlu0 %v862, 96
    %v1790 = vpop.permute.xlu0 %1789
    %1791 = vrot.lane.b32.xlu0 %v998, 96
    %v1792 = vpop.permute.xlu0 %1791
    %1793 = vrot.lane.b32.xlu0 %v1063, 96
    %v1794 = vpop.permute.xlu0 %1793
    %1805 = vrot.lane.b32.xlu0 %v591, 112
    %v1806 = vpop.permute.xlu0 %1805
    %1807 = vrot.lane.b32.xlu0 %v727, 112
    %v1808 = vpop.permute.xlu0 %1807
    %1809 = vrot.lane.b32.xlu0 %v863, 112
    %v1810 = vpop.permute.xlu0 %1809
    %1811 = vrot.lane.b32.xlu0 %v999, 112
    %v1812 = vpop.permute.xlu0 %1811
    %1813 = vrot.lane.b32.xlu0 %v1067, 112
    %v1814 = vpop.permute.xlu0 %1813
    %1825 = vrot.lane.b32.xlu0 %v1197, 16
    %v1826 = vpop.permute.xlu0 %1825
    %1827 = vrot.lane.b32.xlu0 %v1333, 16
    %v1828 = vpop.permute.xlu0 %1827
    %1829 = vrot.lane.b32.xlu0 %v1469, 16
    %v1830 = vpop.permute.xlu0 %1829
    %1831 = vrot.lane.b32.xlu0 %v1605, 16
    %v1832 = vpop.permute.xlu0 %1831
    %1833 = vrot.lane.b32.xlu0 %v1676, 16
    %v1834 = vpop.permute.xlu0 %1833
    %1845 = vrot.lane.b32.xlu0 %v1198, 32
    %v1846 = vpop.permute.xlu0 %1845
    %1847 = vrot.lane.b32.xlu0 %v1334, 32
    %v1848 = vpop.permute.xlu0 %1847
    %1849 = vrot.lane.b32.xlu0 %v1470, 32
    %v1850 = vpop.permute.xlu0 %1849
    %1851 = vrot.lane.b32.xlu0 %v1606, 32
    %v1852 = vpop.permute.xlu0 %1851
    %1853 = vrot.lane.b32.xlu0 %v1659, 32
    %v1854 = vpop.permute.xlu0 %1853
    %1865 = vrot.lane.b32.xlu0 %v1199, 48
    %v1866 = vpop.permute.xlu0 %1865
    %1867 = vrot.lane.b32.xlu0 %v1335, 48
    %v1868 = vpop.permute.xlu0 %1867
    %1869 = vrot.lane.b32.xlu0 %v1471, 48
    %v1870 = vpop.permute.xlu0 %1869
    %1871 = vrot.lane.b32.xlu0 %v1607, 48
    %v1872 = vpop.permute.xlu0 %1871
    %1873 = vrot.lane.b32.xlu0 %v1677, 48
    %v1874 = vpop.permute.xlu0 %1873
    %1885 = vrot.lane.b32.xlu0 %v1200, 64
    %v1886 = vpop.permute.xlu0 %1885
    %1887 = vrot.lane.b32.xlu0 %v1336, 64
    %v1888 = vpop.permute.xlu0 %1887
    %1889 = vrot.lane.b32.xlu0 %v1472, 64
    %v1890 = vpop.permute.xlu0 %1889
    %1891 = vrot.lane.b32.xlu0 %v1608, 64
    %v1892 = vpop.permute.xlu0 %1891
    %1893 = vrot.lane.b32.xlu0 %v1668, 64
    %v1894 = vpop.permute.xlu0 %1893
    %1905 = vrot.lane.b32.xlu0 %v1201, 80
    %v1906 = vpop.permute.xlu0 %1905
    %1907 = vrot.lane.b32.xlu0 %v1337, 80
    %v1908 = vpop.permute.xlu0 %1907
    %1909 = vrot.lane.b32.xlu0 %v1473, 80
    %v1910 = vpop.permute.xlu0 %1909
    %1911 = vrot.lane.b32.xlu0 %v1609, 80
    %v1912 = vpop.permute.xlu0 %1911
    %1913 = vrot.lane.b32.xlu0 %v1678, 80
    %v1914 = vpop.permute.xlu0 %1913
    %1925 = vrot.lane.b32.xlu0 %v1202, 96
    %v1926 = vpop.permute.xlu0 %1925
    %1927 = vrot.lane.b32.xlu0 %v1338, 96
    %v1928 = vpop.permute.xlu0 %1927
    %1929 = vrot.lane.b32.xlu0 %v1474, 96
    %v1930 = vpop.permute.xlu0 %1929
    %1931 = vrot.lane.b32.xlu0 %v1610, 96
    %v1932 = vpop.permute.xlu0 %1931
    %1933 = vrot.lane.b32.xlu0 %v1675, 96
    %v1934 = vpop.permute.xlu0 %1933
    %1945 = vrot.lane.b32.xlu0 %v1203, 112
    %v1946 = vpop.permute.xlu0 %1945
    %1947 = vrot.lane.b32.xlu0 %v1339, 112
    %v1948 = vpop.permute.xlu0 %1947
    %1949 = vrot.lane.b32.xlu0 %v1475, 112
    %v1950 = vpop.permute.xlu0 %1949
    %1951 = vrot.lane.b32.xlu0 %v1611, 112
    %v1952 = vpop.permute.xlu0 %1951
    %1953 = vrot.lane.b32.xlu0 %v1679, 112
    %v1954 = vpop.permute.xlu0 %1953
    %vm1960 = vcmask 130048
    %v1961 = vsel %vm1960, %v584, %v1686
    %v1962 = vsel %vm1960, %v720, %v1688
    %v1963 = vsel %vm1960, %v856, %v1690
    %v1964 = vsel %vm1960, %v992, %v1692
    %v1965 = vsel %vm1960, %v1040, %v1694
    %vm1966 = vcmask 261120
    %v1967 = vsel %vm1966, %v1961, %v1706
    %v1968 = vsel %vm1966, %v1962, %v1708
    %v1969 = vsel %vm1966, %v1963, %v1710
    %v1970 = vsel %vm1966, %v1964, %v1712
    %v1971 = vsel %vm1966, %v1965, %v1714
    %vm1972 = vcmask 392192
    %v1973 = vsel %vm1972, %v1967, %v1726
    %v1974 = vsel %vm1972, %v1968, %v1728
    %v1975 = vsel %vm1972, %v1969, %v1730
    %v1976 = vsel %vm1972, %v1970, %v1732
    %v1977 = vsel %vm1972, %v1971, %v1734
    %vm1978 = vcmask 523264
    %v1979 = vsel %vm1978, %v1973, %v1746
    %v1980 = vsel %vm1978, %v1974, %v1748
    %v1981 = vsel %vm1978, %v1975, %v1750
    %v1982 = vsel %vm1978, %v1976, %v1752
    %v1983 = vsel %vm1978, %v1977, %v1754
    %vm1984 = vcmask 654336
    %v1985 = vsel %vm1984, %v1979, %v1766
    %v1986 = vsel %vm1984, %v1980, %v1768
    %v1987 = vsel %vm1984, %v1981, %v1770
    %v1988 = vsel %vm1984, %v1982, %v1772
    %v1989 = vsel %vm1984, %v1983, %v1774
    %vm1990 = vcmask 785408
    %v1991 = vsel %vm1990, %v1985, %v1786
    %v1992 = vsel %vm1990, %v1986, %v1788
    %v1993 = vsel %vm1990, %v1987, %v1790
    %v1994 = vsel %vm1990, %v1988, %v1792
    %v1995 = vsel %vm1990, %v1989, %v1794
    %vm1996 = vcmask 916480
    %v1997 = vsel %vm1996, %v1991, %v1806
    %v1998 = vsel %vm1996, %v1992, %v1808
    %v1999 = vsel %vm1996, %v1993, %v1810
    %v2000 = vsel %vm1996, %v1994, %v1812
    %v2001 = vsel %vm1996, %v1995, %v1814
    %v2002 = vsel %vm1960, %v1196, %v1826
    %v2003 = vsel %vm1960, %v1332, %v1828
    %v2004 = vsel %vm1960, %v1468, %v1830
    %v2005 = vsel %vm1960, %v1604, %v1832
    %v2006 = vsel %vm1960, %v1652, %v1834
    %v2007 = vsel %vm1966, %v2002, %v1846
    %v2008 = vsel %vm1966, %v2003, %v1848
    %v2009 = vsel %vm1966, %v2004, %v1850
    %v2010 = vsel %vm1966, %v2005, %v1852
    %v2011 = vsel %vm1966, %v2006, %v1854
    %v2012 = vsel %vm1972, %v2007, %v1866
    %v2013 = vsel %vm1972, %v2008, %v1868
    %v2014 = vsel %vm1972, %v2009, %v1870
    %v2015 = vsel %vm1972, %v2010, %v1872
    %v2016 = vsel %vm1972, %v2011, %v1874
    %v2017 = vsel %vm1978, %v2012, %v1886
    %v2018 = vsel %vm1978, %v2013, %v1888
    %v2019 = vsel %vm1978, %v2014, %v1890
    %v2020 = vsel %vm1978, %v2015, %v1892
    %v2021 = vsel %vm1978, %v2016, %v1894
    %v2022 = vsel %vm1984, %v2017, %v1906
    %v2023 = vsel %vm1984, %v2018, %v1908
    %v2024 = vsel %vm1984, %v2019, %v1910
    %v2025 = vsel %vm1984, %v2020, %v1912
    %v2026 = vsel %vm1984, %v2021, %v1914
    %v2027 = vsel %vm1990, %v2022, %v1926
    %v2028 = vsel %vm1990, %v2023, %v1928
    %v2029 = vsel %vm1990, %v2024, %v1930
    %v2030 = vsel %vm1990, %v2025, %v1932
    %v2031 = vsel %vm1990, %v2026, %v1934
    %v2032 = vsel %vm1996, %v2027, %v1946
    %v2033 = vsel %vm1996, %v2028, %v1948
    %v2034 = vsel %vm1996, %v2029, %v1950
    %v2035 = vsel %vm1996, %v2030, %v1952
    %v2036 = vsel %vm1996, %v2031, %v1954
    %vm2037 = vcmask 293888
    %v2039 = vsel %vm2037, %v38, 0
    %vm2041 = vcmask 1043456
    %v2043 = vsel %vm2041, %v2001, 0
    %v2046 = vsel %vm2041, %v2036, 0
    %2048 = vmatprep.subr.mxu0 %v2032
    %2049 = vmatpush1.msra.mxu0 %v1997
    %2050 = vmatprep.subr.mxu0 %v2033
    %2051 = vmatpush1.msra.mxu0 %v1998
    %2052 = vmatprep.subr.mxu0 %v2034
    %2053 = vmatpush1.msra.mxu0 %v1999
    %2054 = vmatprep.subr.mxu0 %v2035
    %2055 = vmatpush1.msra.mxu0 %v2000
    %2056 = vmatprep.subr.mxu0 %v2046
    %2057 = vmatpush1.msra.mxu0 %v2043
    %2058 = vmatprep.subr.mxu0 0.0
    %2059 = vmatpush1.msra.mxu0 0.0
    %2060 = vmatprep.subr.mxu0 0.0
    %2061 = vmatpush1.msra.mxu0 0.0
    %2062 = vmatprep.subr.mxu0 0.0
    %2063 = vmatpush1.msra.mxu0 0.0
    %2064 = vmatprep.subr.mxu0 0.0
    %2065 = vmatpush1.msra.mxu0 0.0
    %2066 = vmatprep.subr.mxu0 0.0
    %2067 = vmatpush1.msra.mxu0 0.0
    %2068 = vmatprep.subr.mxu0 0.0
    %2069 = vmatpush1.msra.mxu0 0.0
    %2070 = vmatprep.subr.mxu0 0.0
    %2071 = vmatpush1.msra.mxu0 0.0
    %2072 = vmatprep.subr.mxu0 0.0
    %2073 = vmatpush1.msra.mxu0 0.0
    %2074 = vmatprep.subr.mxu0 0.0
    %2075 = vmatpush1.msra.mxu0 0.0
    %2076 = vmatprep.subr.mxu0 0.0
    %2077 = vmatpush1.msra.mxu0 0.0
    %2078 = vmatprep.subr.mxu0 0.0
    %2079 = vmatpush1.msra.mxu0 0.0
    %2080 = vmatprep.subr.mxu0 0.0
    %2081 = vmatpush1.msra.mxu0 0.0
    %2082 = vmatprep.subr.mxu0 0.0
    %2083 = vmatpush1.msra.mxu0 0.0
    %2084 = vmatprep.subr.mxu0 0.0
    %2085 = vmatpush1.msra.mxu0 0.0
    %2086 = vmatprep.subr.mxu0 0.0
    %2087 = vmatpush1.msra.mxu0 0.0
    %2088 = vmatprep.subr.mxu0 0.0
    %2089 = vmatpush1.msra.mxu0 0.0
    %2090 = vmatprep.subr.mxu0 0.0
    %2091 = vmatpush1.msra.mxu0 0.0
    %2092 = vmatprep.subr.mxu0 0.0
    %2093 = vmatpush1.msra.mxu0 0.0
    %2094 = vmatprep.subr.mxu0 0.0
    %2095 = vmatpush1.msra.mxu0 0.0
    %2096 = vmatprep.subr.mxu0 0.0
    %2097 = vmatpush1.msra.mxu0 0.0
    %2098 = vmatprep.subr.mxu0 0.0
    %2099 = vmatpush1.msra.mxu0 0.0
    %2100 = vmatprep.subr.mxu0 0.0
    %2101 = vmatpush1.msra.mxu0 0.0
    %2102 = vmatprep.subr.mxu0 0.0
    %2103 = vmatpush1.msra.mxu0 0.0
    %2104 = vmatprep.subr.mxu0 0.0
    %2105 = vmatpush1.msra.mxu0 0.0
    %2106 = vmatprep.subr.mxu0 0.0
    %2107 = vmatpush1.msra.mxu0 0.0
    %2108 = vmatprep.subr.mxu0 0.0
    %2109 = vmatpush1.msra.mxu0 0.0
    %2110 = vmatprep.subr.mxu0 0.0
    %2111 = vmatpush1.msra.mxu0 0.0
    %2112 = vmatprep.mubr.f32.mxu0 0.0
    %2113 = vmatmul.mubr.f32.gmra.mrb[0].mxu0 %v2039
    %v2114 = vpop.f32.mrb[0].mxu0
    %v2115 = vadd.f32 0.0, %v2114
    %v2116 = vpop.f32.mrb[0].mxu0
    %v2117 = vadd.f32 0.0, %v2116
    %2118 = vdwg.mxu0
    %vm2119 = vcmp.ge.f32.partialorder %v2115, 0.0
    %vm2120 = vcmp.ge.f32.partialorder %v2117, 0.0
    %v2121 = vmul.f32 %v2115, 0.2
    %v2122 = vmul.f32 %v2117, 0.2
    %v2123 = vsel %vm2119, %v2115, %v2121
    %v2124 = vsel %vm2120, %v2117, %v2122
    %2125 = vst [vmem:[#allocation7] sm:$0xff] %v2123
    %2126 = vst [vmem:[#allocation7 + $0x8] sm:$0xff] %v2124
    %s2127 = scalar_lea.vmem [#allocation2], 64
    %v2128 = vld [vmem:[%s2127] sm:$0xff]
    %v2129 = vld [vmem:[%s2127 + $0x8] sm:$0xff]
    %v2130 = vld [vmem:[%s2127 + $0x10] sm:$0xff]
    %v2131 = vld [vmem:[%s2127 + $0x18] sm:$0xff]
    %v2132 = vld [vmem:[%s2127 + $0x20] sm:$0xff]
    %v2133 = vld [vmem:[%s2127 + $0x28] sm:$0xff]
    %v2134 = vld [vmem:[%s2127 + $0x30] sm:$0xff]
    %v2135 = vld [vmem:[%s2127 + $0x38] sm:$0xff]
    %v2140 = vrot.slane %v2128, 1
    %v2141 = vrot.slane %v2130, 1
    %v2142 = vrot.slane %v2132, 1
    %v2143 = vrot.slane %v2134, 1
    %v2152 = vrot.slane %v2128, 7
    %v2153 = vrot.slane %v2129, 7
    %v2154 = vsel %vm63, %v2152, %v2153
    %v2155 = vrot.slane %v2130, 7
    %v2156 = vrot.slane %v2131, 7
    %v2157 = vsel %vm63, %v2155, %v2156
    %v2158 = vrot.slane %v2132, 7
    %v2159 = vrot.slane %v2133, 7
    %v2160 = vsel %vm63, %v2158, %v2159
    %v2161 = vrot.slane %v2134, 7
    %v2162 = vrot.slane %v2135, 7
    %v2163 = vsel %vm63, %v2161, %v2162
    %v2172 = vrot.slane %v2129, 5
    %v2173 = vrot.slane %v2131, 5
    %v2174 = vrot.slane %v2133, 5
    %v2175 = vrot.slane %v2135, 5
    %v2180 = vsel %vm63, %v2140, %v2152
    %v2181 = vsel %vm63, %v2141, %v2155
    %v2182 = vsel %vm63, %v2142, %v2158
    %v2183 = vsel %vm63, %v2143, %v2161
    %v2184 = vsel %vm63, %v2153, %v2172
    %v2185 = vsel %vm63, %v2156, %v2173
    %v2186 = vsel %vm63, %v2159, %v2174
    %v2187 = vsel %vm63, %v2162, %v2175
    %2196 = vrot.lane.b32.xlu0 %v2180, 127
    %v2197 = vpop.permute.xlu0 %2196
    %2198 = vrot.lane.b32.xlu0 %v2154, 127
    %v2199 = vpop.permute.xlu0 %2198
    %2200 = vrot.lane.b32.xlu0 %v2184, 127
    %v2201 = vpop.permute.xlu0 %2200
    %2202 = vrot.lane.b32.xlu0 %v2181, 127
    %v2203 = vpop.permute.xlu0 %2202
    %2204 = vrot.lane.b32.xlu0 %v2157, 127
    %v2205 = vpop.permute.xlu0 %2204
    %2206 = vrot.lane.b32.xlu0 %v2185, 127
    %v2207 = vpop.permute.xlu0 %2206
    %2208 = vrot.lane.b32.xlu0 %v2182, 127
    %v2209 = vpop.permute.xlu0 %2208
    %2210 = vrot.lane.b32.xlu0 %v2160, 127
    %v2211 = vpop.permute.xlu0 %2210
    %2212 = vrot.lane.b32.xlu0 %v2186, 127
    %v2213 = vpop.permute.xlu0 %2212
    %2214 = vrot.lane.b32.xlu0 %v2183, 127
    %v2215 = vpop.permute.xlu0 %2214
    %2216 = vrot.lane.b32.xlu0 %v2163, 127
    %v2217 = vpop.permute.xlu0 %2216
    %2218 = vrot.lane.b32.xlu0 %v2187, 127
    %v2219 = vpop.permute.xlu0 %2218
    %2232 = vrot.lane.b32.xlu0 %v2180, 1
    %v2233 = vpop.permute.xlu0 %2232
    %2234 = vrot.lane.b32.xlu0 %v2154, 1
    %v2235 = vpop.permute.xlu0 %2234
    %2236 = vrot.lane.b32.xlu0 %v2184, 1
    %v2237 = vpop.permute.xlu0 %2236
    %2238 = vrot.lane.b32.xlu0 %v2181, 1
    %v2239 = vpop.permute.xlu0 %2238
    %2240 = vrot.lane.b32.xlu0 %v2157, 1
    %v2241 = vpop.permute.xlu0 %2240
    %2242 = vrot.lane.b32.xlu0 %v2185, 1
    %v2243 = vpop.permute.xlu0 %2242
    %2244 = vrot.lane.b32.xlu0 %v2182, 1
    %v2245 = vpop.permute.xlu0 %2244
    %2246 = vrot.lane.b32.xlu0 %v2160, 1
    %v2247 = vpop.permute.xlu0 %2246
    %2248 = vrot.lane.b32.xlu0 %v2186, 1
    %v2249 = vpop.permute.xlu0 %2248
    %2250 = vrot.lane.b32.xlu0 %v2183, 1
    %v2251 = vpop.permute.xlu0 %2250
    %2252 = vrot.lane.b32.xlu0 %v2163, 1
    %v2253 = vpop.permute.xlu0 %2252
    %2254 = vrot.lane.b32.xlu0 %v2187, 1
    %v2255 = vpop.permute.xlu0 %2254
    %2268 = vrot.lane.b32.xlu0 %v2180, 3
    %v2269 = vpop.permute.xlu0 %2268
    %2270 = vrot.lane.b32.xlu0 %v2154, 3
    %v2271 = vpop.permute.xlu0 %2270
    %2272 = vrot.lane.b32.xlu0 %v2184, 3
    %v2273 = vpop.permute.xlu0 %2272
    %2274 = vrot.lane.b32.xlu0 %v2181, 3
    %v2275 = vpop.permute.xlu0 %2274
    %2276 = vrot.lane.b32.xlu0 %v2157, 3
    %v2277 = vpop.permute.xlu0 %2276
    %2278 = vrot.lane.b32.xlu0 %v2185, 3
    %v2279 = vpop.permute.xlu0 %2278
    %2280 = vrot.lane.b32.xlu0 %v2182, 3
    %v2281 = vpop.permute.xlu0 %2280
    %2282 = vrot.lane.b32.xlu0 %v2160, 3
    %v2283 = vpop.permute.xlu0 %2282
    %2284 = vrot.lane.b32.xlu0 %v2186, 3
    %v2285 = vpop.permute.xlu0 %2284
    %2286 = vrot.lane.b32.xlu0 %v2183, 3
    %v2287 = vpop.permute.xlu0 %2286
    %2288 = vrot.lane.b32.xlu0 %v2163, 3
    %v2289 = vpop.permute.xlu0 %2288
    %2290 = vrot.lane.b32.xlu0 %v2187, 3
    %v2291 = vpop.permute.xlu0 %2290
    %v2304 = vsel %vm216, %v2197, %v2233
    %v2305 = vsel %vm216, %v2199, %v2235
    %v2306 = vsel %vm216, %v2201, %v2237
    %v2307 = vsel %vm216, %v2203, %v2239
    %v2308 = vsel %vm216, %v2205, %v2241
    %v2309 = vsel %vm216, %v2207, %v2243
    %v2310 = vsel %vm216, %v2209, %v2245
    %v2311 = vsel %vm216, %v2211, %v2247
    %v2312 = vsel %vm216, %v2213, %v2249
    %v2313 = vsel %vm216, %v2215, %v2251
    %v2314 = vsel %vm216, %v2217, %v2253
    %v2315 = vsel %vm216, %v2219, %v2255
    %v2316 = vsel %vm229, %v2304, %v2269
    %v2317 = vsel %vm229, %v2305, %v2271
    %v2318 = vsel %vm229, %v2306, %v2273
    %v2319 = vsel %vm229, %v2307, %v2275
    %v2320 = vsel %vm229, %v2308, %v2277
    %v2321 = vsel %vm229, %v2309, %v2279
    %v2322 = vsel %vm229, %v2310, %v2281
    %v2323 = vsel %vm229, %v2311, %v2283
    %v2324 = vsel %vm229, %v2312, %v2285
    %v2325 = vsel %vm229, %v2313, %v2287
    %v2326 = vsel %vm229, %v2314, %v2289
    %v2327 = vsel %vm229, %v2315, %v2291
    %2336 = vrot.lane.b32.xlu0 %v2316, 127
    %v2337 = vpop.permute.xlu0 %2336
    %2338 = vrot.lane.b32.xlu0 %v2317, 127
    %v2339 = vpop.permute.xlu0 %2338
    %2340 = vrot.lane.b32.xlu0 %v2319, 127
    %v2341 = vpop.permute.xlu0 %2340
    %2342 = vrot.lane.b32.xlu0 %v2320, 127
    %v2343 = vpop.permute.xlu0 %2342
    %2344 = vrot.lane.b32.xlu0 %v2322, 127
    %v2345 = vpop.permute.xlu0 %2344
    %2346 = vrot.lane.b32.xlu0 %v2323, 127
    %v2347 = vpop.permute.xlu0 %2346
    %2348 = vrot.lane.b32.xlu0 %v2325, 127
    %v2349 = vpop.permute.xlu0 %2348
    %2350 = vrot.lane.b32.xlu0 %v2326, 127
    %v2351 = vpop.permute.xlu0 %2350
    %2360 = vrot.lane.b32.xlu0 %v2316, 126
    %v2361 = vpop.permute.xlu0 %2360
    %2362 = vrot.lane.b32.xlu0 %v2317, 126
    %v2363 = vpop.permute.xlu0 %2362
    %2364 = vrot.lane.b32.xlu0 %v2319, 126
    %v2365 = vpop.permute.xlu0 %2364
    %2366 = vrot.lane.b32.xlu0 %v2320, 126
    %v2367 = vpop.permute.xlu0 %2366
    %2368 = vrot.lane.b32.xlu0 %v2322, 126
    %v2369 = vpop.permute.xlu0 %2368
    %2370 = vrot.lane.b32.xlu0 %v2323, 126
    %v2371 = vpop.permute.xlu0 %2370
    %2372 = vrot.lane.b32.xlu0 %v2325, 126
    %v2373 = vpop.permute.xlu0 %2372
    %2374 = vrot.lane.b32.xlu0 %v2326, 126
    %v2375 = vpop.permute.xlu0 %2374
    %v2388 = vrot.slane %v2316, 1
    %v2389 = vrot.slane %v2317, 1
    %v2390 = vsel %vm302, %v2388, %v2389
    %v2391 = vrot.slane %v2318, 1
    %v2392 = vsel %vm302, %v2389, %v2391
    %v2393 = vrot.slane %v2319, 1
    %v2394 = vrot.slane %v2320, 1
    %v2395 = vsel %vm302, %v2393, %v2394
    %v2396 = vrot.slane %v2321, 1
    %v2397 = vsel %vm302, %v2394, %v2396
    %v2398 = vrot.slane %v2322, 1
    %v2399 = vrot.slane %v2323, 1
    %v2400 = vsel %vm302, %v2398, %v2399
    %v2401 = vrot.slane %v2324, 1
    %v2402 = vsel %vm302, %v2399, %v2401
    %v2403 = vrot.slane %v2325, 1
    %v2404 = vrot.slane %v2326, 1
    %v2405 = vsel %vm302, %v2403, %v2404
    %v2406 = vrot.slane %v2327, 1
    %v2407 = vsel %vm302, %v2404, %v2406
    %2416 = vrot.lane.b32.xlu0 %v2390, 127
    %v2417 = vpop.permute.xlu0 %2416
    %2418 = vrot.lane.b32.xlu0 %v2392, 127
    %v2419 = vpop.permute.xlu0 %2418
    %2420 = vrot.lane.b32.xlu0 %v2395, 127
    %v2421 = vpop.permute.xlu0 %2420
    %2422 = vrot.lane.b32.xlu0 %v2397, 127
    %v2423 = vpop.permute.xlu0 %2422
    %2424 = vrot.lane.b32.xlu0 %v2400, 127
    %v2425 = vpop.permute.xlu0 %2424
    %2426 = vrot.lane.b32.xlu0 %v2402, 127
    %v2427 = vpop.permute.xlu0 %2426
    %2428 = vrot.lane.b32.xlu0 %v2405, 127
    %v2429 = vpop.permute.xlu0 %2428
    %2430 = vrot.lane.b32.xlu0 %v2407, 127
    %v2431 = vpop.permute.xlu0 %2430
    %2440 = vrot.lane.b32.xlu0 %v2390, 126
    %v2441 = vpop.permute.xlu0 %2440
    %2442 = vrot.lane.b32.xlu0 %v2392, 126
    %v2443 = vpop.permute.xlu0 %2442
    %2444 = vrot.lane.b32.xlu0 %v2395, 126
    %v2445 = vpop.permute.xlu0 %2444
    %2446 = vrot.lane.b32.xlu0 %v2397, 126
    %v2447 = vpop.permute.xlu0 %2446
    %2448 = vrot.lane.b32.xlu0 %v2400, 126
    %v2449 = vpop.permute.xlu0 %2448
    %2450 = vrot.lane.b32.xlu0 %v2402, 126
    %v2451 = vpop.permute.xlu0 %2450
    %2452 = vrot.lane.b32.xlu0 %v2405, 126
    %v2453 = vpop.permute.xlu0 %2452
    %2454 = vrot.lane.b32.xlu0 %v2407, 126
    %v2455 = vpop.permute.xlu0 %2454
    %v2464 = vrot.slane %v2316, 2
    %v2465 = vrot.slane %v2317, 2
    %v2466 = vsel %vm379, %v2464, %v2465
    %v2467 = vrot.slane %v2318, 2
    %v2468 = vsel %vm379, %v2465, %v2467
    %v2469 = vrot.slane %v2319, 2
    %v2470 = vrot.slane %v2320, 2
    %v2471 = vsel %vm379, %v2469, %v2470
    %v2472 = vrot.slane %v2321, 2
    %v2473 = vsel %vm379, %v2470, %v2472
    %v2474 = vrot.slane %v2322, 2
    %v2475 = vrot.slane %v2323, 2
    %v2476 = vsel %vm379, %v2474, %v2475
    %v2477 = vrot.slane %v2324, 2
    %v2478 = vsel %vm379, %v2475, %v2477
    %v2479 = vrot.slane %v2325, 2
    %v2480 = vrot.slane %v2326, 2
    %v2481 = vsel %vm379, %v2479, %v2480
    %v2482 = vrot.slane %v2327, 2
    %v2483 = vsel %vm379, %v2480, %v2482
    %2492 = vrot.lane.b32.xlu0 %v2466, 127
    %v2493 = vpop.permute.xlu0 %2492
    %2494 = vrot.lane.b32.xlu0 %v2468, 127
    %v2495 = vpop.permute.xlu0 %2494
    %2496 = vrot.lane.b32.xlu0 %v2471, 127
    %v2497 = vpop.permute.xlu0 %2496
    %2498 = vrot.lane.b32.xlu0 %v2473, 127
    %v2499 = vpop.permute.xlu0 %2498
    %2500 = vrot.lane.b32.xlu0 %v2476, 127
    %v2501 = vpop.permute.xlu0 %2500
    %2502 = vrot.lane.b32.xlu0 %v2478, 127
    %v2503 = vpop.permute.xlu0 %2502
    %2504 = vrot.lane.b32.xlu0 %v2481, 127
    %v2505 = vpop.permute.xlu0 %2504
    %2506 = vrot.lane.b32.xlu0 %v2483, 127
    %v2507 = vpop.permute.xlu0 %2506
    %2516 = vrot.lane.b32.xlu0 %v2466, 126
    %v2517 = vpop.permute.xlu0 %2516
    %2518 = vrot.lane.b32.xlu0 %v2468, 126
    %v2519 = vpop.permute.xlu0 %2518
    %2520 = vrot.lane.b32.xlu0 %v2471, 126
    %v2521 = vpop.permute.xlu0 %2520
    %2522 = vrot.lane.b32.xlu0 %v2473, 126
    %v2523 = vpop.permute.xlu0 %2522
    %2524 = vrot.lane.b32.xlu0 %v2476, 126
    %v2525 = vpop.permute.xlu0 %2524
    %2526 = vrot.lane.b32.xlu0 %v2478, 126
    %v2527 = vpop.permute.xlu0 %2526
    %2528 = vrot.lane.b32.xlu0 %v2481, 126
    %v2529 = vpop.permute.xlu0 %2528
    %2530 = vrot.lane.b32.xlu0 %v2483, 126
    %v2531 = vpop.permute.xlu0 %2530
    %v2540 = vcombine.low %v2316, %v2322
    %v2541 = vcombine.high %v2316, %v2322
    %v2543 = vunpack.c.l.s4 1983009808
    %v2544 = vunpack.c.0.s8 %v2543
    %v2545 = vlaneseq
    %v2546 = vshrl.u32 %v2545, 7
    %v2547 = vsub.s32 %v2544, %v2546
    %v2548 = vrot.slane %v2540, %v2547
    %v2550 = vunpack.c.l.s4 1983009808
    %v2551 = vunpack.c.0.s8 %v2550
    %v2552 = vlaneseq
    %v2553 = vshrl.u32 %v2552, 7
    %v2554 = vsub.s32 %v2551, %v2553
    %v2555 = vrot.slane %v2541, %v2554
    %v2556 = vcombine.low %v2319, %v2325
    %v2557 = vcombine.high %v2319, %v2325
    %v2559 = vunpack.c.l.s4 1983009808
    %v2560 = vunpack.c.0.s8 %v2559
    %v2561 = vlaneseq
    %v2562 = vshrl.u32 %v2561, 7
    %v2563 = vsub.s32 %v2560, %v2562
    %v2564 = vrot.slane %v2556, %v2563
    %v2566 = vunpack.c.l.s4 1983009808
    %v2567 = vunpack.c.0.s8 %v2566
    %v2568 = vlaneseq
    %v2569 = vshrl.u32 %v2568, 7
    %v2570 = vsub.s32 %v2567, %v2569
    %v2571 = vrot.slane %v2557, %v2570
    %v2572 = vcombine.low %v2337, %v2345
    %v2573 = vcombine.high %v2337, %v2345
    %v2575 = vunpack.c.l.s4 1983009808
    %v2576 = vunpack.c.0.s8 %v2575
    %v2577 = vlaneseq
    %v2578 = vshrl.u32 %v2577, 7
    %v2579 = vsub.s32 %v2576, %v2578
    %v2580 = vrot.slane %v2572, %v2579
    %v2582 = vunpack.c.l.s4 1983009808
    %v2583 = vunpack.c.0.s8 %v2582
    %v2584 = vlaneseq
    %v2585 = vshrl.u32 %v2584, 7
    %v2586 = vsub.s32 %v2583, %v2585
    %v2587 = vrot.slane %v2573, %v2586
    %v2588 = vcombine.low %v2341, %v2349
    %v2589 = vcombine.high %v2341, %v2349
    %v2591 = vunpack.c.l.s4 1983009808
    %v2592 = vunpack.c.0.s8 %v2591
    %v2593 = vlaneseq
    %v2594 = vshrl.u32 %v2593, 7
    %v2595 = vsub.s32 %v2592, %v2594
    %v2596 = vrot.slane %v2588, %v2595
    %v2598 = vunpack.c.l.s4 1983009808
    %v2599 = vunpack.c.0.s8 %v2598
    %v2600 = vlaneseq
    %v2601 = vshrl.u32 %v2600, 7
    %v2602 = vsub.s32 %v2599, %v2601
    %v2603 = vrot.slane %v2589, %v2602
    %v2604 = vcombine.low %v2548, %v2564
    %v2605 = vcombine.high %v2548, %v2564
    %v2607 = vunpack.c.l.s4 1934713408
    %v2608 = vunpack.c.0.s8 %v2607
    %v2609 = vlaneseq
    %v2610 = vshrl.u32 %v2609, 7
    %v2611 = vsub.s32 %v2608, %v2610
    %v2612 = vrot.slane %v2604, %v2611
    %v2614 = vunpack.c.l.s4 1934713408
    %v2615 = vunpack.c.0.s8 %v2614
    %v2616 = vlaneseq
    %v2617 = vshrl.u32 %v2616, 7
    %v2618 = vsub.s32 %v2615, %v2617
    %v2619 = vrot.slane %v2605, %v2618
    %v2620 = vcombine.low %v2555, %v2571
    %v2621 = vcombine.high %v2555, %v2571
    %v2623 = vunpack.c.l.s4 1934713408
    %v2624 = vunpack.c.0.s8 %v2623
    %v2625 = vlaneseq
    %v2626 = vshrl.u32 %v2625, 7
    %v2627 = vsub.s32 %v2624, %v2626
    %v2628 = vrot.slane %v2620, %v2627
    %v2630 = vunpack.c.l.s4 1934713408
    %v2631 = vunpack.c.0.s8 %v2630
    %v2632 = vlaneseq
    %v2633 = vshrl.u32 %v2632, 7
    %v2634 = vsub.s32 %v2631, %v2633
    %v2635 = vrot.slane %v2621, %v2634
    %v2636 = vcombine.low %v2580, %v2596
    %v2637 = vcombine.high %v2580, %v2596
    %v2639 = vunpack.c.l.s4 1934713408
    %v2640 = vunpack.c.0.s8 %v2639
    %v2641 = vlaneseq
    %v2642 = vshrl.u32 %v2641, 7
    %v2643 = vsub.s32 %v2640, %v2642
    %v2644 = vrot.slane %v2636, %v2643
    %v2646 = vunpack.c.l.s4 1934713408
    %v2647 = vunpack.c.0.s8 %v2646
    %v2648 = vlaneseq
    %v2649 = vshrl.u32 %v2648, 7
    %v2650 = vsub.s32 %v2647, %v2649
    %v2651 = vrot.slane %v2637, %v2650
    %v2652 = vcombine.low %v2587, %v2603
    %v2653 = vcombine.high %v2587, %v2603
    %v2655 = vunpack.c.l.s4 1934713408
    %v2656 = vunpack.c.0.s8 %v2655
    %v2657 = vlaneseq
    %v2658 = vshrl.u32 %v2657, 7
    %v2659 = vsub.s32 %v2656, %v2658
    %v2660 = vrot.slane %v2652, %v2659
    %v2662 = vunpack.c.l.s4 1934713408
    %v2663 = vunpack.c.0.s8 %v2662
    %v2664 = vlaneseq
    %v2665 = vshrl.u32 %v2664, 7
    %v2666 = vsub.s32 %v2663, %v2665
    %v2667 = vrot.slane %v2653, %v2666
    %v2668 = vcombine.low %v2612, %v2644
    %v2669 = vcombine.high %v2612, %v2644
    %v2670 = vcombine.low %v2619, %v2651
    %v2671 = vcombine.high %v2619, %v2651
    %v2672 = vcombine.low %v2628, %v2660
    %v2673 = vcombine.high %v2628, %v2660
    %v2674 = vcombine.low %v2635, %v2667
    %v2675 = vcombine.high %v2635, %v2667
    %v2676 = vcombine.low %v2361, %v2369
    %v2677 = vcombine.high %v2361, %v2369
    %v2679 = vunpack.c.l.s4 1983009808
    %v2680 = vunpack.c.0.s8 %v2679
    %v2681 = vlaneseq
    %v2682 = vshrl.u32 %v2681, 7
    %v2683 = vsub.s32 %v2680, %v2682
    %v2684 = vrot.slane %v2676, %v2683
    %v2686 = vunpack.c.l.s4 1983009808
    %v2687 = vunpack.c.0.s8 %v2686
    %v2688 = vlaneseq
    %v2689 = vshrl.u32 %v2688, 7
    %v2690 = vsub.s32 %v2687, %v2689
    %v2691 = vrot.slane %v2677, %v2690
    %v2692 = vcombine.low %v2365, %v2373
    %v2693 = vcombine.high %v2365, %v2373
    %v2695 = vunpack.c.l.s4 1983009808
    %v2696 = vunpack.c.0.s8 %v2695
    %v2697 = vlaneseq
    %v2698 = vshrl.u32 %v2697, 7
    %v2699 = vsub.s32 %v2696, %v2698
    %v2700 = vrot.slane %v2692, %v2699
    %v2702 = vunpack.c.l.s4 1983009808
    %v2703 = vunpack.c.0.s8 %v2702
    %v2704 = vlaneseq
    %v2705 = vshrl.u32 %v2704, 7
    %v2706 = vsub.s32 %v2703, %v2705
    %v2707 = vrot.slane %v2693, %v2706
    %v2708 = vcombine.low %v2390, %v2400
    %v2709 = vcombine.high %v2390, %v2400
    %v2711 = vunpack.c.l.s4 1983009808
    %v2712 = vunpack.c.0.s8 %v2711
    %v2713 = vlaneseq
    %v2714 = vshrl.u32 %v2713, 7
    %v2715 = vsub.s32 %v2712, %v2714
    %v2716 = vrot.slane %v2708, %v2715
    %v2718 = vunpack.c.l.s4 1983009808
    %v2719 = vunpack.c.0.s8 %v2718
    %v2720 = vlaneseq
    %v2721 = vshrl.u32 %v2720, 7
    %v2722 = vsub.s32 %v2719, %v2721
    %v2723 = vrot.slane %v2709, %v2722
    %v2724 = vcombine.low %v2395, %v2405
    %v2725 = vcombine.high %v2395, %v2405
    %v2727 = vunpack.c.l.s4 1983009808
    %v2728 = vunpack.c.0.s8 %v2727
    %v2729 = vlaneseq
    %v2730 = vshrl.u32 %v2729, 7
    %v2731 = vsub.s32 %v2728, %v2730
    %v2732 = vrot.slane %v2724, %v2731
    %v2734 = vunpack.c.l.s4 1983009808
    %v2735 = vunpack.c.0.s8 %v2734
    %v2736 = vlaneseq
    %v2737 = vshrl.u32 %v2736, 7
    %v2738 = vsub.s32 %v2735, %v2737
    %v2739 = vrot.slane %v2725, %v2738
    %v2740 = vcombine.low %v2684, %v2700
    %v2741 = vcombine.high %v2684, %v2700
    %v2743 = vunpack.c.l.s4 1934713408
    %v2744 = vunpack.c.0.s8 %v2743
    %v2745 = vlaneseq
    %v2746 = vshrl.u32 %v2745, 7
    %v2747 = vsub.s32 %v2744, %v2746
    %v2748 = vrot.slane %v2740, %v2747
    %v2750 = vunpack.c.l.s4 1934713408
    %v2751 = vunpack.c.0.s8 %v2750
    %v2752 = vlaneseq
    %v2753 = vshrl.u32 %v2752, 7
    %v2754 = vsub.s32 %v2751, %v2753
    %v2755 = vrot.slane %v2741, %v2754
    %v2756 = vcombine.low %v2691, %v2707
    %v2757 = vcombine.high %v2691, %v2707
    %v2759 = vunpack.c.l.s4 1934713408
    %v2760 = vunpack.c.0.s8 %v2759
    %v2761 = vlaneseq
    %v2762 = vshrl.u32 %v2761, 7
    %v2763 = vsub.s32 %v2760, %v2762
    %v2764 = vrot.slane %v2756, %v2763
    %v2766 = vunpack.c.l.s4 1934713408
    %v2767 = vunpack.c.0.s8 %v2766
    %v2768 = vlaneseq
    %v2769 = vshrl.u32 %v2768, 7
    %v2770 = vsub.s32 %v2767, %v2769
    %v2771 = vrot.slane %v2757, %v2770
    %v2772 = vcombine.low %v2716, %v2732
    %v2773 = vcombine.high %v2716, %v2732
    %v2775 = vunpack.c.l.s4 1934713408
    %v2776 = vunpack.c.0.s8 %v2775
    %v2777 = vlaneseq
    %v2778 = vshrl.u32 %v2777, 7
    %v2779 = vsub.s32 %v2776, %v2778
    %v2780 = vrot.slane %v2772, %v2779
    %v2782 = vunpack.c.l.s4 1934713408
    %v2783 = vunpack.c.0.s8 %v2782
    %v2784 = vlaneseq
    %v2785 = vshrl.u32 %v2784, 7
    %v2786 = vsub.s32 %v2783, %v2785
    %v2787 = vrot.slane %v2773, %v2786
    %v2788 = vcombine.low %v2723, %v2739
    %v2789 = vcombine.high %v2723, %v2739
    %v2791 = vunpack.c.l.s4 1934713408
    %v2792 = vunpack.c.0.s8 %v2791
    %v2793 = vlaneseq
    %v2794 = vshrl.u32 %v2793, 7
    %v2795 = vsub.s32 %v2792, %v2794
    %v2796 = vrot.slane %v2788, %v2795
    %v2798 = vunpack.c.l.s4 1934713408
    %v2799 = vunpack.c.0.s8 %v2798
    %v2800 = vlaneseq
    %v2801 = vshrl.u32 %v2800, 7
    %v2802 = vsub.s32 %v2799, %v2801
    %v2803 = vrot.slane %v2789, %v2802
    %v2804 = vcombine.low %v2748, %v2780
    %v2805 = vcombine.high %v2748, %v2780
    %v2806 = vcombine.low %v2755, %v2787
    %v2807 = vcombine.high %v2755, %v2787
    %v2808 = vcombine.low %v2764, %v2796
    %v2809 = vcombine.high %v2764, %v2796
    %v2810 = vcombine.low %v2771, %v2803
    %v2811 = vcombine.high %v2771, %v2803
    %v2812 = vcombine.low %v2417, %v2425
    %v2813 = vcombine.high %v2417, %v2425
    %v2815 = vunpack.c.l.s4 1983009808
    %v2816 = vunpack.c.0.s8 %v2815
    %v2817 = vlaneseq
    %v2818 = vshrl.u32 %v2817, 7
    %v2819 = vsub.s32 %v2816, %v2818
    %v2820 = vrot.slane %v2812, %v2819
    %v2822 = vunpack.c.l.s4 1983009808
    %v2823 = vunpack.c.0.s8 %v2822
    %v2824 = vlaneseq
    %v2825 = vshrl.u32 %v2824, 7
    %v2826 = vsub.s32 %v2823, %v2825
    %v2827 = vrot.slane %v2813, %v2826
    %v2828 = vcombine.low %v2421, %v2429
    %v2829 = vcombine.high %v2421, %v2429
    %v2831 = vunpack.c.l.s4 1983009808
    %v2832 = vunpack.c.0.s8 %v2831
    %v2833 = vlaneseq
    %v2834 = vshrl.u32 %v2833, 7
    %v2835 = vsub.s32 %v2832, %v2834
    %v2836 = vrot.slane %v2828, %v2835
    %v2838 = vunpack.c.l.s4 1983009808
    %v2839 = vunpack.c.0.s8 %v2838
    %v2840 = vlaneseq
    %v2841 = vshrl.u32 %v2840, 7
    %v2842 = vsub.s32 %v2839, %v2841
    %v2843 = vrot.slane %v2829, %v2842
    %v2844 = vcombine.low %v2441, %v2449
    %v2845 = vcombine.high %v2441, %v2449
    %v2847 = vunpack.c.l.s4 1983009808
    %v2848 = vunpack.c.0.s8 %v2847
    %v2849 = vlaneseq
    %v2850 = vshrl.u32 %v2849, 7
    %v2851 = vsub.s32 %v2848, %v2850
    %v2852 = vrot.slane %v2844, %v2851
    %v2854 = vunpack.c.l.s4 1983009808
    %v2855 = vunpack.c.0.s8 %v2854
    %v2856 = vlaneseq
    %v2857 = vshrl.u32 %v2856, 7
    %v2858 = vsub.s32 %v2855, %v2857
    %v2859 = vrot.slane %v2845, %v2858
    %v2860 = vcombine.low %v2445, %v2453
    %v2861 = vcombine.high %v2445, %v2453
    %v2863 = vunpack.c.l.s4 1983009808
    %v2864 = vunpack.c.0.s8 %v2863
    %v2865 = vlaneseq
    %v2866 = vshrl.u32 %v2865, 7
    %v2867 = vsub.s32 %v2864, %v2866
    %v2868 = vrot.slane %v2860, %v2867
    %v2870 = vunpack.c.l.s4 1983009808
    %v2871 = vunpack.c.0.s8 %v2870
    %v2872 = vlaneseq
    %v2873 = vshrl.u32 %v2872, 7
    %v2874 = vsub.s32 %v2871, %v2873
    %v2875 = vrot.slane %v2861, %v2874
    %v2876 = vcombine.low %v2820, %v2836
    %v2877 = vcombine.high %v2820, %v2836
    %v2879 = vunpack.c.l.s4 1934713408
    %v2880 = vunpack.c.0.s8 %v2879
    %v2881 = vlaneseq
    %v2882 = vshrl.u32 %v2881, 7
    %v2883 = vsub.s32 %v2880, %v2882
    %v2884 = vrot.slane %v2876, %v2883
    %v2886 = vunpack.c.l.s4 1934713408
    %v2887 = vunpack.c.0.s8 %v2886
    %v2888 = vlaneseq
    %v2889 = vshrl.u32 %v2888, 7
    %v2890 = vsub.s32 %v2887, %v2889
    %v2891 = vrot.slane %v2877, %v2890
    %v2892 = vcombine.low %v2827, %v2843
    %v2893 = vcombine.high %v2827, %v2843
    %v2895 = vunpack.c.l.s4 1934713408
    %v2896 = vunpack.c.0.s8 %v2895
    %v2897 = vlaneseq
    %v2898 = vshrl.u32 %v2897, 7
    %v2899 = vsub.s32 %v2896, %v2898
    %v2900 = vrot.slane %v2892, %v2899
    %v2902 = vunpack.c.l.s4 1934713408
    %v2903 = vunpack.c.0.s8 %v2902
    %v2904 = vlaneseq
    %v2905 = vshrl.u32 %v2904, 7
    %v2906 = vsub.s32 %v2903, %v2905
    %v2907 = vrot.slane %v2893, %v2906
    %v2908 = vcombine.low %v2852, %v2868
    %v2909 = vcombine.high %v2852, %v2868
    %v2911 = vunpack.c.l.s4 1934713408
    %v2912 = vunpack.c.0.s8 %v2911
    %v2913 = vlaneseq
    %v2914 = vshrl.u32 %v2913, 7
    %v2915 = vsub.s32 %v2912, %v2914
    %v2916 = vrot.slane %v2908, %v2915
    %v2918 = vunpack.c.l.s4 1934713408
    %v2919 = vunpack.c.0.s8 %v2918
    %v2920 = vlaneseq
    %v2921 = vshrl.u32 %v2920, 7
    %v2922 = vsub.s32 %v2919, %v2921
    %v2923 = vrot.slane %v2909, %v2922
    %v2924 = vcombine.low %v2859, %v2875
    %v2925 = vcombine.high %v2859, %v2875
    %v2927 = vunpack.c.l.s4 1934713408
    %v2928 = vunpack.c.0.s8 %v2927
    %v2929 = vlaneseq
    %v2930 = vshrl.u32 %v2929, 7
    %v2931 = vsub.s32 %v2928, %v2930
    %v2932 = vrot.slane %v2924, %v2931
    %v2934 = vunpack.c.l.s4 1934713408
    %v2935 = vunpack.c.0.s8 %v2934
    %v2936 = vlaneseq
    %v2937 = vshrl.u32 %v2936, 7
    %v2938 = vsub.s32 %v2935, %v2937
    %v2939 = vrot.slane %v2925, %v2938
    %v2940 = vcombine.low %v2884, %v2916
    %v2941 = vcombine.high %v2884, %v2916
    %v2942 = vcombine.low %v2891, %v2923
    %v2943 = vcombine.high %v2891, %v2923
    %v2944 = vcombine.low %v2900, %v2932
    %v2945 = vcombine.high %v2900, %v2932
    %v2946 = vcombine.low %v2907, %v2939
    %v2947 = vcombine.high %v2907, %v2939
    %v2948 = vcombine.low %v2466, %v2476
    %v2949 = vcombine.high %v2466, %v2476
    %v2951 = vunpack.c.l.s4 1983009808
    %v2952 = vunpack.c.0.s8 %v2951
    %v2953 = vlaneseq
    %v2954 = vshrl.u32 %v2953, 7
    %v2955 = vsub.s32 %v2952, %v2954
    %v2956 = vrot.slane %v2948, %v2955
    %v2958 = vunpack.c.l.s4 1983009808
    %v2959 = vunpack.c.0.s8 %v2958
    %v2960 = vlaneseq
    %v2961 = vshrl.u32 %v2960, 7
    %v2962 = vsub.s32 %v2959, %v2961
    %v2963 = vrot.slane %v2949, %v2962
    %v2964 = vcombine.low %v2471, %v2481
    %v2965 = vcombine.high %v2471, %v2481
    %v2967 = vunpack.c.l.s4 1983009808
    %v2968 = vunpack.c.0.s8 %v2967
    %v2969 = vlaneseq
    %v2970 = vshrl.u32 %v2969, 7
    %v2971 = vsub.s32 %v2968, %v2970
    %v2972 = vrot.slane %v2964, %v2971
    %v2974 = vunpack.c.l.s4 1983009808
    %v2975 = vunpack.c.0.s8 %v2974
    %v2976 = vlaneseq
    %v2977 = vshrl.u32 %v2976, 7
    %v2978 = vsub.s32 %v2975, %v2977
    %v2979 = vrot.slane %v2965, %v2978
    %v2980 = vcombine.low %v2493, %v2501
    %v2981 = vcombine.high %v2493, %v2501
    %v2983 = vunpack.c.l.s4 1983009808
    %v2984 = vunpack.c.0.s8 %v2983
    %v2985 = vlaneseq
    %v2986 = vshrl.u32 %v2985, 7
    %v2987 = vsub.s32 %v2984, %v2986
    %v2988 = vrot.slane %v2980, %v2987
    %v2990 = vunpack.c.l.s4 1983009808
    %v2991 = vunpack.c.0.s8 %v2990
    %v2992 = vlaneseq
    %v2993 = vshrl.u32 %v2992, 7
    %v2994 = vsub.s32 %v2991, %v2993
    %v2995 = vrot.slane %v2981, %v2994
    %v2996 = vcombine.low %v2497, %v2505
    %v2997 = vcombine.high %v2497, %v2505
    %v2999 = vunpack.c.l.s4 1983009808
    %v3000 = vunpack.c.0.s8 %v2999
    %v3001 = vlaneseq
    %v3002 = vshrl.u32 %v3001, 7
    %v3003 = vsub.s32 %v3000, %v3002
    %v3004 = vrot.slane %v2996, %v3003
    %v3006 = vunpack.c.l.s4 1983009808
    %v3007 = vunpack.c.0.s8 %v3006
    %v3008 = vlaneseq
    %v3009 = vshrl.u32 %v3008, 7
    %v3010 = vsub.s32 %v3007, %v3009
    %v3011 = vrot.slane %v2997, %v3010
    %v3012 = vcombine.low %v2956, %v2972
    %v3013 = vcombine.high %v2956, %v2972
    %v3015 = vunpack.c.l.s4 1934713408
    %v3016 = vunpack.c.0.s8 %v3015
    %v3017 = vlaneseq
    %v3018 = vshrl.u32 %v3017, 7
    %v3019 = vsub.s32 %v3016, %v3018
    %v3020 = vrot.slane %v3012, %v3019
    %v3022 = vunpack.c.l.s4 1934713408
    %v3023 = vunpack.c.0.s8 %v3022
    %v3024 = vlaneseq
    %v3025 = vshrl.u32 %v3024, 7
    %v3026 = vsub.s32 %v3023, %v3025
    %v3027 = vrot.slane %v3013, %v3026
    %v3028 = vcombine.low %v2963, %v2979
    %v3029 = vcombine.high %v2963, %v2979
    %v3031 = vunpack.c.l.s4 1934713408
    %v3032 = vunpack.c.0.s8 %v3031
    %v3033 = vlaneseq
    %v3034 = vshrl.u32 %v3033, 7
    %v3035 = vsub.s32 %v3032, %v3034
    %v3036 = vrot.slane %v3028, %v3035
    %v3038 = vunpack.c.l.s4 1934713408
    %v3039 = vunpack.c.0.s8 %v3038
    %v3040 = vlaneseq
    %v3041 = vshrl.u32 %v3040, 7
    %v3042 = vsub.s32 %v3039, %v3041
    %v3043 = vrot.slane %v3029, %v3042
    %v3044 = vcombine.low %v2988, %v3004
    %v3045 = vcombine.high %v2988, %v3004
    %v3047 = vunpack.c.l.s4 1934713408
    %v3048 = vunpack.c.0.s8 %v3047
    %v3049 = vlaneseq
    %v3050 = vshrl.u32 %v3049, 7
    %v3051 = vsub.s32 %v3048, %v3050
    %v3052 = vrot.slane %v3044, %v3051
    %v3054 = vunpack.c.l.s4 1934713408
    %v3055 = vunpack.c.0.s8 %v3054
    %v3056 = vlaneseq
    %v3057 = vshrl.u32 %v3056, 7
    %v3058 = vsub.s32 %v3055, %v3057
    %v3059 = vrot.slane %v3045, %v3058
    %v3060 = vcombine.low %v2995, %v3011
    %v3061 = vcombine.high %v2995, %v3011
    %v3063 = vunpack.c.l.s4 1934713408
    %v3064 = vunpack.c.0.s8 %v3063
    %v3065 = vlaneseq
    %v3066 = vshrl.u32 %v3065, 7
    %v3067 = vsub.s32 %v3064, %v3066
    %v3068 = vrot.slane %v3060, %v3067
    %v3070 = vunpack.c.l.s4 1934713408
    %v3071 = vunpack.c.0.s8 %v3070
    %v3072 = vlaneseq
    %v3073 = vshrl.u32 %v3072, 7
    %v3074 = vsub.s32 %v3071, %v3073
    %v3075 = vrot.slane %v3061, %v3074
    %v3076 = vcombine.low %v3020, %v3052
    %v3077 = vcombine.high %v3020, %v3052
    %v3078 = vcombine.low %v3027, %v3059
    %v3079 = vcombine.high %v3027, %v3059
    %v3080 = vcombine.low %v3036, %v3068
    %v3081 = vcombine.high %v3036, %v3068
    %v3082 = vcombine.low %v3043, %v3075
    %v3083 = vcombine.high %v3043, %v3075
    %v3084 = vcombine.low %v2517, %v2525
    %v3085 = vcombine.high %v2517, %v2525
    %v3087 = vunpack.c.l.s4 1983009808
    %v3088 = vunpack.c.0.s8 %v3087
    %v3089 = vlaneseq
    %v3090 = vshrl.u32 %v3089, 7
    %v3091 = vsub.s32 %v3088, %v3090
    %v3092 = vrot.slane %v3084, %v3091
    %v3094 = vunpack.c.l.s4 1983009808
    %v3095 = vunpack.c.0.s8 %v3094
    %v3096 = vlaneseq
    %v3097 = vshrl.u32 %v3096, 7
    %v3098 = vsub.s32 %v3095, %v3097
    %v3099 = vrot.slane %v3085, %v3098
    %v3100 = vcombine.low %v2521, %v2529
    %v3101 = vcombine.high %v2521, %v2529
    %v3103 = vunpack.c.l.s4 1983009808
    %v3104 = vunpack.c.0.s8 %v3103
    %v3105 = vlaneseq
    %v3106 = vshrl.u32 %v3105, 7
    %v3107 = vsub.s32 %v3104, %v3106
    %v3108 = vrot.slane %v3100, %v3107
    %v3110 = vunpack.c.l.s4 1983009808
    %v3111 = vunpack.c.0.s8 %v3110
    %v3112 = vlaneseq
    %v3113 = vshrl.u32 %v3112, 7
    %v3114 = vsub.s32 %v3111, %v3113
    %v3115 = vrot.slane %v3101, %v3114
    %v3116 = vcombine.low %v3092, %v3108
    %v3117 = vcombine.high %v3092, %v3108
    %v3119 = vunpack.c.l.s4 1934713408
    %v3120 = vunpack.c.0.s8 %v3119
    %v3121 = vlaneseq
    %v3122 = vshrl.u32 %v3121, 7
    %v3123 = vsub.s32 %v3120, %v3122
    %v3124 = vrot.slane %v3116, %v3123
    %v3126 = vunpack.c.l.s4 1934713408
    %v3127 = vunpack.c.0.s8 %v3126
    %v3128 = vlaneseq
    %v3129 = vshrl.u32 %v3128, 7
    %v3130 = vsub.s32 %v3127, %v3129
    %v3131 = vrot.slane %v3117, %v3130
    %v3132 = vcombine.low %v3099, %v3115
    %v3133 = vcombine.high %v3099, %v3115
    %v3135 = vunpack.c.l.s4 1934713408
    %v3136 = vunpack.c.0.s8 %v3135
    %v3137 = vlaneseq
    %v3138 = vshrl.u32 %v3137, 7
    %v3139 = vsub.s32 %v3136, %v3138
    %v3140 = vrot.slane %v3132, %v3139
    %v3142 = vunpack.c.l.s4 1934713408
    %v3143 = vunpack.c.0.s8 %v3142
    %v3144 = vlaneseq
    %v3145 = vshrl.u32 %v3144, 7
    %v3146 = vsub.s32 %v3143, %v3145
    %v3147 = vrot.slane %v3133, %v3146
    %v3148 = vcombine.high %v3124, 0.0
    %v3149 = vcombine.high %v3131, 0.0
    %v3150 = vcombine.high %v3140, 0.0
    %v3151 = vcombine.high %v3147, 0.0
    %v3152 = vcombine.low %v2317, %v2323
    %v3153 = vcombine.high %v2317, %v2323
    %v3155 = vunpack.c.l.s4 1983009808
    %v3156 = vunpack.c.0.s8 %v3155
    %v3157 = vlaneseq
    %v3158 = vshrl.u32 %v3157, 7
    %v3159 = vsub.s32 %v3156, %v3158
    %v3160 = vrot.slane %v3152, %v3159
    %v3162 = vunpack.c.l.s4 1983009808
    %v3163 = vunpack.c.0.s8 %v3162
    %v3164 = vlaneseq
    %v3165 = vshrl.u32 %v3164, 7
    %v3166 = vsub.s32 %v3163, %v3165
    %v3167 = vrot.slane %v3153, %v3166
    %v3168 = vcombine.low %v2320, %v2326
    %v3169 = vcombine.high %v2320, %v2326
    %v3171 = vunpack.c.l.s4 1983009808
    %v3172 = vunpack.c.0.s8 %v3171
    %v3173 = vlaneseq
    %v3174 = vshrl.u32 %v3173, 7
    %v3175 = vsub.s32 %v3172, %v3174
    %v3176 = vrot.slane %v3168, %v3175
    %v3178 = vunpack.c.l.s4 1983009808
    %v3179 = vunpack.c.0.s8 %v3178
    %v3180 = vlaneseq
    %v3181 = vshrl.u32 %v3180, 7
    %v3182 = vsub.s32 %v3179, %v3181
    %v3183 = vrot.slane %v3169, %v3182
    %v3184 = vcombine.low %v2339, %v2347
    %v3185 = vcombine.high %v2339, %v2347
    %v3187 = vunpack.c.l.s4 1983009808
    %v3188 = vunpack.c.0.s8 %v3187
    %v3189 = vlaneseq
    %v3190 = vshrl.u32 %v3189, 7
    %v3191 = vsub.s32 %v3188, %v3190
    %v3192 = vrot.slane %v3184, %v3191
    %v3194 = vunpack.c.l.s4 1983009808
    %v3195 = vunpack.c.0.s8 %v3194
    %v3196 = vlaneseq
    %v3197 = vshrl.u32 %v3196, 7
    %v3198 = vsub.s32 %v3195, %v3197
    %v3199 = vrot.slane %v3185, %v3198
    %v3200 = vcombine.low %v2343, %v2351
    %v3201 = vcombine.high %v2343, %v2351
    %v3203 = vunpack.c.l.s4 1983009808
    %v3204 = vunpack.c.0.s8 %v3203
    %v3205 = vlaneseq
    %v3206 = vshrl.u32 %v3205, 7
    %v3207 = vsub.s32 %v3204, %v3206
    %v3208 = vrot.slane %v3200, %v3207
    %v3210 = vunpack.c.l.s4 1983009808
    %v3211 = vunpack.c.0.s8 %v3210
    %v3212 = vlaneseq
    %v3213 = vshrl.u32 %v3212, 7
    %v3214 = vsub.s32 %v3211, %v3213
    %v3215 = vrot.slane %v3201, %v3214
    %v3216 = vcombine.low %v3160, %v3176
    %v3217 = vcombine.high %v3160, %v3176
    %v3219 = vunpack.c.l.s4 1934713408
    %v3220 = vunpack.c.0.s8 %v3219
    %v3221 = vlaneseq
    %v3222 = vshrl.u32 %v3221, 7
    %v3223 = vsub.s32 %v3220, %v3222
    %v3224 = vrot.slane %v3216, %v3223
    %v3226 = vunpack.c.l.s4 1934713408
    %v3227 = vunpack.c.0.s8 %v3226
    %v3228 = vlaneseq
    %v3229 = vshrl.u32 %v3228, 7
    %v3230 = vsub.s32 %v3227, %v3229
    %v3231 = vrot.slane %v3217, %v3230
    %v3232 = vcombine.low %v3167, %v3183
    %v3233 = vcombine.high %v3167, %v3183
    %v3235 = vunpack.c.l.s4 1934713408
    %v3236 = vunpack.c.0.s8 %v3235
    %v3237 = vlaneseq
    %v3238 = vshrl.u32 %v3237, 7
    %v3239 = vsub.s32 %v3236, %v3238
    %v3240 = vrot.slane %v3232, %v3239
    %v3242 = vunpack.c.l.s4 1934713408
    %v3243 = vunpack.c.0.s8 %v3242
    %v3244 = vlaneseq
    %v3245 = vshrl.u32 %v3244, 7
    %v3246 = vsub.s32 %v3243, %v3245
    %v3247 = vrot.slane %v3233, %v3246
    %v3248 = vcombine.low %v3192, %v3208
    %v3249 = vcombine.high %v3192, %v3208
    %v3251 = vunpack.c.l.s4 1934713408
    %v3252 = vunpack.c.0.s8 %v3251
    %v3253 = vlaneseq
    %v3254 = vshrl.u32 %v3253, 7
    %v3255 = vsub.s32 %v3252, %v3254
    %v3256 = vrot.slane %v3248, %v3255
    %v3258 = vunpack.c.l.s4 1934713408
    %v3259 = vunpack.c.0.s8 %v3258
    %v3260 = vlaneseq
    %v3261 = vshrl.u32 %v3260, 7
    %v3262 = vsub.s32 %v3259, %v3261
    %v3263 = vrot.slane %v3249, %v3262
    %v3264 = vcombine.low %v3199, %v3215
    %v3265 = vcombine.high %v3199, %v3215
    %v3267 = vunpack.c.l.s4 1934713408
    %v3268 = vunpack.c.0.s8 %v3267
    %v3269 = vlaneseq
    %v3270 = vshrl.u32 %v3269, 7
    %v3271 = vsub.s32 %v3268, %v3270
    %v3272 = vrot.slane %v3264, %v3271
    %v3274 = vunpack.c.l.s4 1934713408
    %v3275 = vunpack.c.0.s8 %v3274
    %v3276 = vlaneseq
    %v3277 = vshrl.u32 %v3276, 7
    %v3278 = vsub.s32 %v3275, %v3277
    %v3279 = vrot.slane %v3265, %v3278
    %v3280 = vcombine.low %v3224, %v3256
    %v3281 = vcombine.high %v3224, %v3256
    %v3282 = vcombine.low %v3231, %v3263
    %v3283 = vcombine.high %v3231, %v3263
    %v3284 = vcombine.low %v3240, %v3272
    %v3285 = vcombine.high %v3240, %v3272
    %v3286 = vcombine.low %v3247, %v3279
    %v3287 = vcombine.high %v3247, %v3279
    %v3288 = vcombine.low %v2363, %v2371
    %v3289 = vcombine.high %v2363, %v2371
    %v3291 = vunpack.c.l.s4 1983009808
    %v3292 = vunpack.c.0.s8 %v3291
    %v3293 = vlaneseq
    %v3294 = vshrl.u32 %v3293, 7
    %v3295 = vsub.s32 %v3292, %v3294
    %v3296 = vrot.slane %v3288, %v3295
    %v3298 = vunpack.c.l.s4 1983009808
    %v3299 = vunpack.c.0.s8 %v3298
    %v3300 = vlaneseq
    %v3301 = vshrl.u32 %v3300, 7
    %v3302 = vsub.s32 %v3299, %v3301
    %v3303 = vrot.slane %v3289, %v3302
    %v3304 = vcombine.low %v2367, %v2375
    %v3305 = vcombine.high %v2367, %v2375
    %v3307 = vunpack.c.l.s4 1983009808
    %v3308 = vunpack.c.0.s8 %v3307
    %v3309 = vlaneseq
    %v3310 = vshrl.u32 %v3309, 7
    %v3311 = vsub.s32 %v3308, %v3310
    %v3312 = vrot.slane %v3304, %v3311
    %v3314 = vunpack.c.l.s4 1983009808
    %v3315 = vunpack.c.0.s8 %v3314
    %v3316 = vlaneseq
    %v3317 = vshrl.u32 %v3316, 7
    %v3318 = vsub.s32 %v3315, %v3317
    %v3319 = vrot.slane %v3305, %v3318
    %v3320 = vcombine.low %v2392, %v2402
    %v3321 = vcombine.high %v2392, %v2402
    %v3323 = vunpack.c.l.s4 1983009808
    %v3324 = vunpack.c.0.s8 %v3323
    %v3325 = vlaneseq
    %v3326 = vshrl.u32 %v3325, 7
    %v3327 = vsub.s32 %v3324, %v3326
    %v3328 = vrot.slane %v3320, %v3327
    %v3330 = vunpack.c.l.s4 1983009808
    %v3331 = vunpack.c.0.s8 %v3330
    %v3332 = vlaneseq
    %v3333 = vshrl.u32 %v3332, 7
    %v3334 = vsub.s32 %v3331, %v3333
    %v3335 = vrot.slane %v3321, %v3334
    %v3336 = vcombine.low %v2397, %v2407
    %v3337 = vcombine.high %v2397, %v2407
    %v3339 = vunpack.c.l.s4 1983009808
    %v3340 = vunpack.c.0.s8 %v3339
    %v3341 = vlaneseq
    %v3342 = vshrl.u32 %v3341, 7
    %v3343 = vsub.s32 %v3340, %v3342
    %v3344 = vrot.slane %v3336, %v3343
    %v3346 = vunpack.c.l.s4 1983009808
    %v3347 = vunpack.c.0.s8 %v3346
    %v3348 = vlaneseq
    %v3349 = vshrl.u32 %v3348, 7
    %v3350 = vsub.s32 %v3347, %v3349
    %v3351 = vrot.slane %v3337, %v3350
    %v3352 = vcombine.low %v3296, %v3312
    %v3353 = vcombine.high %v3296, %v3312
    %v3355 = vunpack.c.l.s4 1934713408
    %v3356 = vunpack.c.0.s8 %v3355
    %v3357 = vlaneseq
    %v3358 = vshrl.u32 %v3357, 7
    %v3359 = vsub.s32 %v3356, %v3358
    %v3360 = vrot.slane %v3352, %v3359
    %v3362 = vunpack.c.l.s4 1934713408
    %v3363 = vunpack.c.0.s8 %v3362
    %v3364 = vlaneseq
    %v3365 = vshrl.u32 %v3364, 7
    %v3366 = vsub.s32 %v3363, %v3365
    %v3367 = vrot.slane %v3353, %v3366
    %v3368 = vcombine.low %v3303, %v3319
    %v3369 = vcombine.high %v3303, %v3319
    %v3371 = vunpack.c.l.s4 1934713408
    %v3372 = vunpack.c.0.s8 %v3371
    %v3373 = vlaneseq
    %v3374 = vshrl.u32 %v3373, 7
    %v3375 = vsub.s32 %v3372, %v3374
    %v3376 = vrot.slane %v3368, %v3375
    %v3378 = vunpack.c.l.s4 1934713408
    %v3379 = vunpack.c.0.s8 %v3378
    %v3380 = vlaneseq
    %v3381 = vshrl.u32 %v3380, 7
    %v3382 = vsub.s32 %v3379, %v3381
    %v3383 = vrot.slane %v3369, %v3382
    %v3384 = vcombine.low %v3328, %v3344
    %v3385 = vcombine.high %v3328, %v3344
    %v3387 = vunpack.c.l.s4 1934713408
    %v3388 = vunpack.c.0.s8 %v3387
    %v3389 = vlaneseq
    %v3390 = vshrl.u32 %v3389, 7
    %v3391 = vsub.s32 %v3388, %v3390
    %v3392 = vrot.slane %v3384, %v3391
    %v3394 = vunpack.c.l.s4 1934713408
    %v3395 = vunpack.c.0.s8 %v3394
    %v3396 = vlaneseq
    %v3397 = vshrl.u32 %v3396, 7
    %v3398 = vsub.s32 %v3395, %v3397
    %v3399 = vrot.slane %v3385, %v3398
    %v3400 = vcombine.low %v3335, %v3351
    %v3401 = vcombine.high %v3335, %v3351
    %v3403 = vunpack.c.l.s4 1934713408
    %v3404 = vunpack.c.0.s8 %v3403
    %v3405 = vlaneseq
    %v3406 = vshrl.u32 %v3405, 7
    %v3407 = vsub.s32 %v3404, %v3406
    %v3408 = vrot.slane %v3400, %v3407
    %v3410 = vunpack.c.l.s4 1934713408
    %v3411 = vunpack.c.0.s8 %v3410
    %v3412 = vlaneseq
    %v3413 = vshrl.u32 %v3412, 7
    %v3414 = vsub.s32 %v3411, %v3413
    %v3415 = vrot.slane %v3401, %v3414
    %v3416 = vcombine.low %v3360, %v3392
    %v3417 = vcombine.high %v3360, %v3392
    %v3418 = vcombine.low %v3367, %v3399
    %v3419 = vcombine.high %v3367, %v3399
    %v3420 = vcombine.low %v3376, %v3408
    %v3421 = vcombine.high %v3376, %v3408
    %v3422 = vcombine.low %v3383, %v3415
    %v3423 = vcombine.high %v3383, %v3415
    %v3424 = vcombine.low %v2419, %v2427
    %v3425 = vcombine.high %v2419, %v2427
    %v3427 = vunpack.c.l.s4 1983009808
    %v3428 = vunpack.c.0.s8 %v3427
    %v3429 = vlaneseq
    %v3430 = vshrl.u32 %v3429, 7
    %v3431 = vsub.s32 %v3428, %v3430
    %v3432 = vrot.slane %v3424, %v3431
    %v3434 = vunpack.c.l.s4 1983009808
    %v3435 = vunpack.c.0.s8 %v3434
    %v3436 = vlaneseq
    %v3437 = vshrl.u32 %v3436, 7
    %v3438 = vsub.s32 %v3435, %v3437
    %v3439 = vrot.slane %v3425, %v3438
    %v3440 = vcombine.low %v2423, %v2431
    %v3441 = vcombine.high %v2423, %v2431
    %v3443 = vunpack.c.l.s4 1983009808
    %v3444 = vunpack.c.0.s8 %v3443
    %v3445 = vlaneseq
    %v3446 = vshrl.u32 %v3445, 7
    %v3447 = vsub.s32 %v3444, %v3446
    %v3448 = vrot.slane %v3440, %v3447
    %v3450 = vunpack.c.l.s4 1983009808
    %v3451 = vunpack.c.0.s8 %v3450
    %v3452 = vlaneseq
    %v3453 = vshrl.u32 %v3452, 7
    %v3454 = vsub.s32 %v3451, %v3453
    %v3455 = vrot.slane %v3441, %v3454
    %v3456 = vcombine.low %v2443, %v2451
    %v3457 = vcombine.high %v2443, %v2451
    %v3459 = vunpack.c.l.s4 1983009808
    %v3460 = vunpack.c.0.s8 %v3459
    %v3461 = vlaneseq
    %v3462 = vshrl.u32 %v3461, 7
    %v3463 = vsub.s32 %v3460, %v3462
    %v3464 = vrot.slane %v3456, %v3463
    %v3466 = vunpack.c.l.s4 1983009808
    %v3467 = vunpack.c.0.s8 %v3466
    %v3468 = vlaneseq
    %v3469 = vshrl.u32 %v3468, 7
    %v3470 = vsub.s32 %v3467, %v3469
    %v3471 = vrot.slane %v3457, %v3470
    %v3472 = vcombine.low %v2447, %v2455
    %v3473 = vcombine.high %v2447, %v2455
    %v3475 = vunpack.c.l.s4 1983009808
    %v3476 = vunpack.c.0.s8 %v3475
    %v3477 = vlaneseq
    %v3478 = vshrl.u32 %v3477, 7
    %v3479 = vsub.s32 %v3476, %v3478
    %v3480 = vrot.slane %v3472, %v3479
    %v3482 = vunpack.c.l.s4 1983009808
    %v3483 = vunpack.c.0.s8 %v3482
    %v3484 = vlaneseq
    %v3485 = vshrl.u32 %v3484, 7
    %v3486 = vsub.s32 %v3483, %v3485
    %v3487 = vrot.slane %v3473, %v3486
    %v3488 = vcombine.low %v3432, %v3448
    %v3489 = vcombine.high %v3432, %v3448
    %v3491 = vunpack.c.l.s4 1934713408
    %v3492 = vunpack.c.0.s8 %v3491
    %v3493 = vlaneseq
    %v3494 = vshrl.u32 %v3493, 7
    %v3495 = vsub.s32 %v3492, %v3494
    %v3496 = vrot.slane %v3488, %v3495
    %v3498 = vunpack.c.l.s4 1934713408
    %v3499 = vunpack.c.0.s8 %v3498
    %v3500 = vlaneseq
    %v3501 = vshrl.u32 %v3500, 7
    %v3502 = vsub.s32 %v3499, %v3501
    %v3503 = vrot.slane %v3489, %v3502
    %v3504 = vcombine.low %v3439, %v3455
    %v3505 = vcombine.high %v3439, %v3455
    %v3507 = vunpack.c.l.s4 1934713408
    %v3508 = vunpack.c.0.s8 %v3507
    %v3509 = vlaneseq
    %v3510 = vshrl.u32 %v3509, 7
    %v3511 = vsub.s32 %v3508, %v3510
    %v3512 = vrot.slane %v3504, %v3511
    %v3514 = vunpack.c.l.s4 1934713408
    %v3515 = vunpack.c.0.s8 %v3514
    %v3516 = vlaneseq
    %v3517 = vshrl.u32 %v3516, 7
    %v3518 = vsub.s32 %v3515, %v3517
    %v3519 = vrot.slane %v3505, %v3518
    %v3520 = vcombine.low %v3464, %v3480
    %v3521 = vcombine.high %v3464, %v3480
    %v3523 = vunpack.c.l.s4 1934713408
    %v3524 = vunpack.c.0.s8 %v3523
    %v3525 = vlaneseq
    %v3526 = vshrl.u32 %v3525, 7
    %v3527 = vsub.s32 %v3524, %v3526
    %v3528 = vrot.slane %v3520, %v3527
    %v3530 = vunpack.c.l.s4 1934713408
    %v3531 = vunpack.c.0.s8 %v3530
    %v3532 = vlaneseq
    %v3533 = vshrl.u32 %v3532, 7
    %v3534 = vsub.s32 %v3531, %v3533
    %v3535 = vrot.slane %v3521, %v3534
    %v3536 = vcombine.low %v3471, %v3487
    %v3537 = vcombine.high %v3471, %v3487
    %v3539 = vunpack.c.l.s4 1934713408
    %v3540 = vunpack.c.0.s8 %v3539
    %v3541 = vlaneseq
    %v3542 = vshrl.u32 %v3541, 7
    %v3543 = vsub.s32 %v3540, %v3542
    %v3544 = vrot.slane %v3536, %v3543
    %v3546 = vunpack.c.l.s4 1934713408
    %v3547 = vunpack.c.0.s8 %v3546
    %v3548 = vlaneseq
    %v3549 = vshrl.u32 %v3548, 7
    %v3550 = vsub.s32 %v3547, %v3549
    %v3551 = vrot.slane %v3537, %v3550
    %v3552 = vcombine.low %v3496, %v3528
    %v3553 = vcombine.high %v3496, %v3528
    %v3554 = vcombine.low %v3503, %v3535
    %v3555 = vcombine.high %v3503, %v3535
    %v3556 = vcombine.low %v3512, %v3544
    %v3557 = vcombine.high %v3512, %v3544
    %v3558 = vcombine.low %v3519, %v3551
    %v3559 = vcombine.high %v3519, %v3551
    %v3560 = vcombine.low %v2468, %v2478
    %v3561 = vcombine.high %v2468, %v2478
    %v3563 = vunpack.c.l.s4 1983009808
    %v3564 = vunpack.c.0.s8 %v3563
    %v3565 = vlaneseq
    %v3566 = vshrl.u32 %v3565, 7
    %v3567 = vsub.s32 %v3564, %v3566
    %v3568 = vrot.slane %v3560, %v3567
    %v3570 = vunpack.c.l.s4 1983009808
    %v3571 = vunpack.c.0.s8 %v3570
    %v3572 = vlaneseq
    %v3573 = vshrl.u32 %v3572, 7
    %v3574 = vsub.s32 %v3571, %v3573
    %v3575 = vrot.slane %v3561, %v3574
    %v3576 = vcombine.low %v2473, %v2483
    %v3577 = vcombine.high %v2473, %v2483
    %v3579 = vunpack.c.l.s4 1983009808
    %v3580 = vunpack.c.0.s8 %v3579
    %v3581 = vlaneseq
    %v3582 = vshrl.u32 %v3581, 7
    %v3583 = vsub.s32 %v3580, %v3582
    %v3584 = vrot.slane %v3576, %v3583
    %v3586 = vunpack.c.l.s4 1983009808
    %v3587 = vunpack.c.0.s8 %v3586
    %v3588 = vlaneseq
    %v3589 = vshrl.u32 %v3588, 7
    %v3590 = vsub.s32 %v3587, %v3589
    %v3591 = vrot.slane %v3577, %v3590
    %v3592 = vcombine.low %v2495, %v2503
    %v3593 = vcombine.high %v2495, %v2503
    %v3595 = vunpack.c.l.s4 1983009808
    %v3596 = vunpack.c.0.s8 %v3595
    %v3597 = vlaneseq
    %v3598 = vshrl.u32 %v3597, 7
    %v3599 = vsub.s32 %v3596, %v3598
    %v3600 = vrot.slane %v3592, %v3599
    %v3602 = vunpack.c.l.s4 1983009808
    %v3603 = vunpack.c.0.s8 %v3602
    %v3604 = vlaneseq
    %v3605 = vshrl.u32 %v3604, 7
    %v3606 = vsub.s32 %v3603, %v3605
    %v3607 = vrot.slane %v3593, %v3606
    %v3608 = vcombine.low %v2499, %v2507
    %v3609 = vcombine.high %v2499, %v2507
    %v3611 = vunpack.c.l.s4 1983009808
    %v3612 = vunpack.c.0.s8 %v3611
    %v3613 = vlaneseq
    %v3614 = vshrl.u32 %v3613, 7
    %v3615 = vsub.s32 %v3612, %v3614
    %v3616 = vrot.slane %v3608, %v3615
    %v3618 = vunpack.c.l.s4 1983009808
    %v3619 = vunpack.c.0.s8 %v3618
    %v3620 = vlaneseq
    %v3621 = vshrl.u32 %v3620, 7
    %v3622 = vsub.s32 %v3619, %v3621
    %v3623 = vrot.slane %v3609, %v3622
    %v3624 = vcombine.low %v3568, %v3584
    %v3625 = vcombine.high %v3568, %v3584
    %v3627 = vunpack.c.l.s4 1934713408
    %v3628 = vunpack.c.0.s8 %v3627
    %v3629 = vlaneseq
    %v3630 = vshrl.u32 %v3629, 7
    %v3631 = vsub.s32 %v3628, %v3630
    %v3632 = vrot.slane %v3624, %v3631
    %v3634 = vunpack.c.l.s4 1934713408
    %v3635 = vunpack.c.0.s8 %v3634
    %v3636 = vlaneseq
    %v3637 = vshrl.u32 %v3636, 7
    %v3638 = vsub.s32 %v3635, %v3637
    %v3639 = vrot.slane %v3625, %v3638
    %v3640 = vcombine.low %v3575, %v3591
    %v3641 = vcombine.high %v3575, %v3591
    %v3643 = vunpack.c.l.s4 1934713408
    %v3644 = vunpack.c.0.s8 %v3643
    %v3645 = vlaneseq
    %v3646 = vshrl.u32 %v3645, 7
    %v3647 = vsub.s32 %v3644, %v3646
    %v3648 = vrot.slane %v3640, %v3647
    %v3650 = vunpack.c.l.s4 1934713408
    %v3651 = vunpack.c.0.s8 %v3650
    %v3652 = vlaneseq
    %v3653 = vshrl.u32 %v3652, 7
    %v3654 = vsub.s32 %v3651, %v3653
    %v3655 = vrot.slane %v3641, %v3654
    %v3656 = vcombine.low %v3600, %v3616
    %v3657 = vcombine.high %v3600, %v3616
    %v3659 = vunpack.c.l.s4 1934713408
    %v3660 = vunpack.c.0.s8 %v3659
    %v3661 = vlaneseq
    %v3662 = vshrl.u32 %v3661, 7
    %v3663 = vsub.s32 %v3660, %v3662
    %v3664 = vrot.slane %v3656, %v3663
    %v3666 = vunpack.c.l.s4 1934713408
    %v3667 = vunpack.c.0.s8 %v3666
    %v3668 = vlaneseq
    %v3669 = vshrl.u32 %v3668, 7
    %v3670 = vsub.s32 %v3667, %v3669
    %v3671 = vrot.slane %v3657, %v3670
    %v3672 = vcombine.low %v3607, %v3623
    %v3673 = vcombine.high %v3607, %v3623
    %v3675 = vunpack.c.l.s4 1934713408
    %v3676 = vunpack.c.0.s8 %v3675
    %v3677 = vlaneseq
    %v3678 = vshrl.u32 %v3677, 7
    %v3679 = vsub.s32 %v3676, %v3678
    %v3680 = vrot.slane %v3672, %v3679
    %v3682 = vunpack.c.l.s4 1934713408
    %v3683 = vunpack.c.0.s8 %v3682
    %v3684 = vlaneseq
    %v3685 = vshrl.u32 %v3684, 7
    %v3686 = vsub.s32 %v3683, %v3685
    %v3687 = vrot.slane %v3673, %v3686
    %v3688 = vcombine.low %v3632, %v3664
    %v3689 = vcombine.high %v3632, %v3664
    %v3690 = vcombine.low %v3639, %v3671
    %v3691 = vcombine.high %v3639, %v3671
    %v3692 = vcombine.low %v3648, %v3680
    %v3693 = vcombine.high %v3648, %v3680
    %v3694 = vcombine.low %v3655, %v3687
    %v3695 = vcombine.high %v3655, %v3687
    %v3696 = vcombine.low %v2519, %v2527
    %v3697 = vcombine.high %v2519, %v2527
    %v3699 = vunpack.c.l.s4 1983009808
    %v3700 = vunpack.c.0.s8 %v3699
    %v3701 = vlaneseq
    %v3702 = vshrl.u32 %v3701, 7
    %v3703 = vsub.s32 %v3700, %v3702
    %v3704 = vrot.slane %v3696, %v3703
    %v3706 = vunpack.c.l.s4 1983009808
    %v3707 = vunpack.c.0.s8 %v3706
    %v3708 = vlaneseq
    %v3709 = vshrl.u32 %v3708, 7
    %v3710 = vsub.s32 %v3707, %v3709
    %v3711 = vrot.slane %v3697, %v3710
    %v3712 = vcombine.low %v2523, %v2531
    %v3713 = vcombine.high %v2523, %v2531
    %v3715 = vunpack.c.l.s4 1983009808
    %v3716 = vunpack.c.0.s8 %v3715
    %v3717 = vlaneseq
    %v3718 = vshrl.u32 %v3717, 7
    %v3719 = vsub.s32 %v3716, %v3718
    %v3720 = vrot.slane %v3712, %v3719
    %v3722 = vunpack.c.l.s4 1983009808
    %v3723 = vunpack.c.0.s8 %v3722
    %v3724 = vlaneseq
    %v3725 = vshrl.u32 %v3724, 7
    %v3726 = vsub.s32 %v3723, %v3725
    %v3727 = vrot.slane %v3713, %v3726
    %v3728 = vcombine.low %v3704, %v3720
    %v3729 = vcombine.high %v3704, %v3720
    %v3731 = vunpack.c.l.s4 1934713408
    %v3732 = vunpack.c.0.s8 %v3731
    %v3733 = vlaneseq
    %v3734 = vshrl.u32 %v3733, 7
    %v3735 = vsub.s32 %v3732, %v3734
    %v3736 = vrot.slane %v3728, %v3735
    %v3738 = vunpack.c.l.s4 1934713408
    %v3739 = vunpack.c.0.s8 %v3738
    %v3740 = vlaneseq
    %v3741 = vshrl.u32 %v3740, 7
    %v3742 = vsub.s32 %v3739, %v3741
    %v3743 = vrot.slane %v3729, %v3742
    %v3744 = vcombine.low %v3711, %v3727
    %v3745 = vcombine.high %v3711, %v3727
    %v3747 = vunpack.c.l.s4 1934713408
    %v3748 = vunpack.c.0.s8 %v3747
    %v3749 = vlaneseq
    %v3750 = vshrl.u32 %v3749, 7
    %v3751 = vsub.s32 %v3748, %v3750
    %v3752 = vrot.slane %v3744, %v3751
    %v3754 = vunpack.c.l.s4 1934713408
    %v3755 = vunpack.c.0.s8 %v3754
    %v3756 = vlaneseq
    %v3757 = vshrl.u32 %v3756, 7
    %v3758 = vsub.s32 %v3755, %v3757
    %v3759 = vrot.slane %v3745, %v3758
    %v3760 = vcombine.high %v3736, 0.0
    %v3761 = vcombine.high %v3743, 0.0
    %v3762 = vcombine.high %v3752, 0.0
    %v3763 = vcombine.high %v3759, 0.0
    %3769 = vrot.lane.b32.xlu0 %v2669, 16
    %v3770 = vpop.permute.xlu0 %3769
    %3771 = vrot.lane.b32.xlu0 %v2805, 16
    %v3772 = vpop.permute.xlu0 %3771
    %3773 = vrot.lane.b32.xlu0 %v2941, 16
    %v3774 = vpop.permute.xlu0 %3773
    %3775 = vrot.lane.b32.xlu0 %v3077, 16
    %v3776 = vpop.permute.xlu0 %3775
    %3777 = vrot.lane.b32.xlu0 %v3148, 16
    %v3778 = vpop.permute.xlu0 %3777
    %3789 = vrot.lane.b32.xlu0 %v2670, 32
    %v3790 = vpop.permute.xlu0 %3789
    %3791 = vrot.lane.b32.xlu0 %v2806, 32
    %v3792 = vpop.permute.xlu0 %3791
    %3793 = vrot.lane.b32.xlu0 %v2942, 32
    %v3794 = vpop.permute.xlu0 %3793
    %3795 = vrot.lane.b32.xlu0 %v3078, 32
    %v3796 = vpop.permute.xlu0 %3795
    %3797 = vrot.lane.b32.xlu0 %v3131, 32
    %v3798 = vpop.permute.xlu0 %3797
    %3809 = vrot.lane.b32.xlu0 %v2671, 48
    %v3810 = vpop.permute.xlu0 %3809
    %3811 = vrot.lane.b32.xlu0 %v2807, 48
    %v3812 = vpop.permute.xlu0 %3811
    %3813 = vrot.lane.b32.xlu0 %v2943, 48
    %v3814 = vpop.permute.xlu0 %3813
    %3815 = vrot.lane.b32.xlu0 %v3079, 48
    %v3816 = vpop.permute.xlu0 %3815
    %3817 = vrot.lane.b32.xlu0 %v3149, 48
    %v3818 = vpop.permute.xlu0 %3817
    %3829 = vrot.lane.b32.xlu0 %v2672, 64
    %v3830 = vpop.permute.xlu0 %3829
    %3831 = vrot.lane.b32.xlu0 %v2808, 64
    %v3832 = vpop.permute.xlu0 %3831
    %3833 = vrot.lane.b32.xlu0 %v2944, 64
    %v3834 = vpop.permute.xlu0 %3833
    %3835 = vrot.lane.b32.xlu0 %v3080, 64
    %v3836 = vpop.permute.xlu0 %3835
    %3837 = vrot.lane.b32.xlu0 %v3140, 64
    %v3838 = vpop.permute.xlu0 %3837
    %3849 = vrot.lane.b32.xlu0 %v2673, 80
    %v3850 = vpop.permute.xlu0 %3849
    %3851 = vrot.lane.b32.xlu0 %v2809, 80
    %v3852 = vpop.permute.xlu0 %3851
    %3853 = vrot.lane.b32.xlu0 %v2945, 80
    %v3854 = vpop.permute.xlu0 %3853
    %3855 = vrot.lane.b32.xlu0 %v3081, 80
    %v3856 = vpop.permute.xlu0 %3855
    %3857 = vrot.lane.b32.xlu0 %v3150, 80
    %v3858 = vpop.permute.xlu0 %3857
    %3869 = vrot.lane.b32.xlu0 %v2674, 96
    %v3870 = vpop.permute.xlu0 %3869
    %3871 = vrot.lane.b32.xlu0 %v2810, 96
    %v3872 = vpop.permute.xlu0 %3871
    %3873 = vrot.lane.b32.xlu0 %v2946, 96
    %v3874 = vpop.permute.xlu0 %3873
    %3875 = vrot.lane.b32.xlu0 %v3082, 96
    %v3876 = vpop.permute.xlu0 %3875
    %3877 = vrot.lane.b32.xlu0 %v3147, 96
    %v3878 = vpop.permute.xlu0 %3877
    %3889 = vrot.lane.b32.xlu0 %v2675, 112
    %v3890 = vpop.permute.xlu0 %3889
    %3891 = vrot.lane.b32.xlu0 %v2811, 112
    %v3892 = vpop.permute.xlu0 %3891
    %3893 = vrot.lane.b32.xlu0 %v2947, 112
    %v3894 = vpop.permute.xlu0 %3893
    %3895 = vrot.lane.b32.xlu0 %v3083, 112
    %v3896 = vpop.permute.xlu0 %3895
    %3897 = vrot.lane.b32.xlu0 %v3151, 112
    %v3898 = vpop.permute.xlu0 %3897
    %3909 = vrot.lane.b32.xlu0 %v3281, 16
    %v3910 = vpop.permute.xlu0 %3909
    %3911 = vrot.lane.b32.xlu0 %v3417, 16
    %v3912 = vpop.permute.xlu0 %3911
    %3913 = vrot.lane.b32.xlu0 %v3553, 16
    %v3914 = vpop.permute.xlu0 %3913
    %3915 = vrot.lane.b32.xlu0 %v3689, 16
    %v3916 = vpop.permute.xlu0 %3915
    %3917 = vrot.lane.b32.xlu0 %v3760, 16
    %v3918 = vpop.permute.xlu0 %3917
    %3929 = vrot.lane.b32.xlu0 %v3282, 32
    %v3930 = vpop.permute.xlu0 %3929
    %3931 = vrot.lane.b32.xlu0 %v3418, 32
    %v3932 = vpop.permute.xlu0 %3931
    %3933 = vrot.lane.b32.xlu0 %v3554, 32
    %v3934 = vpop.permute.xlu0 %3933
    %3935 = vrot.lane.b32.xlu0 %v3690, 32
    %v3936 = vpop.permute.xlu0 %3935
    %3937 = vrot.lane.b32.xlu0 %v3743, 32
    %v3938 = vpop.permute.xlu0 %3937
    %3949 = vrot.lane.b32.xlu0 %v3283, 48
    %v3950 = vpop.permute.xlu0 %3949
    %3951 = vrot.lane.b32.xlu0 %v3419, 48
    %v3952 = vpop.permute.xlu0 %3951
    %3953 = vrot.lane.b32.xlu0 %v3555, 48
    %v3954 = vpop.permute.xlu0 %3953
    %3955 = vrot.lane.b32.xlu0 %v3691, 48
    %v3956 = vpop.permute.xlu0 %3955
    %3957 = vrot.lane.b32.xlu0 %v3761, 48
    %v3958 = vpop.permute.xlu0 %3957
    %3969 = vrot.lane.b32.xlu0 %v3284, 64
    %v3970 = vpop.permute.xlu0 %3969
    %3971 = vrot.lane.b32.xlu0 %v3420, 64
    %v3972 = vpop.permute.xlu0 %3971
    %3973 = vrot.lane.b32.xlu0 %v3556, 64
    %v3974 = vpop.permute.xlu0 %3973
    %3975 = vrot.lane.b32.xlu0 %v3692, 64
    %v3976 = vpop.permute.xlu0 %3975
    %3977 = vrot.lane.b32.xlu0 %v3752, 64
    %v3978 = vpop.permute.xlu0 %3977
    %3989 = vrot.lane.b32.xlu0 %v3285, 80
    %v3990 = vpop.permute.xlu0 %3989
    %3991 = vrot.lane.b32.xlu0 %v3421, 80
    %v3992 = vpop.permute.xlu0 %3991
    %3993 = vrot.lane.b32.xlu0 %v3557, 80
    %v3994 = vpop.permute.xlu0 %3993
    %3995 = vrot.lane.b32.xlu0 %v3693, 80
    %v3996 = vpop.permute.xlu0 %3995
    %3997 = vrot.lane.b32.xlu0 %v3762, 80
    %v3998 = vpop.permute.xlu0 %3997
    %4009 = vrot.lane.b32.xlu0 %v3286, 96
    %v4010 = vpop.permute.xlu0 %4009
    %4011 = vrot.lane.b32.xlu0 %v3422, 96
    %v4012 = vpop.permute.xlu0 %4011
    %4013 = vrot.lane.b32.xlu0 %v3558, 96
    %v4014 = vpop.permute.xlu0 %4013
    %4015 = vrot.lane.b32.xlu0 %v3694, 96
    %v4016 = vpop.permute.xlu0 %4015
    %4017 = vrot.lane.b32.xlu0 %v3759, 96
    %v4018 = vpop.permute.xlu0 %4017
    %4029 = vrot.lane.b32.xlu0 %v3287, 112
    %v4030 = vpop.permute.xlu0 %4029
    %4031 = vrot.lane.b32.xlu0 %v3423, 112
    %v4032 = vpop.permute.xlu0 %4031
    %4033 = vrot.lane.b32.xlu0 %v3559, 112
    %v4034 = vpop.permute.xlu0 %4033
    %4035 = vrot.lane.b32.xlu0 %v3695, 112
    %v4036 = vpop.permute.xlu0 %4035
    %4037 = vrot.lane.b32.xlu0 %v3763, 112
    %v4038 = vpop.permute.xlu0 %4037
    %v4044 = vsel %vm1960, %v2668, %v3770
    %v4045 = vsel %vm1960, %v2804, %v3772
    %v4046 = vsel %vm1960, %v2940, %v3774
    %v4047 = vsel %vm1960, %v3076, %v3776
    %v4048 = vsel %vm1960, %v3124, %v3778
    %v4049 = vsel %vm1966, %v4044, %v3790
    %v4050 = vsel %vm1966, %v4045, %v3792
    %v4051 = vsel %vm1966, %v4046, %v3794
    %v4052 = vsel %vm1966, %v4047, %v3796
    %v4053 = vsel %vm1966, %v4048, %v3798
    %v4054 = vsel %vm1972, %v4049, %v3810
    %v4055 = vsel %vm1972, %v4050, %v3812
    %v4056 = vsel %vm1972, %v4051, %v3814
    %v4057 = vsel %vm1972, %v4052, %v3816
    %v4058 = vsel %vm1972, %v4053, %v3818
    %v4059 = vsel %vm1978, %v4054, %v3830
    %v4060 = vsel %vm1978, %v4055, %v3832
    %v4061 = vsel %vm1978, %v4056, %v3834
    %v4062 = vsel %vm1978, %v4057, %v3836
    %v4063 = vsel %vm1978, %v4058, %v3838
    %v4064 = vsel %vm1984, %v4059, %v3850
    %v4065 = vsel %vm1984, %v4060, %v3852
    %v4066 = vsel %vm1984, %v4061, %v3854
    %v4067 = vsel %vm1984, %v4062, %v3856
    %v4068 = vsel %vm1984, %v4063, %v3858
    %v4069 = vsel %vm1990, %v4064, %v3870
    %v4070 = vsel %vm1990, %v4065, %v3872
    %v4071 = vsel %vm1990, %v4066, %v3874
    %v4072 = vsel %vm1990, %v4067, %v3876
    %v4073 = vsel %vm1990, %v4068, %v3878
    %v4074 = vsel %vm1996, %v4069, %v3890
    %v4075 = vsel %vm1996, %v4070, %v3892
    %v4076 = vsel %vm1996, %v4071, %v3894
    %v4077 = vsel %vm1996, %v4072, %v3896
    %v4078 = vsel %vm1996, %v4073, %v3898
    %v4079 = vsel %vm1960, %v3280, %v3910
    %v4080 = vsel %vm1960, %v3416, %v3912
    %v4081 = vsel %vm1960, %v3552, %v3914
    %v4082 = vsel %vm1960, %v3688, %v3916
    %v4083 = vsel %vm1960, %v3736, %v3918
    %v4084 = vsel %vm1966, %v4079, %v3930
    %v4085 = vsel %vm1966, %v4080, %v3932
    %v4086 = vsel %vm1966, %v4081, %v3934
    %v4087 = vsel %vm1966, %v4082, %v3936
    %v4088 = vsel %vm1966, %v4083, %v3938
    %v4089 = vsel %vm1972, %v4084, %v3950
    %v4090 = vsel %vm1972, %v4085, %v3952
    %v4091 = vsel %vm1972, %v4086, %v3954
    %v4092 = vsel %vm1972, %v4087, %v3956
    %v4093 = vsel %vm1972, %v4088, %v3958
    %v4094 = vsel %vm1978, %v4089, %v3970
    %v4095 = vsel %vm1978, %v4090, %v3972
    %v4096 = vsel %vm1978, %v4091, %v3974
    %v4097 = vsel %vm1978, %v4092, %v3976
    %v4098 = vsel %vm1978, %v4093, %v3978
    %v4099 = vsel %vm1984, %v4094, %v3990
    %v4100 = vsel %vm1984, %v4095, %v3992
    %v4101 = vsel %vm1984, %v4096, %v3994
    %v4102 = vsel %vm1984, %v4097, %v3996
    %v4103 = vsel %vm1984, %v4098, %v3998
    %v4104 = vsel %vm1990, %v4099, %v4010
    %v4105 = vsel %vm1990, %v4100, %v4012
    %v4106 = vsel %vm1990, %v4101, %v4014
    %v4107 = vsel %vm1990, %v4102, %v4016
    %v4108 = vsel %vm1990, %v4103, %v4018
    %v4109 = vsel %vm1996, %v4104, %v4030
    %v4110 = vsel %vm1996, %v4105, %v4032
    %v4111 = vsel %vm1996, %v4106, %v4034
    %v4112 = vsel %vm1996, %v4107, %v4036
    %v4113 = vsel %vm1996, %v4108, %v4038
    %v4115 = vsel %vm2041, %v4078, 0
    %v4118 = vsel %vm2041, %v4113, 0
    %4120 = vmatprep.subr.mxu0 %v4109
    %4121 = vmatpush1.msra.mxu0 %v4074
    %4122 = vmatprep.subr.mxu0 %v4110
    %4123 = vmatpush1.msra.mxu0 %v4075
    %4124 = vmatprep.subr.mxu0 %v4111
    %4125 = vmatpush1.msra.mxu0 %v4076
    %4126 = vmatprep.subr.mxu0 %v4112
    %4127 = vmatpush1.msra.mxu0 %v4077
    %4128 = vmatprep.subr.mxu0 %v4118
    %4129 = vmatpush1.msra.mxu0 %v4115
    %4130 = vmatprep.subr.mxu0 0.0
    %4131 = vmatpush1.msra.mxu0 0.0
    %4132 = vmatprep.subr.mxu0 0.0
    %4133 = vmatpush1.msra.mxu0 0.0
    %4134 = vmatprep.subr.mxu0 0.0
    %4135 = vmatpush1.msra.mxu0 0.0
    %4136 = vmatprep.subr.mxu0 0.0
    %4137 = vmatpush1.msra.mxu0 0.0
    %4138 = vmatprep.subr.mxu0 0.0
    %4139 = vmatpush1.msra.mxu0 0.0
    %4140 = vmatprep.subr.mxu0 0.0
    %4141 = vmatpush1.msra.mxu0 0.0
    %4142 = vmatprep.subr.mxu0 0.0
    %4143 = vmatpush1.msra.mxu0 0.0
    %4144 = vmatprep.subr.mxu0 0.0
    %4145 = vmatpush1.msra.mxu0 0.0
    %4146 = vmatprep.subr.mxu0 0.0
    %4147 = vmatpush1.msra.mxu0 0.0
    %4148 = vmatprep.subr.mxu0 0.0
    %4149 = vmatpush1.msra.mxu0 0.0
    %4150 = vmatprep.subr.mxu0 0.0
    %4151 = vmatpush1.msra.mxu0 0.0
    %4152 = vmatprep.subr.mxu0 0.0
    %4153 = vmatpush1.msra.mxu0 0.0
    %4154 = vmatprep.subr.mxu0 0.0
    %4155 = vmatpush1.msra.mxu0 0.0
    %4156 = vmatprep.subr.mxu0 0.0
    %4157 = vmatpush1.msra.mxu0 0.0
    %4158 = vmatprep.subr.mxu0 0.0
    %4159 = vmatpush1.msra.mxu0 0.0
    %4160 = vmatprep.subr.mxu0 0.0
    %4161 = vmatpush1.msra.mxu0 0.0
    %4162 = vmatprep.subr.mxu0 0.0
    %4163 = vmatpush1.msra.mxu0 0.0
    %4164 = vmatprep.subr.mxu0 0.0
    %4165 = vmatpush1.msra.mxu0 0.0
    %4166 = vmatprep.subr.mxu0 0.0
    %4167 = vmatpush1.msra.mxu0 0.0
    %4168 = vmatprep.subr.mxu0 0.0
    %4169 = vmatpush1.msra.mxu0 0.0
    %4170 = vmatprep.subr.mxu0 0.0
    %4171 = vmatpush1.msra.mxu0 0.0
    %4172 = vmatprep.subr.mxu0 0.0
    %4173 = vmatpush1.msra.mxu0 0.0
    %4174 = vmatprep.subr.mxu0 0.0
    %4175 = vmatpush1.msra.mxu0 0.0
    %4176 = vmatprep.subr.mxu0 0.0
    %4177 = vmatpush1.msra.mxu0 0.0
    %4178 = vmatprep.subr.mxu0 0.0
    %4179 = vmatpush1.msra.mxu0 0.0
    %4180 = vmatprep.subr.mxu0 0.0
    %4181 = vmatpush1.msra.mxu0 0.0
    %4182 = vmatprep.subr.mxu0 0.0
    %4183 = vmatpush1.msra.mxu0 0.0
    %4184 = vmatprep.mubr.f32.mxu0 0.0
    %4185 = vmatmul.mubr.f32.gmra.mrb[0].mxu0 %v2039
    %v4186 = vpop.f32.mrb[0].mxu0
    %v4187 = vadd.f32 0.0, %v4186
    %v4188 = vpop.f32.mrb[0].mxu0
    %v4189 = vadd.f32 0.0, %v4188
    %4190 = vdwg.mxu0
    %vm4191 = vcmp.ge.f32.partialorder %v4187, 0.0
    %vm4192 = vcmp.ge.f32.partialorder %v4189, 0.0
    %v4193 = vmul.f32 %v4187, 0.2
    %v4194 = vmul.f32 %v4189, 0.2
    %v4195 = vsel %vm4191, %v4187, %v4193
    %v4196 = vsel %vm4192, %v4189, %v4194
    %s4197 = scalar_lea.vmem [#allocation7], 16
    %4198 = vst [vmem:[%s4197] sm:$0xff] %v4195
    %4199 = vst [vmem:[%s4197 + $0x8] sm:$0xff] %v4196
    // Predicated region
    $region18: #{tpu_custom_call.1} parent=1 // pred_check
      _
    $region19: #{tpu_custom_call.1} parent=1 // pred_check_branch
      %4201 = sbr.rel (0) target = $region21
    $region20: #{tpu_custom_call.1} parent=1 // pred_region
      %s4203 = ssub.s32 512, 512
      %4204 = vsyncadd [#allocation4], %s4203
      %s4205 = sshll.u32 [#allocation7], 4
      %s4206 = int_to_ptr.vmem [resolvable:$true] %s4205
      %4211 = dma.vmem_to_hbm [thread:$0]  %s4206, 512, %s2, [#allocation4], 256, 256, 16
    $region21: #{tpu_custom_call.1} parent=1 // pred_fallthru
      _
    // Predicated region
    $region22: #{tpu_custom_call.1} parent=1 // pred_check
      _
    $region23: #{tpu_custom_call.1} parent=1 // pred_check_branch
      %4213 = sbr.rel (0) target = $region25
    $region24: #{tpu_custom_call.1} parent=1 // pred_region
      %4214 = dma.done [#allocation4], 512
    $region25: #{tpu_custom_call.1} parent=1 // pred_fallthru
      _
    %4215 = vsyncpa [#allocation3], 1
    %4216 = vsyncpa [#allocation6], 1
    %4217 = vsyncpa [#allocation4], 1

</llo_original>
